<compile_context>
chip_gen: v7x
topology: tpu7x:2x2x1
jax: 0.10.0
libtpu: 0.0.40
codegen_flags: <defaults>
</compile_context>

<pallas_src>
import functools

import jax
import jax.numpy as jnp
from jax.experimental import pallas as pl
from jax.experimental.pallas import tpu as pltpu


def _cdiv(a, b):
    return -(-a // b)


def _round_up(a, b):
    return _cdiv(a, b) * b


# ---------------------------------------------------------------------------
# Fused kernel: per (batch-tile, time-block) grid step
#   1) one MXU matmul projects the whole x slab to fused gates gx (r|z|n, 3H wide)
#   2) T_BLK unrolled GRU steps, each with ONE (TILE_B,H)@(H,3H) hidden matmul
#   3) on the last time block: hidden_to_z0 MLP epilogue writes (TILE_B, 2H)
# ---------------------------------------------------------------------------
def encoder_fused_kernel(x_ref, len_ref, wi_ref, bi_ref, wh_ref, bhn_ref,
                         w1_ref, b1_ref, w2_ref, b2_ref,
                         out_ref, h_scratch, gx_scratch,
                         *, t_blk, tile_b, hidden):
    tb = pl.program_id(1)
    H = hidden

    @pl.when(tb == 0)
    def _():
        h_scratch[...] = jnp.zeros_like(h_scratch)

    # (1) fused input projection for the whole slab, biases folded in:
    #     columns [0:H]=r, [H:2H]=z, [2H:3H]=n ; b_ir+b_hr, b_iz+b_hz, b_in.
    gx_scratch[...] = (
        jnp.dot(x_ref[...], wi_ref[...], preferred_element_type=jnp.float32)
        + bi_ref[...])

    lens = len_ref[...]          # (TILE_B, 1) int32
    bhn = bhn_ref[...]           # (1, H)   b_hn stays inside r * (h Whn + b_hn)
    wh = wh_ref[...]             # (H, 3H)  resident fused recurrent weights

    # (2) recurrence: straight-line unrolled steps inside this grid iteration.
    h = h_scratch[...]
    for i in range(t_blk):
        t = tb * t_blk + i
        gx_t = gx_scratch[i * tile_b:(i + 1) * tile_b, :]                 # (TILE_B, 3H)
        gh = jnp.dot(h, wh, preferred_element_type=jnp.float32)          # (TILE_B, 3H)
        r = jax.nn.sigmoid(gx_t[:, :H] + gh[:, :H])
        n = jnp.tanh(gx_t[:, 2 * H:] + r * (gh[:, 2 * H:] + bhn))        # consume r early
        z = jax.nn.sigmoid(gx_t[:, H:2 * H] + gh[:, H:2 * H])
        h_new = (1.0 - z) * n + z * h
        h = jnp.where(lens > t, h_new, h)   # freeze once t >= length (pack_padded)
    h_scratch[...] = h

    # (3) MLP epilogue, fused into the last time block; single lane-dense store.
    @pl.when(tb == pl.num_programs(1) - 1)
    def _():
        hid = h_scratch[...]
        z1 = jnp.tanh(
            jnp.dot(hid, w1_ref[...], preferred_element_type=jnp.float32)
            + b1_ref[...])
        out_ref[...] = (
            jnp.dot(z1, w2_ref[...], preferred_element_type=jnp.float32)
            + b2_ref[...])


# ---------------------------------------------------------------------------
# Wrapper: full Encoder_z0_RNN forward.
# Parameters are passed in PyTorch layout:
#   w_ih (3H, D_in), w_hh (3H, H), b_ih (3H,), b_hh (3H,)   [gate order r, z, n]
#   w1 (U, H), b1 (U,), w2 (2H, U), b2 (2H,)
# ---------------------------------------------------------------------------
@functools.partial(jax.jit, static_argnames=("latent_dim",))
def encoder_z0_rnn_forward(data, time_steps, lengths,
                           w_ih, w_hh, b_ih, b_hh,
                           w1, b1, w2, b2, *, latent_dim):
    del time_steps  # unused by the PyTorch forward as well
    N, T, D_in = data.shape
    H = latent_dim
    U = w1.shape[0]

    # --- fused gate parameters (gate order r, z, n), pre-transposed ---
    wi3 = w_ih.T.astype(jnp.float32)                                      # (D_in, 3H)
    wh3 = w_hh.T.astype(jnp.float32)                                      # (H, 3H)
    bi3 = jnp.concatenate([b_ih[:2 * H] + b_hh[:2 * H],
                           b_ih[2 * H:]]).reshape(1, 3 * H)               # r|z paired, n alone
    bhn = b_hh[2 * H:].reshape(1, H)
    w1t = w1.T.astype(jnp.float32)                                        # (H, U)
    b1r = b1.reshape(1, U)
    w2t = w2.T.astype(jnp.float32)                                        # (U, 2H)
    b2r = b2.reshape(1, 2 * H)

    # --- tiling ---
    if N <= 8:
        TILE_B = N                                  # single tile (block == full dim)
    else:
        cap = 128 if H >= 128 else 256              # vreg-pressure cap at large H
        TILE_B = min(cap, _round_up(_cdiv(N, 2), 8))  # >=2 tiles -> both v7x TCs busy
    nb = _cdiv(N, TILE_B)
    N_pad = nb * TILE_B

    T_BLK = T if T <= 32 else 32                    # multiple of 8 when blocking time
    n_tb = _cdiv(T, T_BLK)
    T_pad = n_tb * T_BLK

    # --- single wrapper-side relayout: time-major, padded, grouped per batch tile
    #     so each (batch-tile, time-block) slab is one contiguous 2-D block. ---
    x = jnp.transpose(data.astype(jnp.float32), (1, 0, 2))                # (T, N, D)
    x = jnp.pad(x, ((0, T_pad - T), (0, N_pad - N), (0, 0)))
    x = x.reshape(T_pad, nb, TILE_B, D_in)
    x = jnp.transpose(x, (1, 0, 2, 3)).reshape(nb, T_pad * TILE_B, D_in)

    lens_p = jnp.pad(lengths.astype(jnp.int32), (0, N_pad - N)).reshape(N_pad, 1)

    # --- explicit VMEM budget (matters on v7x: 32 MiB scoped / 64 MiB physical) ---
    vmem_bytes = 4 * (
        2 * T_BLK * TILE_B * D_in          # x slab, double-buffered
        + T_BLK * TILE_B * 3 * H           # gx scratch
        + TILE_B * H                       # h scratch
        + D_in * 3 * H + H * 3 * H         # fused GRU weights
        + H * U + U * 2 * H                # MLP weights
        + 2 * TILE_B * 2 * H               # output block, double-buffered
        + 8 * H + 2 * U)                   # biases
    vmem_limit = min(max(2 * vmem_bytes + (1 << 20), 16 << 20), 100 << 20)

    kernel = functools.partial(encoder_fused_kernel,
                               t_blk=T_BLK, tile_b=TILE_B, hidden=H)

    def const_spec(shape):
        return pl.BlockSpec(shape, lambda b, t: (0, 0))

    out_padded = pl.pallas_call(
        kernel,
        grid=(nb, n_tb),
        in_specs=[
            pl.BlockSpec((None, T_BLK * TILE_B, D_in), lambda b, t: (b, t, 0)),
            pl.BlockSpec((TILE_B, 1), lambda b, t: (b, 0)),
            const_spec((D_in, 3 * H)),
            const_spec((1, 3 * H)),
            const_spec((H, 3 * H)),
            const_spec((1, H)),
            const_spec((H, U)),
            const_spec((1, U)),
            const_spec((U, 2 * H)),
            const_spec((1, 2 * H)),
        ],
        out_specs=pl.BlockSpec((TILE_B, 2 * H), lambda b, t: (b, 0)),
        out_shape=jax.ShapeDtypeStruct((N_pad, 2 * H), jnp.float32),
        scratch_shapes=[pltpu.VMEM((TILE_B, H), jnp.float32),
                        pltpu.VMEM((T_BLK * TILE_B, 3 * H), jnp.float32)],
        compiler_params=pltpu.CompilerParams(
            dimension_semantics=("parallel", "arbitrary"),
            vmem_limit_bytes=vmem_limit),
    )(x, lens_p, wi3, bi3, wh3, bhn, w1t, b1r, w2t, b2r)

    mean_logvar = out_padded[:N]
    return mean_logvar[:, :H], mean_logvar[:, H:]


# ---------------------------------------------------------------------------
# Pure-JAX reference (for correctness check): masked GRU scan + MLP.
# ---------------------------------------------------------------------------
def ref_forward(data, lengths, w_ih, w_hh, b_ih, b_hh, w1, b1, w2, b2, latent_dim):
    N, T, _ = data.shape
    H = latent_dim
    Wir, Wiz, Win = w_ih[:H], w_ih[H:2 * H], w_ih[2 * H:]
    Whr, Whz, Whn = w_hh[:H], w_hh[H:2 * H], w_hh[2 * H:]
    bir, biz, bin_ = b_ih[:H], b_ih[H:2 * H], b_ih[2 * H:]
    bhr, bhz, bhn = b_hh[:H], b_hh[H:2 * H], b_hh[2 * H:]

    def step(h, inp):
        x_t, t = inp
        r = jax.nn.sigmoid(x_t @ Wir.T + bir + h @ Whr.T + bhr)
        z = jax.nn.sigmoid(x_t @ Wiz.T + biz + h @ Whz.T + bhz)
        n = jnp.tanh(x_t @ Win.T + bin_ + r * (h @ Whn.T + bhn))
        h_new = (1.0 - z) * n + z * h
        h = jnp.where((t < lengths)[:, None], h_new, h)
        return h, None

    x_tm = jnp.transpose(data, (1, 0, 2))
    h0 = jnp.zeros((N, H), jnp.float32)
    hT, _ = jax.lax.scan(step, h0, (x_tm, jnp.arange(T)))
    ml = jnp.tanh(hT @ w1.T + b1) @ w2.T + b2
    return ml[:, :H], ml[:, H:]


if __name__ == "__main__":
    latent_dim, input_dim, hidden_units = 16, 12, 20
    N, T = 4, 16
    H = latent_dim

    key = jax.random.PRNGKey(0)
    ks = jax.random.split(key, 9)
    s_ih = 1.0 / jnp.sqrt(jnp.float32(input_dim))
    s_hh = 1.0 / jnp.sqrt(jnp.float32(H))
    w_ih = jax.random.normal(ks[0], (3 * H, input_dim), jnp.float32) * s_ih
    w_hh = jax.random.normal(ks[1], (3 * H, H), jnp.float32) * s_hh
    b_ih = jax.random.normal(ks[2], (3 * H,), jnp.float32) * 0.1
    b_hh = jax.random.normal(ks[3], (3 * H,), jnp.float32) * 0.1
    w1 = jax.random.normal(ks[4], (hidden_units, H), jnp.float32) * s_hh
    b1 = jax.random.normal(ks[5], (hidden_units,), jnp.float32) * 0.1
    w2 = jax.random.normal(ks[6], (2 * H, hidden_units), jnp.float32) * (
        1.0 / jnp.sqrt(jnp.float32(hidden_units)))
    b2 = jax.random.normal(ks[7], (2 * H,), jnp.float32) * 0.1

    data = jax.random.normal(ks[8], (N, T, input_dim), jnp.float32)
    time_steps = jnp.broadcast_to(jnp.arange(T, dtype=jnp.float32), (N, T))
    lengths = jnp.array([T, 11, 7, 1], dtype=jnp.int32)   # variable lengths

    mean, logvar = encoder_z0_rnn_forward(
        data, time_steps, lengths, w_ih, w_hh, b_ih, b_hh, w1, b1, w2, b2,
        latent_dim=latent_dim)
    mean = jax.block_until_ready(mean)
    logvar = jax.block_until_ready(logvar)

    mean_ref, logvar_ref = ref_forward(
        data, lengths, w_ih, w_hh, b_ih, b_hh, w1, b1, w2, b2, latent_dim)

    assert mean.shape == (N, latent_dim) and logvar.shape == (N, latent_dim)
    assert jnp.allclose(mean, mean_ref, rtol=1e-3, atol=1e-3), float(
        jnp.max(jnp.abs(mean - mean_ref)))
    assert jnp.allclose(logvar, logvar_ref, rtol=1e-3, atol=1e-3), float(
        jnp.max(jnp.abs(logvar - logvar_ref)))

    print("KERNEL_OK")
</pallas_src>

<mosaic_0001>
module attributes {stable_mosaic.version = 11 : i64} {
  func.func @encoder_fused_kernel(%arg0: i32, %arg1: i32, %arg2: memref<1x64x12xf32, #tpu.memory_space<vmem>>, %arg3: memref<4x1xi32, #tpu.memory_space<vmem>>, %arg4: memref<12x48xf32, #tpu.memory_space<vmem>>, %arg5: memref<1x48xf32, #tpu.memory_space<vmem>>, %arg6: memref<16x48xf32, #tpu.memory_space<vmem>>, %arg7: memref<1x16xf32, #tpu.memory_space<vmem>>, %arg8: memref<16x20xf32, #tpu.memory_space<vmem>>, %arg9: memref<1x20xf32, #tpu.memory_space<vmem>>, %arg10: memref<20x32xf32, #tpu.memory_space<vmem>>, %arg11: memref<1x32xf32, #tpu.memory_space<vmem>>, %arg12: memref<4x32xf32, #tpu.memory_space<vmem>>, %arg13: memref<4x16xf32, #tpu.memory_space<vmem>>, %arg14: memref<64x48xf32, #tpu.memory_space<vmem>>) attributes {dimension_semantics = [#tpu.dimension_semantics<parallel>, #tpu.dimension_semantics<arbitrary>], iteration_bounds = array<i64: 1, 1>, scalar_prefetch = 0 : i64, scratch_operands = 2 : i64, tpu.core_type = #tpu.core_type<tc>, window_params = [{transform_indices = @transform_0, window_bounds = array<i64: 1, 64, 12>}, {transform_indices = @transform_1, window_bounds = array<i64: 4, 1>}, {pipeline_mode = #tpu.pipeline_mode<synchronous>, transform_indices = @transform_2, window_bounds = array<i64: 12, 48>}, {pipeline_mode = #tpu.pipeline_mode<synchronous>, transform_indices = @transform_3, window_bounds = array<i64: 1, 48>}, {pipeline_mode = #tpu.pipeline_mode<synchronous>, transform_indices = @transform_4, window_bounds = array<i64: 16, 48>}, {pipeline_mode = #tpu.pipeline_mode<synchronous>, transform_indices = @transform_5, window_bounds = array<i64: 1, 16>}, {pipeline_mode = #tpu.pipeline_mode<synchronous>, transform_indices = @transform_6, window_bounds = array<i64: 16, 20>}, {pipeline_mode = #tpu.pipeline_mode<synchronous>, transform_indices = @transform_7, window_bounds = array<i64: 1, 20>}, {pipeline_mode = #tpu.pipeline_mode<synchronous>, transform_indices = @transform_8, window_bounds = array<i64: 20, 32>}, {pipeline_mode = #tpu.pipeline_mode<synchronous>, transform_indices = @transform_9, window_bounds = array<i64: 1, 32>}, {transform_indices = @transform_10, window_bounds = array<i64: 4, 32>}]} {
    %c0_i32 = arith.constant 0 : i32
    %0 = arith.cmpi eq, %arg1, %c0_i32 : i32
    %1 = arith.extui %0 : i1 to i32
    %c0_i32_0 = arith.constant 0 : i32
    %2 = arith.cmpi ne, %1, %c0_i32_0 : i32
    scf.if %2 {
      %cst_118 = arith.constant 0.000000e+00 : f32
      %611 = vector.broadcast %cst_118 : f32 to vector<4x16xf32>
      %c0_119 = arith.constant 0 : index
      %c0_120 = arith.constant 0 : index
      %612 = vector.load %arg13[%c0_119, %c0_120] : memref<4x16xf32, #tpu.memory_space<vmem>>, vector<4x16xf32>
      tpu.vector_store %arg13[%c0_119, %c0_120], %611 {strides = array<i32>} : memref<4x16xf32, #tpu.memory_space<vmem>>, vector<4x16xf32>,
    } else {
    }
    %c0 = arith.constant 0 : index
    %c0_1 = arith.constant 0 : index
    %c0_2 = arith.constant 0 : index
    %3 = vector.load %arg2[%c0, %c0_1, %c0_2] : memref<1x64x12xf32, #tpu.memory_space<vmem>>, vector<1x64x12xf32>
    %4 = vector.shape_cast %3 : vector<1x64x12xf32> to vector<64x12xf32>
    %c0_3 = arith.constant 0 : index
    %c0_4 = arith.constant 0 : index
    %5 = vector.load %arg4[%c0_3, %c0_4] : memref<12x48xf32, #tpu.memory_space<vmem>>, vector<12x48xf32>
    %cst = arith.constant dense<0.000000e+00> : vector<64x48xf32>
    %6 = tpu.matmul %4, %5, %cst {dimension_numbers = #tpu.dot_dimension_numbers<[1], [0], [0], [1], [0, 0, 1, 1], [], []>} : vector<64x12xf32>, vector<12x48xf32>, vector<64x48xf32> -> vector<64x48xf32>
    %c0_5 = arith.constant 0 : index
    %c0_6 = arith.constant 0 : index
    %7 = vector.load %arg5[%c0_5, %c0_6] : memref<1x48xf32, #tpu.memory_space<vmem>>, vector<1x48xf32>
    %8 = vector.broadcast %7 : vector<1x48xf32> to vector<64x48xf32>
    %9 = arith.addf %6, %8 : vector<64x48xf32>
    %c0_7 = arith.constant 0 : index
    %c0_8 = arith.constant 0 : index
    %10 = vector.load %arg14[%c0_7, %c0_8] : memref<64x48xf32, #tpu.memory_space<vmem>>, vector<64x48xf32>
    tpu.vector_store %arg14[%c0_7, %c0_8], %9 {strides = array<i32>} : memref<64x48xf32, #tpu.memory_space<vmem>>, vector<64x48xf32>,
    %c0_9 = arith.constant 0 : index
    %c0_10 = arith.constant 0 : index
    %11 = vector.load %arg3[%c0_9, %c0_10] : memref<4x1xi32, #tpu.memory_space<vmem>>, vector<4x1xi32>
    %c0_11 = arith.constant 0 : index
    %c0_12 = arith.constant 0 : index
    %12 = vector.load %arg7[%c0_11, %c0_12] : memref<1x16xf32, #tpu.memory_space<vmem>>, vector<1x16xf32>
    %c0_13 = arith.constant 0 : index
    %c0_14 = arith.constant 0 : index
    %13 = vector.load %arg6[%c0_13, %c0_14] : memref<16x48xf32, #tpu.memory_space<vmem>>, vector<16x48xf32>
    %c0_15 = arith.constant 0 : index
    %c0_16 = arith.constant 0 : index
    %14 = vector.load %arg13[%c0_15, %c0_16] : memref<4x16xf32, #tpu.memory_space<vmem>>, vector<4x16xf32>
    %c16_i32 = arith.constant 16 : i32
    %15 = arith.muli %arg1, %c16_i32 : i32
    %c0_i32_17 = arith.constant 0 : i32
    %16 = arith.addi %15, %c0_i32_17 : i32
    %c0_18 = arith.constant 0 : index
    %c0_19 = arith.constant 0 : index
    %17 = vector.load %arg14[%c0_18, %c0_19] : memref<64x48xf32, #tpu.memory_space<vmem>>, vector<4x48xf32>
    %cst_20 = arith.constant dense<0.000000e+00> : vector<4x48xf32>
    %18 = tpu.matmul %14, %13, %cst_20 {dimension_numbers = #tpu.dot_dimension_numbers<[1], [0], [0], [1], [0, 0, 1, 1], [], []>} : vector<4x16xf32>, vector<16x48xf32>, vector<4x48xf32> -> vector<4x48xf32>
    %19 = vector.extract_strided_slice %17 {offsets = [0, 0], sizes = [4, 16], strides = [1, 1]} : vector<4x48xf32> to vector<4x16xf32>
    %20 = vector.extract_strided_slice %18 {offsets = [0, 0], sizes = [4, 16], strides = [1, 1]} : vector<4x48xf32> to vector<4x16xf32>
    %21 = arith.addf %19, %20 : vector<4x16xf32>
    %22 = arith.negf %21 : vector<4x16xf32>
    %23 = math.exp %22 : vector<4x16xf32>
    %cst_21 = arith.constant 1.000000e+00 : f32
    %24 = vector.broadcast %cst_21 : f32 to vector<4x16xf32>
    %25 = arith.addf %24, %23 : vector<4x16xf32>
    %26 = arith.divf %24, %25 : vector<4x16xf32>
    %27 = vector.extract_strided_slice %17 {offsets = [0, 32], sizes = [4, 16], strides = [1, 1]} : vector<4x48xf32> to vector<4x16xf32>
    %28 = vector.extract_strided_slice %18 {offsets = [0, 32], sizes = [4, 16], strides = [1, 1]} : vector<4x48xf32> to vector<4x16xf32>
    %29 = vector.broadcast %12 : vector<1x16xf32> to vector<4x16xf32>
    %30 = arith.addf %28, %29 : vector<4x16xf32>
    %31 = arith.mulf %26, %30 : vector<4x16xf32>
    %32 = arith.addf %27, %31 : vector<4x16xf32>
    %33 = math.tanh %32 : vector<4x16xf32>
    %34 = vector.extract_strided_slice %17 {offsets = [0, 16], sizes = [4, 16], strides = [1, 1]} : vector<4x48xf32> to vector<4x16xf32>
    %35 = vector.extract_strided_slice %18 {offsets = [0, 16], sizes = [4, 16], strides = [1, 1]} : vector<4x48xf32> to vector<4x16xf32>
    %36 = arith.addf %34, %35 : vector<4x16xf32>
    %37 = arith.negf %36 : vector<4x16xf32>
    %38 = math.exp %37 : vector<4x16xf32>
    %cst_22 = arith.constant 1.000000e+00 : f32
    %39 = vector.broadcast %cst_22 : f32 to vector<4x16xf32>
    %40 = arith.addf %39, %38 : vector<4x16xf32>
    %41 = arith.divf %39, %40 : vector<4x16xf32>
    %cst_23 = arith.constant 1.000000e+00 : f32
    %42 = vector.broadcast %cst_23 : f32 to vector<4x16xf32>
    %43 = arith.subf %42, %41 : vector<4x16xf32>
    %44 = arith.mulf %43, %33 : vector<4x16xf32>
    %45 = arith.mulf %41, %14 : vector<4x16xf32>
    %46 = arith.addf %44, %45 : vector<4x16xf32>
    %47 = vector.broadcast %16 : i32 to vector<4x1xi32>
    %48 = arith.cmpi sgt, %11, %47 : vector<4x1xi32>
    %49 = vector.shape_cast %48 : vector<4x1xi1> to vector<4x1xi1>
    %50 = vector.broadcast %49 : vector<4x1xi1> to vector<4x16xi1>
    %51 = arith.select %50, %46, %14 : vector<4x16xi1>, vector<4x16xf32>
    %c16_i32_24 = arith.constant 16 : i32
    %52 = arith.muli %arg1, %c16_i32_24 : i32
    %c1_i32 = arith.constant 1 : i32
    %53 = arith.addi %52, %c1_i32 : i32
    %c4 = arith.constant 4 : index
    %c0_25 = arith.constant 0 : index
    %54 = vector.load %arg14[%c4, %c0_25] : memref<64x48xf32, #tpu.memory_space<vmem>>, vector<4x48xf32>
    %cst_26 = arith.constant dense<0.000000e+00> : vector<4x48xf32>
    %55 = tpu.matmul %51, %13, %cst_26 {dimension_numbers = #tpu.dot_dimension_numbers<[1], [0], [0], [1], [0, 0, 1, 1], [], []>} : vector<4x16xf32>, vector<16x48xf32>, vector<4x48xf32> -> vector<4x48xf32>
    %56 = vector.extract_strided_slice %54 {offsets = [0, 0], sizes = [4, 16], strides = [1, 1]} : vector<4x48xf32> to vector<4x16xf32>
    %57 = vector.extract_strided_slice %55 {offsets = [0, 0], sizes = [4, 16], strides = [1, 1]} : vector<4x48xf32> to vector<4x16xf32>
    %58 = arith.addf %56, %57 : vector<4x16xf32>
    %59 = arith.negf %58 : vector<4x16xf32>
    %60 = math.exp %59 : vector<4x16xf32>
    %cst_27 = arith.constant 1.000000e+00 : f32
    %61 = vector.broadcast %cst_27 : f32 to vector<4x16xf32>
    %62 = arith.addf %61, %60 : vector<4x16xf32>
    %63 = arith.divf %61, %62 : vector<4x16xf32>
    %64 = vector.extract_strided_slice %54 {offsets = [0, 32], sizes = [4, 16], strides = [1, 1]} : vector<4x48xf32> to vector<4x16xf32>
    %65 = vector.extract_strided_slice %55 {offsets = [0, 32], sizes = [4, 16], strides = [1, 1]} : vector<4x48xf32> to vector<4x16xf32>
    %66 = vector.broadcast %12 : vector<1x16xf32> to vector<4x16xf32>
    %67 = arith.addf %65, %66 : vector<4x16xf32>
    %68 = arith.mulf %63, %67 : vector<4x16xf32>
    %69 = arith.addf %64, %68 : vector<4x16xf32>
    %70 = math.tanh %69 : vector<4x16xf32>
    %71 = vector.extract_strided_slice %54 {offsets = [0, 16], sizes = [4, 16], strides = [1, 1]} : vector<4x48xf32> to vector<4x16xf32>
    %72 = vector.extract_strided_slice %55 {offsets = [0, 16], sizes = [4, 16], strides = [1, 1]} : vector<4x48xf32> to vector<4x16xf32>
    %73 = arith.addf %71, %72 : vector<4x16xf32>
    %74 = arith.negf %73 : vector<4x16xf32>
    %75 = math.exp %74 : vector<4x16xf32>
    %cst_28 = arith.constant 1.000000e+00 : f32
    %76 = vector.broadcast %cst_28 : f32 to vector<4x16xf32>
    %77 = arith.addf %76, %75 : vector<4x16xf32>
    %78 = arith.divf %76, %77 : vector<4x16xf32>
    %cst_29 = arith.constant 1.000000e+00 : f32
    %79 = vector.broadcast %cst_29 : f32 to vector<4x16xf32>
    %80 = arith.subf %79, %78 : vector<4x16xf32>
    %81 = arith.mulf %80, %70 : vector<4x16xf32>
    %82 = arith.mulf %78, %51 : vector<4x16xf32>
    %83 = arith.addf %81, %82 : vector<4x16xf32>
    %84 = vector.broadcast %53 : i32 to vector<4x1xi32>
    %85 = arith.cmpi sgt, %11, %84 : vector<4x1xi32>
    %86 = vector.shape_cast %85 : vector<4x1xi1> to vector<4x1xi1>
    %87 = vector.broadcast %86 : vector<4x1xi1> to vector<4x16xi1>
    %88 = arith.select %87, %83, %51 : vector<4x16xi1>, vector<4x16xf32>
    %c16_i32_30 = arith.constant 16 : i32
    %89 = arith.muli %arg1, %c16_i32_30 : i32
    %c2_i32 = arith.constant 2 : i32
    %90 = arith.addi %89, %c2_i32 : i32
    %c8 = arith.constant 8 : index
    %c0_31 = arith.constant 0 : index
    %91 = vector.load %arg14[%c8, %c0_31] : memref<64x48xf32, #tpu.memory_space<vmem>>, vector<4x48xf32>
    %cst_32 = arith.constant dense<0.000000e+00> : vector<4x48xf32>
    %92 = tpu.matmul %88, %13, %cst_32 {dimension_numbers = #tpu.dot_dimension_numbers<[1], [0], [0], [1], [0, 0, 1, 1], [], []>} : vector<4x16xf32>, vector<16x48xf32>, vector<4x48xf32> -> vector<4x48xf32>
    %93 = vector.extract_strided_slice %91 {offsets = [0, 0], sizes = [4, 16], strides = [1, 1]} : vector<4x48xf32> to vector<4x16xf32>
    %94 = vector.extract_strided_slice %92 {offsets = [0, 0], sizes = [4, 16], strides = [1, 1]} : vector<4x48xf32> to vector<4x16xf32>
    %95 = arith.addf %93, %94 : vector<4x16xf32>
    %96 = arith.negf %95 : vector<4x16xf32>
    %97 = math.exp %96 : vector<4x16xf32>
    %cst_33 = arith.constant 1.000000e+00 : f32
    %98 = vector.broadcast %cst_33 : f32 to vector<4x16xf32>
    %99 = arith.addf %98, %97 : vector<4x16xf32>
    %100 = arith.divf %98, %99 : vector<4x16xf32>
    %101 = vector.extract_strided_slice %91 {offsets = [0, 32], sizes = [4, 16], strides = [1, 1]} : vector<4x48xf32> to vector<4x16xf32>
    %102 = vector.extract_strided_slice %92 {offsets = [0, 32], sizes = [4, 16], strides = [1, 1]} : vector<4x48xf32> to vector<4x16xf32>
    %103 = vector.broadcast %12 : vector<1x16xf32> to vector<4x16xf32>
    %104 = arith.addf %102, %103 : vector<4x16xf32>
    %105 = arith.mulf %100, %104 : vector<4x16xf32>
    %106 = arith.addf %101, %105 : vector<4x16xf32>
    %107 = math.tanh %106 : vector<4x16xf32>
    %108 = vector.extract_strided_slice %91 {offsets = [0, 16], sizes = [4, 16], strides = [1, 1]} : vector<4x48xf32> to vector<4x16xf32>
    %109 = vector.extract_strided_slice %92 {offsets = [0, 16], sizes = [4, 16], strides = [1, 1]} : vector<4x48xf32> to vector<4x16xf32>
    %110 = arith.addf %108, %109 : vector<4x16xf32>
    %111 = arith.negf %110 : vector<4x16xf32>
    %112 = math.exp %111 : vector<4x16xf32>
    %cst_34 = arith.constant 1.000000e+00 : f32
    %113 = vector.broadcast %cst_34 : f32 to vector<4x16xf32>
    %114 = arith.addf %113, %112 : vector<4x16xf32>
    %115 = arith.divf %113, %114 : vector<4x16xf32>
    %cst_35 = arith.constant 1.000000e+00 : f32
    %116 = vector.broadcast %cst_35 : f32 to vector<4x16xf32>
    %117 = arith.subf %116, %115 : vector<4x16xf32>
    %118 = arith.mulf %117, %107 : vector<4x16xf32>
    %119 = arith.mulf %115, %88 : vector<4x16xf32>
    %120 = arith.addf %118, %119 : vector<4x16xf32>
    %121 = vector.broadcast %90 : i32 to vector<4x1xi32>
    %122 = arith.cmpi sgt, %11, %121 : vector<4x1xi32>
    %123 = vector.shape_cast %122 : vector<4x1xi1> to vector<4x1xi1>
    %124 = vector.broadcast %123 : vector<4x1xi1> to vector<4x16xi1>
    %125 = arith.select %124, %120, %88 : vector<4x16xi1>, vector<4x16xf32>
    %c16_i32_36 = arith.constant 16 : i32
    %126 = arith.muli %arg1, %c16_i32_36 : i32
    %c3_i32 = arith.constant 3 : i32
    %127 = arith.addi %126, %c3_i32 : i32
    %c12 = arith.constant 12 : index
    %c0_37 = arith.constant 0 : index
    %128 = vector.load %arg14[%c12, %c0_37] : memref<64x48xf32, #tpu.memory_space<vmem>>, vector<4x48xf32>
    %cst_38 = arith.constant dense<0.000000e+00> : vector<4x48xf32>
    %129 = tpu.matmul %125, %13, %cst_38 {dimension_numbers = #tpu.dot_dimension_numbers<[1], [0], [0], [1], [0, 0, 1, 1], [], []>} : vector<4x16xf32>, vector<16x48xf32>, vector<4x48xf32> -> vector<4x48xf32>
    %130 = vector.extract_strided_slice %128 {offsets = [0, 0], sizes = [4, 16], strides = [1, 1]} : vector<4x48xf32> to vector<4x16xf32>
    %131 = vector.extract_strided_slice %129 {offsets = [0, 0], sizes = [4, 16], strides = [1, 1]} : vector<4x48xf32> to vector<4x16xf32>
    %132 = arith.addf %130, %131 : vector<4x16xf32>
    %133 = arith.negf %132 : vector<4x16xf32>
    %134 = math.exp %133 : vector<4x16xf32>
    %cst_39 = arith.constant 1.000000e+00 : f32
    %135 = vector.broadcast %cst_39 : f32 to vector<4x16xf32>
    %136 = arith.addf %135, %134 : vector<4x16xf32>
    %137 = arith.divf %135, %136 : vector<4x16xf32>
    %138 = vector.extract_strided_slice %128 {offsets = [0, 32], sizes = [4, 16], strides = [1, 1]} : vector<4x48xf32> to vector<4x16xf32>
    %139 = vector.extract_strided_slice %129 {offsets = [0, 32], sizes = [4, 16], strides = [1, 1]} : vector<4x48xf32> to vector<4x16xf32>
    %140 = vector.broadcast %12 : vector<1x16xf32> to vector<4x16xf32>
    %141 = arith.addf %139, %140 : vector<4x16xf32>
    %142 = arith.mulf %137, %141 : vector<4x16xf32>
    %143 = arith.addf %138, %142 : vector<4x16xf32>
    %144 = math.tanh %143 : vector<4x16xf32>
    %145 = vector.extract_strided_slice %128 {offsets = [0, 16], sizes = [4, 16], strides = [1, 1]} : vector<4x48xf32> to vector<4x16xf32>
    %146 = vector.extract_strided_slice %129 {offsets = [0, 16], sizes = [4, 16], strides = [1, 1]} : vector<4x48xf32> to vector<4x16xf32>
    %147 = arith.addf %145, %146 : vector<4x16xf32>
    %148 = arith.negf %147 : vector<4x16xf32>
    %149 = math.exp %148 : vector<4x16xf32>
    %cst_40 = arith.constant 1.000000e+00 : f32
    %150 = vector.broadcast %cst_40 : f32 to vector<4x16xf32>
    %151 = arith.addf %150, %149 : vector<4x16xf32>
    %152 = arith.divf %150, %151 : vector<4x16xf32>
    %cst_41 = arith.constant 1.000000e+00 : f32
    %153 = vector.broadcast %cst_41 : f32 to vector<4x16xf32>
    %154 = arith.subf %153, %152 : vector<4x16xf32>
    %155 = arith.mulf %154, %144 : vector<4x16xf32>
    %156 = arith.mulf %152, %125 : vector<4x16xf32>
    %157 = arith.addf %155, %156 : vector<4x16xf32>
    %158 = vector.broadcast %127 : i32 to vector<4x1xi32>
    %159 = arith.cmpi sgt, %11, %158 : vector<4x1xi32>
    %160 = vector.shape_cast %159 : vector<4x1xi1> to vector<4x1xi1>
    %161 = vector.broadcast %160 : vector<4x1xi1> to vector<4x16xi1>
    %162 = arith.select %161, %157, %125 : vector<4x16xi1>, vector<4x16xf32>
    %c16_i32_42 = arith.constant 16 : i32
    %163 = arith.muli %arg1, %c16_i32_42 : i32
    %c4_i32 = arith.constant 4 : i32
    %164 = arith.addi %163, %c4_i32 : i32
    %c16 = arith.constant 16 : index
    %c0_43 = arith.constant 0 : index
    %165 = vector.load %arg14[%c16, %c0_43] : memref<64x48xf32, #tpu.memory_space<vmem>>, vector<4x48xf32>
    %cst_44 = arith.constant dense<0.000000e+00> : vector<4x48xf32>
    %166 = tpu.matmul %162, %13, %cst_44 {dimension_numbers = #tpu.dot_dimension_numbers<[1], [0], [0], [1], [0, 0, 1, 1], [], []>} : vector<4x16xf32>, vector<16x48xf32>, vector<4x48xf32> -> vector<4x48xf32>
    %167 = vector.extract_strided_slice %165 {offsets = [0, 0], sizes = [4, 16], strides = [1, 1]} : vector<4x48xf32> to vector<4x16xf32>
    %168 = vector.extract_strided_slice %166 {offsets = [0, 0], sizes = [4, 16], strides = [1, 1]} : vector<4x48xf32> to vector<4x16xf32>
    %169 = arith.addf %167, %168 : vector<4x16xf32>
    %170 = arith.negf %169 : vector<4x16xf32>
    %171 = math.exp %170 : vector<4x16xf32>
    %cst_45 = arith.constant 1.000000e+00 : f32
    %172 = vector.broadcast %cst_45 : f32 to vector<4x16xf32>
    %173 = arith.addf %172, %171 : vector<4x16xf32>
    %174 = arith.divf %172, %173 : vector<4x16xf32>
    %175 = vector.extract_strided_slice %165 {offsets = [0, 32], sizes = [4, 16], strides = [1, 1]} : vector<4x48xf32> to vector<4x16xf32>
    %176 = vector.extract_strided_slice %166 {offsets = [0, 32], sizes = [4, 16], strides = [1, 1]} : vector<4x48xf32> to vector<4x16xf32>
    %177 = vector.broadcast %12 : vector<1x16xf32> to vector<4x16xf32>
    %178 = arith.addf %176, %177 : vector<4x16xf32>
    %179 = arith.mulf %174, %178 : vector<4x16xf32>
    %180 = arith.addf %175, %179 : vector<4x16xf32>
    %181 = math.tanh %180 : vector<4x16xf32>
    %182 = vector.extract_strided_slice %165 {offsets = [0, 16], sizes = [4, 16], strides = [1, 1]} : vector<4x48xf32> to vector<4x16xf32>
    %183 = vector.extract_strided_slice %166 {offsets = [0, 16], sizes = [4, 16], strides = [1, 1]} : vector<4x48xf32> to vector<4x16xf32>
    %184 = arith.addf %182, %183 : vector<4x16xf32>
    %185 = arith.negf %184 : vector<4x16xf32>
    %186 = math.exp %185 : vector<4x16xf32>
    %cst_46 = arith.constant 1.000000e+00 : f32
    %187 = vector.broadcast %cst_46 : f32 to vector<4x16xf32>
    %188 = arith.addf %187, %186 : vector<4x16xf32>
    %189 = arith.divf %187, %188 : vector<4x16xf32>
    %cst_47 = arith.constant 1.000000e+00 : f32
    %190 = vector.broadcast %cst_47 : f32 to vector<4x16xf32>
    %191 = arith.subf %190, %189 : vector<4x16xf32>
    %192 = arith.mulf %191, %181 : vector<4x16xf32>
    %193 = arith.mulf %189, %162 : vector<4x16xf32>
    %194 = arith.addf %192, %193 : vector<4x16xf32>
    %195 = vector.broadcast %164 : i32 to vector<4x1xi32>
    %196 = arith.cmpi sgt, %11, %195 : vector<4x1xi32>
    %197 = vector.shape_cast %196 : vector<4x1xi1> to vector<4x1xi1>
    %198 = vector.broadcast %197 : vector<4x1xi1> to vector<4x16xi1>
    %199 = arith.select %198, %194, %162 : vector<4x16xi1>, vector<4x16xf32>
    %c16_i32_48 = arith.constant 16 : i32
    %200 = arith.muli %arg1, %c16_i32_48 : i32
    %c5_i32 = arith.constant 5 : i32
    %201 = arith.addi %200, %c5_i32 : i32
    %c20 = arith.constant 20 : index
    %c0_49 = arith.constant 0 : index
    %202 = vector.load %arg14[%c20, %c0_49] : memref<64x48xf32, #tpu.memory_space<vmem>>, vector<4x48xf32>
    %cst_50 = arith.constant dense<0.000000e+00> : vector<4x48xf32>
    %203 = tpu.matmul %199, %13, %cst_50 {dimension_numbers = #tpu.dot_dimension_numbers<[1], [0], [0], [1], [0, 0, 1, 1], [], []>} : vector<4x16xf32>, vector<16x48xf32>, vector<4x48xf32> -> vector<4x48xf32>
    %204 = vector.extract_strided_slice %202 {offsets = [0, 0], sizes = [4, 16], strides = [1, 1]} : vector<4x48xf32> to vector<4x16xf32>
    %205 = vector.extract_strided_slice %203 {offsets = [0, 0], sizes = [4, 16], strides = [1, 1]} : vector<4x48xf32> to vector<4x16xf32>
    %206 = arith.addf %204, %205 : vector<4x16xf32>
    %207 = arith.negf %206 : vector<4x16xf32>
    %208 = math.exp %207 : vector<4x16xf32>
    %cst_51 = arith.constant 1.000000e+00 : f32
    %209 = vector.broadcast %cst_51 : f32 to vector<4x16xf32>
    %210 = arith.addf %209, %208 : vector<4x16xf32>
    %211 = arith.divf %209, %210 : vector<4x16xf32>
    %212 = vector.extract_strided_slice %202 {offsets = [0, 32], sizes = [4, 16], strides = [1, 1]} : vector<4x48xf32> to vector<4x16xf32>
    %213 = vector.extract_strided_slice %203 {offsets = [0, 32], sizes = [4, 16], strides = [1, 1]} : vector<4x48xf32> to vector<4x16xf32>
    %214 = vector.broadcast %12 : vector<1x16xf32> to vector<4x16xf32>
    %215 = arith.addf %213, %214 : vector<4x16xf32>
    %216 = arith.mulf %211, %215 : vector<4x16xf32>
    %217 = arith.addf %212, %216 : vector<4x16xf32>
    %218 = math.tanh %217 : vector<4x16xf32>
    %219 = vector.extract_strided_slice %202 {offsets = [0, 16], sizes = [4, 16], strides = [1, 1]} : vector<4x48xf32> to vector<4x16xf32>
    %220 = vector.extract_strided_slice %203 {offsets = [0, 16], sizes = [4, 16], strides = [1, 1]} : vector<4x48xf32> to vector<4x16xf32>
    %221 = arith.addf %219, %220 : vector<4x16xf32>
    %222 = arith.negf %221 : vector<4x16xf32>
    %223 = math.exp %222 : vector<4x16xf32>
    %cst_52 = arith.constant 1.000000e+00 : f32
    %224 = vector.broadcast %cst_52 : f32 to vector<4x16xf32>
    %225 = arith.addf %224, %223 : vector<4x16xf32>
    %226 = arith.divf %224, %225 : vector<4x16xf32>
    %cst_53 = arith.constant 1.000000e+00 : f32
    %227 = vector.broadcast %cst_53 : f32 to vector<4x16xf32>
    %228 = arith.subf %227, %226 : vector<4x16xf32>
    %229 = arith.mulf %228, %218 : vector<4x16xf32>
    %230 = arith.mulf %226, %199 : vector<4x16xf32>
    %231 = arith.addf %229, %230 : vector<4x16xf32>
    %232 = vector.broadcast %201 : i32 to vector<4x1xi32>
    %233 = arith.cmpi sgt, %11, %232 : vector<4x1xi32>
    %234 = vector.shape_cast %233 : vector<4x1xi1> to vector<4x1xi1>
    %235 = vector.broadcast %234 : vector<4x1xi1> to vector<4x16xi1>
    %236 = arith.select %235, %231, %199 : vector<4x16xi1>, vector<4x16xf32>
    %c16_i32_54 = arith.constant 16 : i32
    %237 = arith.muli %arg1, %c16_i32_54 : i32
    %c6_i32 = arith.constant 6 : i32
    %238 = arith.addi %237, %c6_i32 : i32
    %c24 = arith.constant 24 : index
    %c0_55 = arith.constant 0 : index
    %239 = vector.load %arg14[%c24, %c0_55] : memref<64x48xf32, #tpu.memory_space<vmem>>, vector<4x48xf32>
    %cst_56 = arith.constant dense<0.000000e+00> : vector<4x48xf32>
    %240 = tpu.matmul %236, %13, %cst_56 {dimension_numbers = #tpu.dot_dimension_numbers<[1], [0], [0], [1], [0, 0, 1, 1], [], []>} : vector<4x16xf32>, vector<16x48xf32>, vector<4x48xf32> -> vector<4x48xf32>
    %241 = vector.extract_strided_slice %239 {offsets = [0, 0], sizes = [4, 16], strides = [1, 1]} : vector<4x48xf32> to vector<4x16xf32>
    %242 = vector.extract_strided_slice %240 {offsets = [0, 0], sizes = [4, 16], strides = [1, 1]} : vector<4x48xf32> to vector<4x16xf32>
    %243 = arith.addf %241, %242 : vector<4x16xf32>
    %244 = arith.negf %243 : vector<4x16xf32>
    %245 = math.exp %244 : vector<4x16xf32>
    %cst_57 = arith.constant 1.000000e+00 : f32
    %246 = vector.broadcast %cst_57 : f32 to vector<4x16xf32>
    %247 = arith.addf %246, %245 : vector<4x16xf32>
    %248 = arith.divf %246, %247 : vector<4x16xf32>
    %249 = vector.extract_strided_slice %239 {offsets = [0, 32], sizes = [4, 16], strides = [1, 1]} : vector<4x48xf32> to vector<4x16xf32>
    %250 = vector.extract_strided_slice %240 {offsets = [0, 32], sizes = [4, 16], strides = [1, 1]} : vector<4x48xf32> to vector<4x16xf32>
    %251 = vector.broadcast %12 : vector<1x16xf32> to vector<4x16xf32>
    %252 = arith.addf %250, %251 : vector<4x16xf32>
    %253 = arith.mulf %248, %252 : vector<4x16xf32>
    %254 = arith.addf %249, %253 : vector<4x16xf32>
    %255 = math.tanh %254 : vector<4x16xf32>
    %256 = vector.extract_strided_slice %239 {offsets = [0, 16], sizes = [4, 16], strides = [1, 1]} : vector<4x48xf32> to vector<4x16xf32>
    %257 = vector.extract_strided_slice %240 {offsets = [0, 16], sizes = [4, 16], strides = [1, 1]} : vector<4x48xf32> to vector<4x16xf32>
    %258 = arith.addf %256, %257 : vector<4x16xf32>
    %259 = arith.negf %258 : vector<4x16xf32>
    %260 = math.exp %259 : vector<4x16xf32>
    %cst_58 = arith.constant 1.000000e+00 : f32
    %261 = vector.broadcast %cst_58 : f32 to vector<4x16xf32>
    %262 = arith.addf %261, %260 : vector<4x16xf32>
    %263 = arith.divf %261, %262 : vector<4x16xf32>
    %cst_59 = arith.constant 1.000000e+00 : f32
    %264 = vector.broadcast %cst_59 : f32 to vector<4x16xf32>
    %265 = arith.subf %264, %263 : vector<4x16xf32>
    %266 = arith.mulf %265, %255 : vector<4x16xf32>
    %267 = arith.mulf %263, %236 : vector<4x16xf32>
    %268 = arith.addf %266, %267 : vector<4x16xf32>
    %269 = vector.broadcast %238 : i32 to vector<4x1xi32>
    %270 = arith.cmpi sgt, %11, %269 : vector<4x1xi32>
    %271 = vector.shape_cast %270 : vector<4x1xi1> to vector<4x1xi1>
    %272 = vector.broadcast %271 : vector<4x1xi1> to vector<4x16xi1>
    %273 = arith.select %272, %268, %236 : vector<4x16xi1>, vector<4x16xf32>
    %c16_i32_60 = arith.constant 16 : i32
    %274 = arith.muli %arg1, %c16_i32_60 : i32
    %c7_i32 = arith.constant 7 : i32
    %275 = arith.addi %274, %c7_i32 : i32
    %c28 = arith.constant 28 : index
    %c0_61 = arith.constant 0 : index
    %276 = vector.load %arg14[%c28, %c0_61] : memref<64x48xf32, #tpu.memory_space<vmem>>, vector<4x48xf32>
    %cst_62 = arith.constant dense<0.000000e+00> : vector<4x48xf32>
    %277 = tpu.matmul %273, %13, %cst_62 {dimension_numbers = #tpu.dot_dimension_numbers<[1], [0], [0], [1], [0, 0, 1, 1], [], []>} : vector<4x16xf32>, vector<16x48xf32>, vector<4x48xf32> -> vector<4x48xf32>
    %278 = vector.extract_strided_slice %276 {offsets = [0, 0], sizes = [4, 16], strides = [1, 1]} : vector<4x48xf32> to vector<4x16xf32>
    %279 = vector.extract_strided_slice %277 {offsets = [0, 0], sizes = [4, 16], strides = [1, 1]} : vector<4x48xf32> to vector<4x16xf32>
    %280 = arith.addf %278, %279 : vector<4x16xf32>
    %281 = arith.negf %280 : vector<4x16xf32>
    %282 = math.exp %281 : vector<4x16xf32>
    %cst_63 = arith.constant 1.000000e+00 : f32
    %283 = vector.broadcast %cst_63 : f32 to vector<4x16xf32>
    %284 = arith.addf %283, %282 : vector<4x16xf32>
    %285 = arith.divf %283, %284 : vector<4x16xf32>
    %286 = vector.extract_strided_slice %276 {offsets = [0, 32], sizes = [4, 16], strides = [1, 1]} : vector<4x48xf32> to vector<4x16xf32>
    %287 = vector.extract_strided_slice %277 {offsets = [0, 32], sizes = [4, 16], strides = [1, 1]} : vector<4x48xf32> to vector<4x16xf32>
    %288 = vector.broadcast %12 : vector<1x16xf32> to vector<4x16xf32>
    %289 = arith.addf %287, %288 : vector<4x16xf32>
    %290 = arith.mulf %285, %289 : vector<4x16xf32>
    %291 = arith.addf %286, %290 : vector<4x16xf32>
    %292 = math.tanh %291 : vector<4x16xf32>
    %293 = vector.extract_strided_slice %276 {offsets = [0, 16], sizes = [4, 16], strides = [1, 1]} : vector<4x48xf32> to vector<4x16xf32>
    %294 = vector.extract_strided_slice %277 {offsets = [0, 16], sizes = [4, 16], strides = [1, 1]} : vector<4x48xf32> to vector<4x16xf32>
    %295 = arith.addf %293, %294 : vector<4x16xf32>
    %296 = arith.negf %295 : vector<4x16xf32>
    %297 = math.exp %296 : vector<4x16xf32>
    %cst_64 = arith.constant 1.000000e+00 : f32
    %298 = vector.broadcast %cst_64 : f32 to vector<4x16xf32>
    %299 = arith.addf %298, %297 : vector<4x16xf32>
    %300 = arith.divf %298, %299 : vector<4x16xf32>
    %cst_65 = arith.constant 1.000000e+00 : f32
    %301 = vector.broadcast %cst_65 : f32 to vector<4x16xf32>
    %302 = arith.subf %301, %300 : vector<4x16xf32>
    %303 = arith.mulf %302, %292 : vector<4x16xf32>
    %304 = arith.mulf %300, %273 : vector<4x16xf32>
    %305 = arith.addf %303, %304 : vector<4x16xf32>
    %306 = vector.broadcast %275 : i32 to vector<4x1xi32>
    %307 = arith.cmpi sgt, %11, %306 : vector<4x1xi32>
    %308 = vector.shape_cast %307 : vector<4x1xi1> to vector<4x1xi1>
    %309 = vector.broadcast %308 : vector<4x1xi1> to vector<4x16xi1>
    %310 = arith.select %309, %305, %273 : vector<4x16xi1>, vector<4x16xf32>
    %c16_i32_66 = arith.constant 16 : i32
    %311 = arith.muli %arg1, %c16_i32_66 : i32
    %c8_i32 = arith.constant 8 : i32
    %312 = arith.addi %311, %c8_i32 : i32
    %c32 = arith.constant 32 : index
    %c0_67 = arith.constant 0 : index
    %313 = vector.load %arg14[%c32, %c0_67] : memref<64x48xf32, #tpu.memory_space<vmem>>, vector<4x48xf32>
    %cst_68 = arith.constant dense<0.000000e+00> : vector<4x48xf32>
    %314 = tpu.matmul %310, %13, %cst_68 {dimension_numbers = #tpu.dot_dimension_numbers<[1], [0], [0], [1], [0, 0, 1, 1], [], []>} : vector<4x16xf32>, vector<16x48xf32>, vector<4x48xf32> -> vector<4x48xf32>
    %315 = vector.extract_strided_slice %313 {offsets = [0, 0], sizes = [4, 16], strides = [1, 1]} : vector<4x48xf32> to vector<4x16xf32>
    %316 = vector.extract_strided_slice %314 {offsets = [0, 0], sizes = [4, 16], strides = [1, 1]} : vector<4x48xf32> to vector<4x16xf32>
    %317 = arith.addf %315, %316 : vector<4x16xf32>
    %318 = arith.negf %317 : vector<4x16xf32>
    %319 = math.exp %318 : vector<4x16xf32>
    %cst_69 = arith.constant 1.000000e+00 : f32
    %320 = vector.broadcast %cst_69 : f32 to vector<4x16xf32>
    %321 = arith.addf %320, %319 : vector<4x16xf32>
    %322 = arith.divf %320, %321 : vector<4x16xf32>
    %323 = vector.extract_strided_slice %313 {offsets = [0, 32], sizes = [4, 16], strides = [1, 1]} : vector<4x48xf32> to vector<4x16xf32>
    %324 = vector.extract_strided_slice %314 {offsets = [0, 32], sizes = [4, 16], strides = [1, 1]} : vector<4x48xf32> to vector<4x16xf32>
    %325 = vector.broadcast %12 : vector<1x16xf32> to vector<4x16xf32>
    %326 = arith.addf %324, %325 : vector<4x16xf32>
    %327 = arith.mulf %322, %326 : vector<4x16xf32>
    %328 = arith.addf %323, %327 : vector<4x16xf32>
    %329 = math.tanh %328 : vector<4x16xf32>
    %330 = vector.extract_strided_slice %313 {offsets = [0, 16], sizes = [4, 16], strides = [1, 1]} : vector<4x48xf32> to vector<4x16xf32>
    %331 = vector.extract_strided_slice %314 {offsets = [0, 16], sizes = [4, 16], strides = [1, 1]} : vector<4x48xf32> to vector<4x16xf32>
    %332 = arith.addf %330, %331 : vector<4x16xf32>
    %333 = arith.negf %332 : vector<4x16xf32>
    %334 = math.exp %333 : vector<4x16xf32>
    %cst_70 = arith.constant 1.000000e+00 : f32
    %335 = vector.broadcast %cst_70 : f32 to vector<4x16xf32>
    %336 = arith.addf %335, %334 : vector<4x16xf32>
    %337 = arith.divf %335, %336 : vector<4x16xf32>
    %cst_71 = arith.constant 1.000000e+00 : f32
    %338 = vector.broadcast %cst_71 : f32 to vector<4x16xf32>
    %339 = arith.subf %338, %337 : vector<4x16xf32>
    %340 = arith.mulf %339, %329 : vector<4x16xf32>
    %341 = arith.mulf %337, %310 : vector<4x16xf32>
    %342 = arith.addf %340, %341 : vector<4x16xf32>
    %343 = vector.broadcast %312 : i32 to vector<4x1xi32>
    %344 = arith.cmpi sgt, %11, %343 : vector<4x1xi32>
    %345 = vector.shape_cast %344 : vector<4x1xi1> to vector<4x1xi1>
    %346 = vector.broadcast %345 : vector<4x1xi1> to vector<4x16xi1>
    %347 = arith.select %346, %342, %310 : vector<4x16xi1>, vector<4x16xf32>
    %c16_i32_72 = arith.constant 16 : i32
    %348 = arith.muli %arg1, %c16_i32_72 : i32
    %c9_i32 = arith.constant 9 : i32
    %349 = arith.addi %348, %c9_i32 : i32
    %c36 = arith.constant 36 : index
    %c0_73 = arith.constant 0 : index
    %350 = vector.load %arg14[%c36, %c0_73] : memref<64x48xf32, #tpu.memory_space<vmem>>, vector<4x48xf32>
    %cst_74 = arith.constant dense<0.000000e+00> : vector<4x48xf32>
    %351 = tpu.matmul %347, %13, %cst_74 {dimension_numbers = #tpu.dot_dimension_numbers<[1], [0], [0], [1], [0, 0, 1, 1], [], []>} : vector<4x16xf32>, vector<16x48xf32>, vector<4x48xf32> -> vector<4x48xf32>
    %352 = vector.extract_strided_slice %350 {offsets = [0, 0], sizes = [4, 16], strides = [1, 1]} : vector<4x48xf32> to vector<4x16xf32>
    %353 = vector.extract_strided_slice %351 {offsets = [0, 0], sizes = [4, 16], strides = [1, 1]} : vector<4x48xf32> to vector<4x16xf32>
    %354 = arith.addf %352, %353 : vector<4x16xf32>
    %355 = arith.negf %354 : vector<4x16xf32>
    %356 = math.exp %355 : vector<4x16xf32>
    %cst_75 = arith.constant 1.000000e+00 : f32
    %357 = vector.broadcast %cst_75 : f32 to vector<4x16xf32>
    %358 = arith.addf %357, %356 : vector<4x16xf32>
    %359 = arith.divf %357, %358 : vector<4x16xf32>
    %360 = vector.extract_strided_slice %350 {offsets = [0, 32], sizes = [4, 16], strides = [1, 1]} : vector<4x48xf32> to vector<4x16xf32>
    %361 = vector.extract_strided_slice %351 {offsets = [0, 32], sizes = [4, 16], strides = [1, 1]} : vector<4x48xf32> to vector<4x16xf32>
    %362 = vector.broadcast %12 : vector<1x16xf32> to vector<4x16xf32>
    %363 = arith.addf %361, %362 : vector<4x16xf32>
    %364 = arith.mulf %359, %363 : vector<4x16xf32>
    %365 = arith.addf %360, %364 : vector<4x16xf32>
    %366 = math.tanh %365 : vector<4x16xf32>
    %367 = vector.extract_strided_slice %350 {offsets = [0, 16], sizes = [4, 16], strides = [1, 1]} : vector<4x48xf32> to vector<4x16xf32>
    %368 = vector.extract_strided_slice %351 {offsets = [0, 16], sizes = [4, 16], strides = [1, 1]} : vector<4x48xf32> to vector<4x16xf32>
    %369 = arith.addf %367, %368 : vector<4x16xf32>
    %370 = arith.negf %369 : vector<4x16xf32>
    %371 = math.exp %370 : vector<4x16xf32>
    %cst_76 = arith.constant 1.000000e+00 : f32
    %372 = vector.broadcast %cst_76 : f32 to vector<4x16xf32>
    %373 = arith.addf %372, %371 : vector<4x16xf32>
    %374 = arith.divf %372, %373 : vector<4x16xf32>
    %cst_77 = arith.constant 1.000000e+00 : f32
    %375 = vector.broadcast %cst_77 : f32 to vector<4x16xf32>
    %376 = arith.subf %375, %374 : vector<4x16xf32>
    %377 = arith.mulf %376, %366 : vector<4x16xf32>
    %378 = arith.mulf %374, %347 : vector<4x16xf32>
    %379 = arith.addf %377, %378 : vector<4x16xf32>
    %380 = vector.broadcast %349 : i32 to vector<4x1xi32>
    %381 = arith.cmpi sgt, %11, %380 : vector<4x1xi32>
    %382 = vector.shape_cast %381 : vector<4x1xi1> to vector<4x1xi1>
    %383 = vector.broadcast %382 : vector<4x1xi1> to vector<4x16xi1>
    %384 = arith.select %383, %379, %347 : vector<4x16xi1>, vector<4x16xf32>
    %c16_i32_78 = arith.constant 16 : i32
    %385 = arith.muli %arg1, %c16_i32_78 : i32
    %c10_i32 = arith.constant 10 : i32
    %386 = arith.addi %385, %c10_i32 : i32
    %c40 = arith.constant 40 : index
    %c0_79 = arith.constant 0 : index
    %387 = vector.load %arg14[%c40, %c0_79] : memref<64x48xf32, #tpu.memory_space<vmem>>, vector<4x48xf32>
    %cst_80 = arith.constant dense<0.000000e+00> : vector<4x48xf32>
    %388 = tpu.matmul %384, %13, %cst_80 {dimension_numbers = #tpu.dot_dimension_numbers<[1], [0], [0], [1], [0, 0, 1, 1], [], []>} : vector<4x16xf32>, vector<16x48xf32>, vector<4x48xf32> -> vector<4x48xf32>
    %389 = vector.extract_strided_slice %387 {offsets = [0, 0], sizes = [4, 16], strides = [1, 1]} : vector<4x48xf32> to vector<4x16xf32>
    %390 = vector.extract_strided_slice %388 {offsets = [0, 0], sizes = [4, 16], strides = [1, 1]} : vector<4x48xf32> to vector<4x16xf32>
    %391 = arith.addf %389, %390 : vector<4x16xf32>
    %392 = arith.negf %391 : vector<4x16xf32>
    %393 = math.exp %392 : vector<4x16xf32>
    %cst_81 = arith.constant 1.000000e+00 : f32
    %394 = vector.broadcast %cst_81 : f32 to vector<4x16xf32>
    %395 = arith.addf %394, %393 : vector<4x16xf32>
    %396 = arith.divf %394, %395 : vector<4x16xf32>
    %397 = vector.extract_strided_slice %387 {offsets = [0, 32], sizes = [4, 16], strides = [1, 1]} : vector<4x48xf32> to vector<4x16xf32>
    %398 = vector.extract_strided_slice %388 {offsets = [0, 32], sizes = [4, 16], strides = [1, 1]} : vector<4x48xf32> to vector<4x16xf32>
    %399 = vector.broadcast %12 : vector<1x16xf32> to vector<4x16xf32>
    %400 = arith.addf %398, %399 : vector<4x16xf32>
    %401 = arith.mulf %396, %400 : vector<4x16xf32>
    %402 = arith.addf %397, %401 : vector<4x16xf32>
    %403 = math.tanh %402 : vector<4x16xf32>
    %404 = vector.extract_strided_slice %387 {offsets = [0, 16], sizes = [4, 16], strides = [1, 1]} : vector<4x48xf32> to vector<4x16xf32>
    %405 = vector.extract_strided_slice %388 {offsets = [0, 16], sizes = [4, 16], strides = [1, 1]} : vector<4x48xf32> to vector<4x16xf32>
    %406 = arith.addf %404, %405 : vector<4x16xf32>
    %407 = arith.negf %406 : vector<4x16xf32>
    %408 = math.exp %407 : vector<4x16xf32>
    %cst_82 = arith.constant 1.000000e+00 : f32
    %409 = vector.broadcast %cst_82 : f32 to vector<4x16xf32>
    %410 = arith.addf %409, %408 : vector<4x16xf32>
    %411 = arith.divf %409, %410 : vector<4x16xf32>
    %cst_83 = arith.constant 1.000000e+00 : f32
    %412 = vector.broadcast %cst_83 : f32 to vector<4x16xf32>
    %413 = arith.subf %412, %411 : vector<4x16xf32>
    %414 = arith.mulf %413, %403 : vector<4x16xf32>
    %415 = arith.mulf %411, %384 : vector<4x16xf32>
    %416 = arith.addf %414, %415 : vector<4x16xf32>
    %417 = vector.broadcast %386 : i32 to vector<4x1xi32>
    %418 = arith.cmpi sgt, %11, %417 : vector<4x1xi32>
    %419 = vector.shape_cast %418 : vector<4x1xi1> to vector<4x1xi1>
    %420 = vector.broadcast %419 : vector<4x1xi1> to vector<4x16xi1>
    %421 = arith.select %420, %416, %384 : vector<4x16xi1>, vector<4x16xf32>
    %c16_i32_84 = arith.constant 16 : i32
    %422 = arith.muli %arg1, %c16_i32_84 : i32
    %c11_i32 = arith.constant 11 : i32
    %423 = arith.addi %422, %c11_i32 : i32
    %c44 = arith.constant 44 : index
    %c0_85 = arith.constant 0 : index
    %424 = vector.load %arg14[%c44, %c0_85] : memref<64x48xf32, #tpu.memory_space<vmem>>, vector<4x48xf32>
    %cst_86 = arith.constant dense<0.000000e+00> : vector<4x48xf32>
    %425 = tpu.matmul %421, %13, %cst_86 {dimension_numbers = #tpu.dot_dimension_numbers<[1], [0], [0], [1], [0, 0, 1, 1], [], []>} : vector<4x16xf32>, vector<16x48xf32>, vector<4x48xf32> -> vector<4x48xf32>
    %426 = vector.extract_strided_slice %424 {offsets = [0, 0], sizes = [4, 16], strides = [1, 1]} : vector<4x48xf32> to vector<4x16xf32>
    %427 = vector.extract_strided_slice %425 {offsets = [0, 0], sizes = [4, 16], strides = [1, 1]} : vector<4x48xf32> to vector<4x16xf32>
    %428 = arith.addf %426, %427 : vector<4x16xf32>
    %429 = arith.negf %428 : vector<4x16xf32>
    %430 = math.exp %429 : vector<4x16xf32>
    %cst_87 = arith.constant 1.000000e+00 : f32
    %431 = vector.broadcast %cst_87 : f32 to vector<4x16xf32>
    %432 = arith.addf %431, %430 : vector<4x16xf32>
    %433 = arith.divf %431, %432 : vector<4x16xf32>
    %434 = vector.extract_strided_slice %424 {offsets = [0, 32], sizes = [4, 16], strides = [1, 1]} : vector<4x48xf32> to vector<4x16xf32>
    %435 = vector.extract_strided_slice %425 {offsets = [0, 32], sizes = [4, 16], strides = [1, 1]} : vector<4x48xf32> to vector<4x16xf32>
    %436 = vector.broadcast %12 : vector<1x16xf32> to vector<4x16xf32>
    %437 = arith.addf %435, %436 : vector<4x16xf32>
    %438 = arith.mulf %433, %437 : vector<4x16xf32>
    %439 = arith.addf %434, %438 : vector<4x16xf32>
    %440 = math.tanh %439 : vector<4x16xf32>
    %441 = vector.extract_strided_slice %424 {offsets = [0, 16], sizes = [4, 16], strides = [1, 1]} : vector<4x48xf32> to vector<4x16xf32>
    %442 = vector.extract_strided_slice %425 {offsets = [0, 16], sizes = [4, 16], strides = [1, 1]} : vector<4x48xf32> to vector<4x16xf32>
    %443 = arith.addf %441, %442 : vector<4x16xf32>
    %444 = arith.negf %443 : vector<4x16xf32>
    %445 = math.exp %444 : vector<4x16xf32>
    %cst_88 = arith.constant 1.000000e+00 : f32
    %446 = vector.broadcast %cst_88 : f32 to vector<4x16xf32>
    %447 = arith.addf %446, %445 : vector<4x16xf32>
    %448 = arith.divf %446, %447 : vector<4x16xf32>
    %cst_89 = arith.constant 1.000000e+00 : f32
    %449 = vector.broadcast %cst_89 : f32 to vector<4x16xf32>
    %450 = arith.subf %449, %448 : vector<4x16xf32>
    %451 = arith.mulf %450, %440 : vector<4x16xf32>
    %452 = arith.mulf %448, %421 : vector<4x16xf32>
    %453 = arith.addf %451, %452 : vector<4x16xf32>
    %454 = vector.broadcast %423 : i32 to vector<4x1xi32>
    %455 = arith.cmpi sgt, %11, %454 : vector<4x1xi32>
    %456 = vector.shape_cast %455 : vector<4x1xi1> to vector<4x1xi1>
    %457 = vector.broadcast %456 : vector<4x1xi1> to vector<4x16xi1>
    %458 = arith.select %457, %453, %421 : vector<4x16xi1>, vector<4x16xf32>
    %c16_i32_90 = arith.constant 16 : i32
    %459 = arith.muli %arg1, %c16_i32_90 : i32
    %c12_i32 = arith.constant 12 : i32
    %460 = arith.addi %459, %c12_i32 : i32
    %c48 = arith.constant 48 : index
    %c0_91 = arith.constant 0 : index
    %461 = vector.load %arg14[%c48, %c0_91] : memref<64x48xf32, #tpu.memory_space<vmem>>, vector<4x48xf32>
    %cst_92 = arith.constant dense<0.000000e+00> : vector<4x48xf32>
    %462 = tpu.matmul %458, %13, %cst_92 {dimension_numbers = #tpu.dot_dimension_numbers<[1], [0], [0], [1], [0, 0, 1, 1], [], []>} : vector<4x16xf32>, vector<16x48xf32>, vector<4x48xf32> -> vector<4x48xf32>
    %463 = vector.extract_strided_slice %461 {offsets = [0, 0], sizes = [4, 16], strides = [1, 1]} : vector<4x48xf32> to vector<4x16xf32>
    %464 = vector.extract_strided_slice %462 {offsets = [0, 0], sizes = [4, 16], strides = [1, 1]} : vector<4x48xf32> to vector<4x16xf32>
    %465 = arith.addf %463, %464 : vector<4x16xf32>
    %466 = arith.negf %465 : vector<4x16xf32>
    %467 = math.exp %466 : vector<4x16xf32>
    %cst_93 = arith.constant 1.000000e+00 : f32
    %468 = vector.broadcast %cst_93 : f32 to vector<4x16xf32>
    %469 = arith.addf %468, %467 : vector<4x16xf32>
    %470 = arith.divf %468, %469 : vector<4x16xf32>
    %471 = vector.extract_strided_slice %461 {offsets = [0, 32], sizes = [4, 16], strides = [1, 1]} : vector<4x48xf32> to vector<4x16xf32>
    %472 = vector.extract_strided_slice %462 {offsets = [0, 32], sizes = [4, 16], strides = [1, 1]} : vector<4x48xf32> to vector<4x16xf32>
    %473 = vector.broadcast %12 : vector<1x16xf32> to vector<4x16xf32>
    %474 = arith.addf %472, %473 : vector<4x16xf32>
    %475 = arith.mulf %470, %474 : vector<4x16xf32>
    %476 = arith.addf %471, %475 : vector<4x16xf32>
    %477 = math.tanh %476 : vector<4x16xf32>
    %478 = vector.extract_strided_slice %461 {offsets = [0, 16], sizes = [4, 16], strides = [1, 1]} : vector<4x48xf32> to vector<4x16xf32>
    %479 = vector.extract_strided_slice %462 {offsets = [0, 16], sizes = [4, 16], strides = [1, 1]} : vector<4x48xf32> to vector<4x16xf32>
    %480 = arith.addf %478, %479 : vector<4x16xf32>
    %481 = arith.negf %480 : vector<4x16xf32>
    %482 = math.exp %481 : vector<4x16xf32>
    %cst_94 = arith.constant 1.000000e+00 : f32
    %483 = vector.broadcast %cst_94 : f32 to vector<4x16xf32>
    %484 = arith.addf %483, %482 : vector<4x16xf32>
    %485 = arith.divf %483, %484 : vector<4x16xf32>
    %cst_95 = arith.constant 1.000000e+00 : f32
    %486 = vector.broadcast %cst_95 : f32 to vector<4x16xf32>
    %487 = arith.subf %486, %485 : vector<4x16xf32>
    %488 = arith.mulf %487, %477 : vector<4x16xf32>
    %489 = arith.mulf %485, %458 : vector<4x16xf32>
    %490 = arith.addf %488, %489 : vector<4x16xf32>
    %491 = vector.broadcast %460 : i32 to vector<4x1xi32>
    %492 = arith.cmpi sgt, %11, %491 : vector<4x1xi32>
    %493 = vector.shape_cast %492 : vector<4x1xi1> to vector<4x1xi1>
    %494 = vector.broadcast %493 : vector<4x1xi1> to vector<4x16xi1>
    %495 = arith.select %494, %490, %458 : vector<4x16xi1>, vector<4x16xf32>
    %c16_i32_96 = arith.constant 16 : i32
    %496 = arith.muli %arg1, %c16_i32_96 : i32
    %c13_i32 = arith.constant 13 : i32
    %497 = arith.addi %496, %c13_i32 : i32
    %c52 = arith.constant 52 : index
    %c0_97 = arith.constant 0 : index
    %498 = vector.load %arg14[%c52, %c0_97] : memref<64x48xf32, #tpu.memory_space<vmem>>, vector<4x48xf32>
    %cst_98 = arith.constant dense<0.000000e+00> : vector<4x48xf32>
    %499 = tpu.matmul %495, %13, %cst_98 {dimension_numbers = #tpu.dot_dimension_numbers<[1], [0], [0], [1], [0, 0, 1, 1], [], []>} : vector<4x16xf32>, vector<16x48xf32>, vector<4x48xf32> -> vector<4x48xf32>
    %500 = vector.extract_strided_slice %498 {offsets = [0, 0], sizes = [4, 16], strides = [1, 1]} : vector<4x48xf32> to vector<4x16xf32>
    %501 = vector.extract_strided_slice %499 {offsets = [0, 0], sizes = [4, 16], strides = [1, 1]} : vector<4x48xf32> to vector<4x16xf32>
    %502 = arith.addf %500, %501 : vector<4x16xf32>
    %503 = arith.negf %502 : vector<4x16xf32>
    %504 = math.exp %503 : vector<4x16xf32>
    %cst_99 = arith.constant 1.000000e+00 : f32
    %505 = vector.broadcast %cst_99 : f32 to vector<4x16xf32>
    %506 = arith.addf %505, %504 : vector<4x16xf32>
    %507 = arith.divf %505, %506 : vector<4x16xf32>
    %508 = vector.extract_strided_slice %498 {offsets = [0, 32], sizes = [4, 16], strides = [1, 1]} : vector<4x48xf32> to vector<4x16xf32>
    %509 = vector.extract_strided_slice %499 {offsets = [0, 32], sizes = [4, 16], strides = [1, 1]} : vector<4x48xf32> to vector<4x16xf32>
    %510 = vector.broadcast %12 : vector<1x16xf32> to vector<4x16xf32>
    %511 = arith.addf %509, %510 : vector<4x16xf32>
    %512 = arith.mulf %507, %511 : vector<4x16xf32>
    %513 = arith.addf %508, %512 : vector<4x16xf32>
    %514 = math.tanh %513 : vector<4x16xf32>
    %515 = vector.extract_strided_slice %498 {offsets = [0, 16], sizes = [4, 16], strides = [1, 1]} : vector<4x48xf32> to vector<4x16xf32>
    %516 = vector.extract_strided_slice %499 {offsets = [0, 16], sizes = [4, 16], strides = [1, 1]} : vector<4x48xf32> to vector<4x16xf32>
    %517 = arith.addf %515, %516 : vector<4x16xf32>
    %518 = arith.negf %517 : vector<4x16xf32>
    %519 = math.exp %518 : vector<4x16xf32>
    %cst_100 = arith.constant 1.000000e+00 : f32
    %520 = vector.broadcast %cst_100 : f32 to vector<4x16xf32>
    %521 = arith.addf %520, %519 : vector<4x16xf32>
    %522 = arith.divf %520, %521 : vector<4x16xf32>
    %cst_101 = arith.constant 1.000000e+00 : f32
    %523 = vector.broadcast %cst_101 : f32 to vector<4x16xf32>
    %524 = arith.subf %523, %522 : vector<4x16xf32>
    %525 = arith.mulf %524, %514 : vector<4x16xf32>
    %526 = arith.mulf %522, %495 : vector<4x16xf32>
    %527 = arith.addf %525, %526 : vector<4x16xf32>
    %528 = vector.broadcast %497 : i32 to vector<4x1xi32>
    %529 = arith.cmpi sgt, %11, %528 : vector<4x1xi32>
    %530 = vector.shape_cast %529 : vector<4x1xi1> to vector<4x1xi1>
    %531 = vector.broadcast %530 : vector<4x1xi1> to vector<4x16xi1>
    %532 = arith.select %531, %527, %495 : vector<4x16xi1>, vector<4x16xf32>
    %c16_i32_102 = arith.constant 16 : i32
    %533 = arith.muli %arg1, %c16_i32_102 : i32
    %c14_i32 = arith.constant 14 : i32
    %534 = arith.addi %533, %c14_i32 : i32
    %c56 = arith.constant 56 : index
    %c0_103 = arith.constant 0 : index
    %535 = vector.load %arg14[%c56, %c0_103] : memref<64x48xf32, #tpu.memory_space<vmem>>, vector<4x48xf32>
    %cst_104 = arith.constant dense<0.000000e+00> : vector<4x48xf32>
    %536 = tpu.matmul %532, %13, %cst_104 {dimension_numbers = #tpu.dot_dimension_numbers<[1], [0], [0], [1], [0, 0, 1, 1], [], []>} : vector<4x16xf32>, vector<16x48xf32>, vector<4x48xf32> -> vector<4x48xf32>
    %537 = vector.extract_strided_slice %535 {offsets = [0, 0], sizes = [4, 16], strides = [1, 1]} : vector<4x48xf32> to vector<4x16xf32>
    %538 = vector.extract_strided_slice %536 {offsets = [0, 0], sizes = [4, 16], strides = [1, 1]} : vector<4x48xf32> to vector<4x16xf32>
    %539 = arith.addf %537, %538 : vector<4x16xf32>
    %540 = arith.negf %539 : vector<4x16xf32>
    %541 = math.exp %540 : vector<4x16xf32>
    %cst_105 = arith.constant 1.000000e+00 : f32
    %542 = vector.broadcast %cst_105 : f32 to vector<4x16xf32>
    %543 = arith.addf %542, %541 : vector<4x16xf32>
    %544 = arith.divf %542, %543 : vector<4x16xf32>
    %545 = vector.extract_strided_slice %535 {offsets = [0, 32], sizes = [4, 16], strides = [1, 1]} : vector<4x48xf32> to vector<4x16xf32>
    %546 = vector.extract_strided_slice %536 {offsets = [0, 32], sizes = [4, 16], strides = [1, 1]} : vector<4x48xf32> to vector<4x16xf32>
    %547 = vector.broadcast %12 : vector<1x16xf32> to vector<4x16xf32>
    %548 = arith.addf %546, %547 : vector<4x16xf32>
    %549 = arith.mulf %544, %548 : vector<4x16xf32>
    %550 = arith.addf %545, %549 : vector<4x16xf32>
    %551 = math.tanh %550 : vector<4x16xf32>
    %552 = vector.extract_strided_slice %535 {offsets = [0, 16], sizes = [4, 16], strides = [1, 1]} : vector<4x48xf32> to vector<4x16xf32>
    %553 = vector.extract_strided_slice %536 {offsets = [0, 16], sizes = [4, 16], strides = [1, 1]} : vector<4x48xf32> to vector<4x16xf32>
    %554 = arith.addf %552, %553 : vector<4x16xf32>
    %555 = arith.negf %554 : vector<4x16xf32>
    %556 = math.exp %555 : vector<4x16xf32>
    %cst_106 = arith.constant 1.000000e+00 : f32
    %557 = vector.broadcast %cst_106 : f32 to vector<4x16xf32>
    %558 = arith.addf %557, %556 : vector<4x16xf32>
    %559 = arith.divf %557, %558 : vector<4x16xf32>
    %cst_107 = arith.constant 1.000000e+00 : f32
    %560 = vector.broadcast %cst_107 : f32 to vector<4x16xf32>
    %561 = arith.subf %560, %559 : vector<4x16xf32>
    %562 = arith.mulf %561, %551 : vector<4x16xf32>
    %563 = arith.mulf %559, %532 : vector<4x16xf32>
    %564 = arith.addf %562, %563 : vector<4x16xf32>
    %565 = vector.broadcast %534 : i32 to vector<4x1xi32>
    %566 = arith.cmpi sgt, %11, %565 : vector<4x1xi32>
    %567 = vector.shape_cast %566 : vector<4x1xi1> to vector<4x1xi1>
    %568 = vector.broadcast %567 : vector<4x1xi1> to vector<4x16xi1>
    %569 = arith.select %568, %564, %532 : vector<4x16xi1>, vector<4x16xf32>
    %c16_i32_108 = arith.constant 16 : i32
    %570 = arith.muli %arg1, %c16_i32_108 : i32
    %c15_i32 = arith.constant 15 : i32
    %571 = arith.addi %570, %c15_i32 : i32
    %c60 = arith.constant 60 : index
    %c0_109 = arith.constant 0 : index
    %572 = vector.load %arg14[%c60, %c0_109] : memref<64x48xf32, #tpu.memory_space<vmem>>, vector<4x48xf32>
    %cst_110 = arith.constant dense<0.000000e+00> : vector<4x48xf32>
    %573 = tpu.matmul %569, %13, %cst_110 {dimension_numbers = #tpu.dot_dimension_numbers<[1], [0], [0], [1], [0, 0, 1, 1], [], []>} : vector<4x16xf32>, vector<16x48xf32>, vector<4x48xf32> -> vector<4x48xf32>
    %574 = vector.extract_strided_slice %572 {offsets = [0, 0], sizes = [4, 16], strides = [1, 1]} : vector<4x48xf32> to vector<4x16xf32>
    %575 = vector.extract_strided_slice %573 {offsets = [0, 0], sizes = [4, 16], strides = [1, 1]} : vector<4x48xf32> to vector<4x16xf32>
    %576 = arith.addf %574, %575 : vector<4x16xf32>
    %577 = arith.negf %576 : vector<4x16xf32>
    %578 = math.exp %577 : vector<4x16xf32>
    %cst_111 = arith.constant 1.000000e+00 : f32
    %579 = vector.broadcast %cst_111 : f32 to vector<4x16xf32>
    %580 = arith.addf %579, %578 : vector<4x16xf32>
    %581 = arith.divf %579, %580 : vector<4x16xf32>
    %582 = vector.extract_strided_slice %572 {offsets = [0, 32], sizes = [4, 16], strides = [1, 1]} : vector<4x48xf32> to vector<4x16xf32>
    %583 = vector.extract_strided_slice %573 {offsets = [0, 32], sizes = [4, 16], strides = [1, 1]} : vector<4x48xf32> to vector<4x16xf32>
    %584 = vector.broadcast %12 : vector<1x16xf32> to vector<4x16xf32>
    %585 = arith.addf %583, %584 : vector<4x16xf32>
    %586 = arith.mulf %581, %585 : vector<4x16xf32>
    %587 = arith.addf %582, %586 : vector<4x16xf32>
    %588 = math.tanh %587 : vector<4x16xf32>
    %589 = vector.extract_strided_slice %572 {offsets = [0, 16], sizes = [4, 16], strides = [1, 1]} : vector<4x48xf32> to vector<4x16xf32>
    %590 = vector.extract_strided_slice %573 {offsets = [0, 16], sizes = [4, 16], strides = [1, 1]} : vector<4x48xf32> to vector<4x16xf32>
    %591 = arith.addf %589, %590 : vector<4x16xf32>
    %592 = arith.negf %591 : vector<4x16xf32>
    %593 = math.exp %592 : vector<4x16xf32>
    %cst_112 = arith.constant 1.000000e+00 : f32
    %594 = vector.broadcast %cst_112 : f32 to vector<4x16xf32>
    %595 = arith.addf %594, %593 : vector<4x16xf32>
    %596 = arith.divf %594, %595 : vector<4x16xf32>
    %cst_113 = arith.constant 1.000000e+00 : f32
    %597 = vector.broadcast %cst_113 : f32 to vector<4x16xf32>
    %598 = arith.subf %597, %596 : vector<4x16xf32>
    %599 = arith.mulf %598, %588 : vector<4x16xf32>
    %600 = arith.mulf %596, %569 : vector<4x16xf32>
    %601 = arith.addf %599, %600 : vector<4x16xf32>
    %602 = vector.broadcast %571 : i32 to vector<4x1xi32>
    %603 = arith.cmpi sgt, %11, %602 : vector<4x1xi32>
    %604 = vector.shape_cast %603 : vector<4x1xi1> to vector<4x1xi1>
    %605 = vector.broadcast %604 : vector<4x1xi1> to vector<4x16xi1>
    %606 = arith.select %605, %601, %569 : vector<4x16xi1>, vector<4x16xf32>
    %c0_114 = arith.constant 0 : index
    %c0_115 = arith.constant 0 : index
    %607 = vector.load %arg13[%c0_114, %c0_115] : memref<4x16xf32, #tpu.memory_space<vmem>>, vector<4x16xf32>
    tpu.vector_store %arg13[%c0_114, %c0_115], %606 {strides = array<i32>} : memref<4x16xf32, #tpu.memory_space<vmem>>, vector<4x16xf32>,
    %c0_i32_116 = arith.constant 0 : i32
    %608 = arith.cmpi eq, %arg1, %c0_i32_116 : i32
    %609 = arith.extui %608 : i1 to i32
    %c0_i32_117 = arith.constant 0 : i32
    %610 = arith.cmpi ne, %609, %c0_i32_117 : i32
    scf.if %610 {
      %c0_118 = arith.constant 0 : index
      %c0_119 = arith.constant 0 : index
      %611 = vector.load %arg13[%c0_118, %c0_119] : memref<4x16xf32, #tpu.memory_space<vmem>>, vector<4x16xf32>
      %c0_120 = arith.constant 0 : index
      %c0_121 = arith.constant 0 : index
      %612 = vector.load %arg8[%c0_120, %c0_121] : memref<16x20xf32, #tpu.memory_space<vmem>>, vector<16x20xf32>
      %cst_122 = arith.constant dense<0.000000e+00> : vector<4x20xf32>
      %613 = tpu.matmul %611, %612, %cst_122 {dimension_numbers = #tpu.dot_dimension_numbers<[1], [0], [0], [1], [0, 0, 1, 1], [], []>} : vector<4x16xf32>, vector<16x20xf32>, vector<4x20xf32> -> vector<4x20xf32>
      %c0_123 = arith.constant 0 : index
      %c0_124 = arith.constant 0 : index
      %614 = vector.load %arg9[%c0_123, %c0_124] : memref<1x20xf32, #tpu.memory_space<vmem>>, vector<1x20xf32>
      %615 = vector.broadcast %614 : vector<1x20xf32> to vector<4x20xf32>
      %616 = arith.addf %613, %615 : vector<4x20xf32>
      %617 = math.tanh %616 : vector<4x20xf32>
      %c0_125 = arith.constant 0 : index
      %c0_126 = arith.constant 0 : index
      %618 = vector.load %arg10[%c0_125, %c0_126] : memref<20x32xf32, #tpu.memory_space<vmem>>, vector<20x32xf32>
      %cst_127 = arith.constant dense<0.000000e+00> : vector<4x32xf32>
      %619 = tpu.matmul %617, %618, %cst_127 {dimension_numbers = #tpu.dot_dimension_numbers<[1], [0], [0], [1], [0, 0, 1, 1], [], []>} : vector<4x20xf32>, vector<20x32xf32>, vector<4x32xf32> -> vector<4x32xf32>
      %c0_128 = arith.constant 0 : index
      %c0_129 = arith.constant 0 : index
      %620 = vector.load %arg11[%c0_128, %c0_129] : memref<1x32xf32, #tpu.memory_space<vmem>>, vector<1x32xf32>
      %621 = vector.broadcast %620 : vector<1x32xf32> to vector<4x32xf32>
      %622 = arith.addf %619, %621 : vector<4x32xf32>
      %c0_130 = arith.constant 0 : index
      %c0_131 = arith.constant 0 : index
      %623 = vector.load %arg12[%c0_130, %c0_131] : memref<4x32xf32, #tpu.memory_space<vmem>>, vector<4x32xf32>
      tpu.vector_store %arg12[%c0_130, %c0_131], %622 {strides = array<i32>} : memref<4x32xf32, #tpu.memory_space<vmem>>, vector<4x32xf32>,
    } else {
    }
    return
  }
  func.func @transform_0(%arg0: i32, %arg1: i32) -> (i32, i32, i32) {
    %c0_i32 = arith.constant 0 : i32
    %c0_i32_0 = arith.constant 0 : i32
    return %arg0, %arg1, %c0_i32 : i32, i32, i32
  }
  func.func @transform_1(%arg0: i32, %arg1: i32) -> (i32, i32) {
    %c0_i32 = arith.constant 0 : i32
    %c0_i32_0 = arith.constant 0 : i32
    return %arg0, %c0_i32 : i32, i32
  }
  func.func @transform_2(%arg0: i32, %arg1: i32) -> (i32, i32) {
    %c0_i32 = arith.constant 0 : i32
    %c0_i32_0 = arith.constant 0 : i32
    %c0_i32_1 = arith.constant 0 : i32
    return %c0_i32, %c0_i32_0 : i32, i32
  }
  func.func @transform_3(%arg0: i32, %arg1: i32) -> (i32, i32) {
    %c0_i32 = arith.constant 0 : i32
    %c0_i32_0 = arith.constant 0 : i32
    %c0_i32_1 = arith.constant 0 : i32
    return %c0_i32, %c0_i32_0 : i32, i32
  }
  func.func @transform_4(%arg0: i32, %arg1: i32) -> (i32, i32) {
    %c0_i32 = arith.constant 0 : i32
    %c0_i32_0 = arith.constant 0 : i32
    %c0_i32_1 = arith.constant 0 : i32
    return %c0_i32, %c0_i32_0 : i32, i32
  }
  func.func @transform_5(%arg0: i32, %arg1: i32) -> (i32, i32) {
    %c0_i32 = arith.constant 0 : i32
    %c0_i32_0 = arith.constant 0 : i32
    %c0_i32_1 = arith.constant 0 : i32
    return %c0_i32, %c0_i32_0 : i32, i32
  }
  func.func @transform_6(%arg0: i32, %arg1: i32) -> (i32, i32) {
    %c0_i32 = arith.constant 0 : i32
    %c0_i32_0 = arith.constant 0 : i32
    %c0_i32_1 = arith.constant 0 : i32
    return %c0_i32, %c0_i32_0 : i32, i32
  }
  func.func @transform_7(%arg0: i32, %arg1: i32) -> (i32, i32) {
    %c0_i32 = arith.constant 0 : i32
    %c0_i32_0 = arith.constant 0 : i32
    %c0_i32_1 = arith.constant 0 : i32
    return %c0_i32, %c0_i32_0 : i32, i32
  }
  func.func @transform_8(%arg0: i32, %arg1: i32) -> (i32, i32) {
    %c0_i32 = arith.constant 0 : i32
    %c0_i32_0 = arith.constant 0 : i32
    %c0_i32_1 = arith.constant 0 : i32
    return %c0_i32, %c0_i32_0 : i32, i32
  }
  func.func @transform_9(%arg0: i32, %arg1: i32) -> (i32, i32) {
    %c0_i32 = arith.constant 0 : i32
    %c0_i32_0 = arith.constant 0 : i32
    %c0_i32_1 = arith.constant 0 : i32
    return %c0_i32, %c0_i32_0 : i32, i32
  }
  func.func @transform_10(%arg0: i32, %arg1: i32) -> (i32, i32) {
    %c0_i32 = arith.constant 0 : i32
    %c0_i32_0 = arith.constant 0 : i32
    return %arg0, %c0_i32 : i32, i32
  }
}

</mosaic_0001>

<llo_original>
// kernel: encoder_z0_rnn_forward.1
$region0: #{encoder_z0_rnn_forward.1}
  #allocation0 [shape = 'u32[]', space=smem, size = 0x4, offset = 0x4, fixed_abs, tag = 'smem constant byte address 0x4 - core index']
  #allocation1 [shape = 'u32[144,128]{1,0:T(1,128)}', space=vmem, size = 0x12000, scoped, tag = 'internal scratch']
  #allocation2 [shape = 'f32[4,16]{1,0:T(4,128)}', space=vmem, size = 0x800, scoped, tag = 'scratch operand']
  #allocation3 [shape = 'f32[64,48]{1,0:T(8,128)}', space=vmem, size = 0x8000, scoped, tag = 'scratch operand']
  %s0 = inlined_call_operand.vmem [shape: f32[1,64,12], index: 0, kind: input, shape index: {}]
  %s1 = inlined_call_operand.vmem [shape: s32[4,1], index: 1, kind: input, shape index: {}]
  %s2 = inlined_call_operand.vmem [shape: f32[12,48], index: 2, kind: input, shape index: {}]
  %s3 = inlined_call_operand.vmem [shape: f32[1,48], index: 3, kind: input, shape index: {}]
  %s4 = inlined_call_operand.vmem [shape: f32[16,48], index: 4, kind: input, shape index: {}]
  %s5 = inlined_call_operand.vmem [shape: f32[1,16], index: 5, kind: input, shape index: {}]
  %s6 = inlined_call_operand.vmem [shape: f32[16,20], index: 6, kind: input, shape index: {}]
  %s7 = inlined_call_operand.vmem [shape: f32[1,20], index: 7, kind: input, shape index: {}]
  %s8 = inlined_call_operand.vmem [shape: f32[20,32], index: 8, kind: input, shape index: {}]
  %s9 = inlined_call_operand.vmem [shape: f32[1,32], index: 9, kind: input, shape index: {}]
  %s10 = inlined_call_operand.vmem [shape: f32[4,32], index: 10, kind: output, shape index: {}]
  %s11 = sld [smem:[#allocation0]]
  $region58: #{encoder_z0_rnn_forward.1} parent=0
    _
  %s13 = ssub.s32 1, %s11
  %s14 = scalar_select 0, %s13, %s11
  // Predicated region
  $region2: #{encoder_z0_rnn_forward.1} parent=0 // pred_check
    _
  $region3: #{encoder_z0_rnn_forward.1} parent=0 // pred_check_branch
    %16 = sbr.rel (0) target = $region5
  $region4: #{encoder_z0_rnn_forward.1} parent=0 // pred_region
    _
  $region5: #{encoder_z0_rnn_forward.1} parent=0 // pred_fallthru
    _
  // Predicated region
  $region6: #{encoder_z0_rnn_forward.1} parent=0 // pred_check
    _
  $region7: #{encoder_z0_rnn_forward.1} parent=0 // pred_check_branch
    %18 = sbr.rel (0) target = $region9
  $region8: #{encoder_z0_rnn_forward.1} parent=0 // pred_region
    _
  $region9: #{encoder_z0_rnn_forward.1} parent=0 // pred_fallthru
    _
  // Predicated region
  $region10: #{encoder_z0_rnn_forward.1} parent=0 // pred_check
    _
  $region11: #{encoder_z0_rnn_forward.1} parent=0 // pred_check_branch
    %20 = sbr.rel (0) target = $region13
  $region12: #{encoder_z0_rnn_forward.1} parent=0 // pred_region
    _
  $region13: #{encoder_z0_rnn_forward.1} parent=0 // pred_fallthru
    _
  // Predicated region
  $region14: #{encoder_z0_rnn_forward.1} parent=0 // pred_check
    _
  $region15: #{encoder_z0_rnn_forward.1} parent=0 // pred_check_branch
    %22 = sbr.rel (0) target = $region17
  $region16: #{encoder_z0_rnn_forward.1} parent=0 // pred_region
    _
  $region17: #{encoder_z0_rnn_forward.1} parent=0 // pred_fallthru
    _
  // Predicated region
  $region18: #{encoder_z0_rnn_forward.1} parent=0 // pred_check
    _
  $region19: #{encoder_z0_rnn_forward.1} parent=0 // pred_check_branch
    %24 = sbr.rel (0) target = $region21
  $region20: #{encoder_z0_rnn_forward.1} parent=0 // pred_region
    _
  $region21: #{encoder_z0_rnn_forward.1} parent=0 // pred_fallthru
    _
  // Predicated region
  $region22: #{encoder_z0_rnn_forward.1} parent=0 // pred_check
    _
  $region23: #{encoder_z0_rnn_forward.1} parent=0 // pred_check_branch
    %26 = sbr.rel (0) target = $region25
  $region24: #{encoder_z0_rnn_forward.1} parent=0 // pred_region
    _
  $region25: #{encoder_z0_rnn_forward.1} parent=0 // pred_fallthru
    _
  // Predicated region
  $region26: #{encoder_z0_rnn_forward.1} parent=0 // pred_check
    _
  $region27: #{encoder_z0_rnn_forward.1} parent=0 // pred_check_branch
    %28 = sbr.rel (0) target = $region29
  $region28: #{encoder_z0_rnn_forward.1} parent=0 // pred_region
    _
  $region29: #{encoder_z0_rnn_forward.1} parent=0 // pred_fallthru
    _
  // Predicated region
  $region30: #{encoder_z0_rnn_forward.1} parent=0 // pred_check
    _
  $region31: #{encoder_z0_rnn_forward.1} parent=0 // pred_check_branch
    %30 = sbr.rel (0) target = $region33
  $region32: #{encoder_z0_rnn_forward.1} parent=0 // pred_region
    _
  $region33: #{encoder_z0_rnn_forward.1} parent=0 // pred_fallthru
    _
  // Predicated region
  $region34: #{encoder_z0_rnn_forward.1} parent=0 // pred_check
    _
  $region35: #{encoder_z0_rnn_forward.1} parent=0 // pred_check_branch
    %32 = sbr.rel (0) target = $region37
  $region36: #{encoder_z0_rnn_forward.1} parent=0 // pred_region
    _
  $region37: #{encoder_z0_rnn_forward.1} parent=0 // pred_fallthru
    _
  // Predicated region
  $region38: #{encoder_z0_rnn_forward.1} parent=0 // pred_check
    _
  $region39: #{encoder_z0_rnn_forward.1} parent=0 // pred_check_branch
    %34 = sbr.rel (0) target = $region41
  $region40: #{encoder_z0_rnn_forward.1} parent=0 // pred_region
    _
  $region41: #{encoder_z0_rnn_forward.1} parent=0 // pred_fallthru
    _
  %p35 = scmp.eq.s32.totalorder 0, 0
  // Predicated region
  $region42: #{encoder_z0_rnn_forward.1} parent=0 // pred_check
    %p36 = pneg %p35
  $region43: #{encoder_z0_rnn_forward.1} parent=0 // pred_check_branch
    %38 = sbr.rel (%p36) target = $region45
  $region44: #{encoder_z0_rnn_forward.1} parent=0 // pred_region
    %vm39 = vcmask 125952
    %40 = vst.msk [vmem:[#allocation2] sm:$0xf] %vm39, 0.0
  $region45: #{encoder_z0_rnn_forward.1} parent=0 // pred_fallthru
    _
  %v41 = vld [vmem:[%s0] sm:$0xff]
  %v42 = vld [vmem:[%s0 + $0x8] sm:$0xff]
  %v43 = vld [vmem:[%s0 + $0x10] sm:$0xff]
  %v44 = vld [vmem:[%s0 + $0x18] sm:$0xff]
  %v45 = vld [vmem:[%s0 + $0x20] sm:$0xff]
  %v46 = vld [vmem:[%s0 + $0x28] sm:$0xff]
  %v47 = vld [vmem:[%s0 + $0x30] sm:$0xff]
  %v48 = vld [vmem:[%s0 + $0x38] sm:$0xff]
  %v49 = vld [vmem:[%s2] sm:$0xff]
  %v50 = vld [vmem:[%s2 + $0x8] sm:$0xf]
  %v51 = vld [vmem:[%s3] sm:$0x1]
  %v53 = vlaneseq
  %v54 = vshrl.u32 %v53, 7
  %v55 = vsub.s32 0, %v54
  %v56 = vrot.slane %v51, %v55
  %vm58 = vcmask 97280
  %v60 = vsel %vm58, %v41, 0
  %v63 = vsel %vm58, %v42, 0
  %v66 = vsel %vm58, %v43, 0
  %v69 = vsel %vm58, %v44, 0
  %v72 = vsel %vm58, %v45, 0
  %v75 = vsel %vm58, %v46, 0
  %v78 = vsel %vm58, %v47, 0
  %v81 = vsel %vm58, %v48, 0
  %vm83 = vcmask 1043456
  %v85 = vsel %vm83, %v50, 0
  %87 = vmatprep.subr.mxu0 0.0
  %88 = vmatpush1.msra.mxu0 %v49
  %89 = vmatprep.subr.mxu0 0.0
  %90 = vmatpush1.msra.mxu0 %v85
  %91 = vmatprep.subr.mxu0 0.0
  %92 = vmatpush1.msra.mxu0 0.0
  %93 = vmatprep.subr.mxu0 0.0
  %94 = vmatpush1.msra.mxu0 0.0
  %95 = vmatprep.subr.mxu0 0.0
  %96 = vmatpush1.msra.mxu0 0.0
  %97 = vmatprep.subr.mxu0 0.0
  %98 = vmatpush1.msra.mxu0 0.0
  %99 = vmatprep.subr.mxu0 0.0
  %100 = vmatpush1.msra.mxu0 0.0
  %101 = vmatprep.subr.mxu0 0.0
  %102 = vmatpush1.msra.mxu0 0.0
  %103 = vmatprep.subr.mxu0 0.0
  %104 = vmatpush1.msra.mxu0 0.0
  %105 = vmatprep.subr.mxu0 0.0
  %106 = vmatpush1.msra.mxu0 0.0
  %107 = vmatprep.subr.mxu0 0.0
  %108 = vmatpush1.msra.mxu0 0.0
  %109 = vmatprep.subr.mxu0 0.0
  %110 = vmatpush1.msra.mxu0 0.0
  %111 = vmatprep.subr.mxu0 0.0
  %112 = vmatpush1.msra.mxu0 0.0
  %113 = vmatprep.subr.mxu0 0.0
  %114 = vmatpush1.msra.mxu0 0.0
  %115 = vmatprep.subr.mxu0 0.0
  %116 = vmatpush1.msra.mxu0 0.0
  %117 = vmatprep.subr.mxu0 0.0
  %118 = vmatpush1.msra.mxu0 0.0
  %119 = vmatprep.subr.mxu0 0.0
  %120 = vmatpush1.msra.mxu0 0.0
  %121 = vmatprep.subr.mxu0 0.0
  %122 = vmatpush1.msra.mxu0 0.0
  %123 = vmatprep.subr.mxu0 0.0
  %124 = vmatpush1.msra.mxu0 0.0
  %125 = vmatprep.subr.mxu0 0.0
  %126 = vmatpush1.msra.mxu0 0.0
  %127 = vmatprep.subr.mxu0 0.0
  %128 = vmatpush1.msra.mxu0 0.0
  %129 = vmatprep.subr.mxu0 0.0
  %130 = vmatpush1.msra.mxu0 0.0
  %131 = vmatprep.subr.mxu0 0.0
  %132 = vmatpush1.msra.mxu0 0.0
  %133 = vmatprep.subr.mxu0 0.0
  %134 = vmatpush1.msra.mxu0 0.0
  %135 = vmatprep.subr.mxu0 0.0
  %136 = vmatpush1.msra.mxu0 0.0
  %137 = vmatprep.subr.mxu0 0.0
  %138 = vmatpush1.msra.mxu0 0.0
  %139 = vmatprep.subr.mxu0 0.0
  %140 = vmatpush1.msra.mxu0 0.0
  %141 = vmatprep.subr.mxu0 0.0
  %142 = vmatpush1.msra.mxu0 0.0
  %143 = vmatprep.subr.mxu0 0.0
  %144 = vmatpush1.msra.mxu0 0.0
  %145 = vmatprep.subr.mxu0 0.0
  %146 = vmatpush1.msra.mxu0 0.0
  %147 = vmatprep.subr.mxu0 0.0
  %148 = vmatpush1.msra.mxu0 0.0
  %149 = vmatprep.subr.mxu0 0.0
  %150 = vmatpush1.msra.mxu0 0.0
  %151 = vmatprep.mubr.f32.mxu0 0.0
  %152 = vmatmul.mubr.f32.gmra.mrb[0].mxu0 %v60
  %v153 = vpop.f32.mrb[0].mxu0
  %v154 = vadd.f32 %v56, %v153
  %v155 = vpop.f32.mrb[0].mxu0
  %156 = vmatprep.mubr.f32.mxu0 0.0
  %157 = vmatmul.mubr.f32.gmra.mrb[0].mxu0 %v63
  %v158 = vpop.f32.mrb[0].mxu0
  %v159 = vadd.f32 %v56, %v158
  %v160 = vpop.f32.mrb[0].mxu0
  %161 = vmatprep.mubr.f32.mxu0 0.0
  %162 = vmatmul.mubr.f32.gmra.mrb[0].mxu0 %v66
  %v163 = vpop.f32.mrb[0].mxu0
  %v164 = vadd.f32 %v56, %v163
  %v165 = vpop.f32.mrb[0].mxu0
  %166 = vmatprep.mubr.f32.mxu0 0.0
  %167 = vmatmul.mubr.f32.gmra.mrb[0].mxu0 %v69
  %v168 = vpop.f32.mrb[0].mxu0
  %v169 = vadd.f32 %v56, %v168
  %v170 = vpop.f32.mrb[0].mxu0
  %171 = vmatprep.mubr.f32.mxu0 0.0
  %172 = vmatmul.mubr.f32.gmra.mrb[0].mxu0 %v72
  %v173 = vpop.f32.mrb[0].mxu0
  %v174 = vadd.f32 %v56, %v173
  %v175 = vpop.f32.mrb[0].mxu0
  %176 = vmatprep.mubr.f32.mxu0 0.0
  %177 = vmatmul.mubr.f32.gmra.mrb[0].mxu0 %v75
  %v178 = vpop.f32.mrb[0].mxu0
  %v179 = vadd.f32 %v56, %v178
  %v180 = vpop.f32.mrb[0].mxu0
  %181 = vmatprep.mubr.f32.mxu0 0.0
  %182 = vmatmul.mubr.f32.gmra.mrb[0].mxu0 %v78
  %v183 = vpop.f32.mrb[0].mxu0
  %v184 = vadd.f32 %v56, %v183
  %v185 = vpop.f32.mrb[0].mxu0
  %186 = vmatprep.mubr.f32.mxu0 0.0
  %187 = vmatmul.mubr.f32.gmra.mrb[0].mxu0 %v81
  %v188 = vpop.f32.mrb[0].mxu0
  %v189 = vadd.f32 %v56, %v188
  %v190 = vpop.f32.mrb[0].mxu0
  %191 = vdwg.mxu0
  %vm192 = vcmask 392192
  %193 = vst.msk [vmem:[#allocation3] sm:$0xff] %vm192, %v154
  %194 = vst.msk [vmem:[#allocation3 + $0x8] sm:$0xff] %vm192, %v159
  %195 = vst.msk [vmem:[#allocation3 + $0x10] sm:$0xff] %vm192, %v164
  %196 = vst.msk [vmem:[#allocation3 + $0x18] sm:$0xff] %vm192, %v169
  %197 = vst.msk [vmem:[#allocation3 + $0x20] sm:$0xff] %vm192, %v174
  %198 = vst.msk [vmem:[#allocation3 + $0x28] sm:$0xff] %vm192, %v179
  %199 = vst.msk [vmem:[#allocation3 + $0x30] sm:$0xff] %vm192, %v184
  %200 = vst.msk [vmem:[#allocation3 + $0x38] sm:$0xff] %vm192, %v189
  %v201 = vld [vmem:[%s1] sm:$0xf]
  %v202 = vld [vmem:[%s5] sm:$0x1]
  %v203 = vld [vmem:[%s4] sm:$0xff]
  %v204 = vld [vmem:[%s4 + $0x8] sm:$0xff]
  %v205 = vld [vmem:[#allocation2] sm:$0xf]
  %s206 = smul.u32 0, 16
  %v207 = vld [vmem:[#allocation3] sm:$0xf]
  %vm208 = vcmask 130048
  %v210 = vsel %vm208, %v205, 0
  %212 = vmatprep.subr.mxu0 0.0
  %213 = vmatpush1.msra.mxu0 %v203
  %214 = vmatprep.subr.mxu0 0.0
  %215 = vmatpush1.msra.mxu0 %v204
  %216 = vmatprep.subr.mxu0 0.0
  %217 = vmatpush1.msra.mxu0 0.0
  %218 = vmatprep.subr.mxu0 0.0
  %219 = vmatpush1.msra.mxu0 0.0
  %220 = vmatprep.subr.mxu0 0.0
  %221 = vmatpush1.msra.mxu0 0.0
  %222 = vmatprep.subr.mxu0 0.0
  %223 = vmatpush1.msra.mxu0 0.0
  %224 = vmatprep.subr.mxu0 0.0
  %225 = vmatpush1.msra.mxu0 0.0
  %226 = vmatprep.subr.mxu0 0.0
  %227 = vmatpush1.msra.mxu0 0.0
  %228 = vmatprep.subr.mxu0 0.0
  %229 = vmatpush1.msra.mxu0 0.0
  %230 = vmatprep.subr.mxu0 0.0
  %231 = vmatpush1.msra.mxu0 0.0
  %232 = vmatprep.subr.mxu0 0.0
  %233 = vmatpush1.msra.mxu0 0.0
  %234 = vmatprep.subr.mxu0 0.0
  %235 = vmatpush1.msra.mxu0 0.0
  %236 = vmatprep.subr.mxu0 0.0
  %237 = vmatpush1.msra.mxu0 0.0
  %238 = vmatprep.subr.mxu0 0.0
  %239 = vmatpush1.msra.mxu0 0.0
  %240 = vmatprep.subr.mxu0 0.0
  %241 = vmatpush1.msra.mxu0 0.0
  %242 = vmatprep.subr.mxu0 0.0
  %243 = vmatpush1.msra.mxu0 0.0
  %244 = vmatprep.subr.mxu0 0.0
  %245 = vmatpush1.msra.mxu0 0.0
  %246 = vmatprep.subr.mxu0 0.0
  %247 = vmatpush1.msra.mxu0 0.0
  %248 = vmatprep.subr.mxu0 0.0
  %249 = vmatpush1.msra.mxu0 0.0
  %250 = vmatprep.subr.mxu0 0.0
  %251 = vmatpush1.msra.mxu0 0.0
  %252 = vmatprep.subr.mxu0 0.0
  %253 = vmatpush1.msra.mxu0 0.0
  %254 = vmatprep.subr.mxu0 0.0
  %255 = vmatpush1.msra.mxu0 0.0
  %256 = vmatprep.subr.mxu0 0.0
  %257 = vmatpush1.msra.mxu0 0.0
  %258 = vmatprep.subr.mxu0 0.0
  %259 = vmatpush1.msra.mxu0 0.0
  %260 = vmatprep.subr.mxu0 0.0
  %261 = vmatpush1.msra.mxu0 0.0
  %262 = vmatprep.subr.mxu0 0.0
  %263 = vmatpush1.msra.mxu0 0.0
  %264 = vmatprep.subr.mxu0 0.0
  %265 = vmatpush1.msra.mxu0 0.0
  %266 = vmatprep.subr.mxu0 0.0
  %267 = vmatpush1.msra.mxu0 0.0
  %268 = vmatprep.subr.mxu0 0.0
  %269 = vmatpush1.msra.mxu0 0.0
  %270 = vmatprep.subr.mxu0 0.0
  %271 = vmatpush1.msra.mxu0 0.0
  %272 = vmatprep.subr.mxu0 0.0
  %273 = vmatpush1.msra.mxu0 0.0
  %274 = vmatprep.subr.mxu0 0.0
  %275 = vmatpush1.msra.mxu0 0.0
  %276 = vmatprep.mubr.f32.mxu0 0.0
  %277 = vmatmul.mubr.f32.gmra.mrb[0].mxu0 %v210
  %v278 = vpop.f32.mrb[0].mxu0
  %v279 = vadd.f32 0.0, %v278
  %v280 = vpop.f32.mrb[0].mxu0
  %281 = vdwg.mxu0
  %v282 = vadd.f32 %v207, %v279
  %v283 = vxor.u32 %v282, 2147483648
  %v284 = vmul.f32 %v283, 1.442695
  %v285 = vpow.pop %v284
  %v286 = vadd.f32 %v285, 1.0
  %v287 = vrcp.pop %v286
  %v288 = vmul.f32 1.0, %v287
  %v290 = vlaneseq
  %v291 = vshrl.u32 %v290, 7
  %v292 = vsub.s32 0, %v291
  %v293 = vrot.slane %v202, %v292
  %294 = vrot.lane.b32.xlu0 %v293, 32
  %v295 = vpop.permute.xlu0 %294
  %v297 = vadd.f32 %v279, %v295
  %299 = vrot.lane.b32.xlu0 %v297, 96
  %v300 = vpop.permute.xlu0 %299
  %v302 = vmul.f32 %v288, %v300
  %304 = vrot.lane.b32.xlu0 %v302, 32
  %v305 = vpop.permute.xlu0 %304
  %v307 = vadd.f32 %v207, %v305
  %v308 = vtanh.pop %v307
  %v309 = vsub.f32 1.0, %v288
  %311 = vrot.lane.b32.xlu0 %v308, 112
  %v312 = vpop.permute.xlu0 %311
  %v314 = vmul.f32 %v309, %v312
  %315 = vrot.lane.b32.xlu0 %v205, 16
  %v316 = vpop.permute.xlu0 %315
  %v318 = vmul.f32 %v288, %v316
  %v319 = vadd.f32 %v314, %v318
  %v320 = vstv %s206
  %vm321 = vcmp.gt.s32.totalorder %v201, %v320
  %v322 = vsel %vm321, 1, 0
  %323 = vset.pattern.permute.xlu0 0
  %324 = vperm.xlu0 %323, %v322
  %v325 = vpop.permute.xlu0 %324
  %vm326 = vcmp.eq.s32.totalorder %v325, 1
  %v327 = vsel %vm326, %v319, %v316
  %s328 = sadd.s32 %s206, 1
  %v329 = vld [vmem:[#allocation3 + $0x4] sm:$0xf]
  %331 = vrot.lane.b32.xlu0 %v327, 112
  %v332 = vpop.permute.xlu0 %331
  %v333 = vsel %vm208, %v332, 0
  %335 = vmatprep.subr.mxu0 0.0
  %336 = vmatpush1.msra.mxu0 %v203
  %337 = vmatprep.subr.mxu0 0.0
  %338 = vmatpush1.msra.mxu0 %v204
  %339 = vmatprep.subr.mxu0 0.0
  %340 = vmatpush1.msra.mxu0 0.0
  %341 = vmatprep.subr.mxu0 0.0
  %342 = vmatpush1.msra.mxu0 0.0
  %343 = vmatprep.subr.mxu0 0.0
  %344 = vmatpush1.msra.mxu0 0.0
  %345 = vmatprep.subr.mxu0 0.0
  %346 = vmatpush1.msra.mxu0 0.0
  %347 = vmatprep.subr.mxu0 0.0
  %348 = vmatpush1.msra.mxu0 0.0
  %349 = vmatprep.subr.mxu0 0.0
  %350 = vmatpush1.msra.mxu0 0.0
  %351 = vmatprep.subr.mxu0 0.0
  %352 = vmatpush1.msra.mxu0 0.0
  %353 = vmatprep.subr.mxu0 0.0
  %354 = vmatpush1.msra.mxu0 0.0
  %355 = vmatprep.subr.mxu0 0.0
  %356 = vmatpush1.msra.mxu0 0.0
  %357 = vmatprep.subr.mxu0 0.0
  %358 = vmatpush1.msra.mxu0 0.0
  %359 = vmatprep.subr.mxu0 0.0
  %360 = vmatpush1.msra.mxu0 0.0
  %361 = vmatprep.subr.mxu0 0.0
  %362 = vmatpush1.msra.mxu0 0.0
  %363 = vmatprep.subr.mxu0 0.0
  %364 = vmatpush1.msra.mxu0 0.0
  %365 = vmatprep.subr.mxu0 0.0
  %366 = vmatpush1.msra.mxu0 0.0
  %367 = vmatprep.subr.mxu0 0.0
  %368 = vmatpush1.msra.mxu0 0.0
  %369 = vmatprep.subr.mxu0 0.0
  %370 = vmatpush1.msra.mxu0 0.0
  %371 = vmatprep.subr.mxu0 0.0
  %372 = vmatpush1.msra.mxu0 0.0
  %373 = vmatprep.subr.mxu0 0.0
  %374 = vmatpush1.msra.mxu0 0.0
  %375 = vmatprep.subr.mxu0 0.0
  %376 = vmatpush1.msra.mxu0 0.0
  %377 = vmatprep.subr.mxu0 0.0
  %378 = vmatpush1.msra.mxu0 0.0
  %379 = vmatprep.subr.mxu0 0.0
  %380 = vmatpush1.msra.mxu0 0.0
  %381 = vmatprep.subr.mxu0 0.0
  %382 = vmatpush1.msra.mxu0 0.0
  %383 = vmatprep.subr.mxu0 0.0
  %384 = vmatpush1.msra.mxu0 0.0
  %385 = vmatprep.subr.mxu0 0.0
  %386 = vmatpush1.msra.mxu0 0.0
  %387 = vmatprep.subr.mxu0 0.0
  %388 = vmatpush1.msra.mxu0 0.0
  %389 = vmatprep.subr.mxu0 0.0
  %390 = vmatpush1.msra.mxu0 0.0
  %391 = vmatprep.subr.mxu0 0.0
  %392 = vmatpush1.msra.mxu0 0.0
  %393 = vmatprep.subr.mxu0 0.0
  %394 = vmatpush1.msra.mxu0 0.0
  %395 = vmatprep.subr.mxu0 0.0
  %396 = vmatpush1.msra.mxu0 0.0
  %397 = vmatprep.subr.mxu0 0.0
  %398 = vmatpush1.msra.mxu0 0.0
  %399 = vmatprep.mubr.f32.mxu0 0.0
  %400 = vmatmul.mubr.f32.gmra.mrb[0].mxu0 %v333
  %v401 = vpop.f32.mrb[0].mxu0
  %v402 = vadd.f32 0.0, %v401
  %v403 = vpop.f32.mrb[0].mxu0
  %404 = vdwg.mxu0
  %v405 = vadd.f32 %v329, %v402
  %v406 = vxor.u32 %v405, 2147483648
  %v407 = vmul.f32 %v406, 1.442695
  %v408 = vpow.pop %v407
  %v409 = vadd.f32 %v408, 1.0
  %v410 = vrcp.pop %v409
  %v411 = vmul.f32 1.0, %v410
  %v412 = vadd.f32 %v402, %v295
  %414 = vrot.lane.b32.xlu0 %v412, 96
  %v415 = vpop.permute.xlu0 %414
  %v417 = vmul.f32 %v411, %v415
  %419 = vrot.lane.b32.xlu0 %v417, 32
  %v420 = vpop.permute.xlu0 %419
  %v422 = vadd.f32 %v329, %v420
  %v423 = vtanh.pop %v422
  %v424 = vsub.f32 1.0, %v411
  %426 = vrot.lane.b32.xlu0 %v423, 112
  %v427 = vpop.permute.xlu0 %426
  %v429 = vmul.f32 %v424, %v427
  %v430 = vmul.f32 %v411, %v327
  %v431 = vadd.f32 %v429, %v430
  %v432 = vstv %s328
  %vm433 = vcmp.gt.s32.totalorder %v201, %v432
  %v434 = vsel %vm433, 1, 0
  %435 = vset.pattern.permute.xlu0 0
  %436 = vperm.xlu0 %435, %v434
  %v437 = vpop.permute.xlu0 %436
  %vm438 = vcmp.eq.s32.totalorder %v437, 1
  %v439 = vsel %vm438, %v431, %v327
  %s440 = sadd.s32 %s206, 2
  %v441 = vld [vmem:[#allocation3 + $0x8] sm:$0xf]
  %443 = vrot.lane.b32.xlu0 %v439, 112
  %v444 = vpop.permute.xlu0 %443
  %v445 = vsel %vm208, %v444, 0
  %447 = vmatprep.subr.mxu0 0.0
  %448 = vmatpush1.msra.mxu0 %v203
  %449 = vmatprep.subr.mxu0 0.0
  %450 = vmatpush1.msra.mxu0 %v204
  %451 = vmatprep.subr.mxu0 0.0
  %452 = vmatpush1.msra.mxu0 0.0
  %453 = vmatprep.subr.mxu0 0.0
  %454 = vmatpush1.msra.mxu0 0.0
  %455 = vmatprep.subr.mxu0 0.0
  %456 = vmatpush1.msra.mxu0 0.0
  %457 = vmatprep.subr.mxu0 0.0
  %458 = vmatpush1.msra.mxu0 0.0
  %459 = vmatprep.subr.mxu0 0.0
  %460 = vmatpush1.msra.mxu0 0.0
  %461 = vmatprep.subr.mxu0 0.0
  %462 = vmatpush1.msra.mxu0 0.0
  %463 = vmatprep.subr.mxu0 0.0
  %464 = vmatpush1.msra.mxu0 0.0
  %465 = vmatprep.subr.mxu0 0.0
  %466 = vmatpush1.msra.mxu0 0.0
  %467 = vmatprep.subr.mxu0 0.0
  %468 = vmatpush1.msra.mxu0 0.0
  %469 = vmatprep.subr.mxu0 0.0
  %470 = vmatpush1.msra.mxu0 0.0
  %471 = vmatprep.subr.mxu0 0.0
  %472 = vmatpush1.msra.mxu0 0.0
  %473 = vmatprep.subr.mxu0 0.0
  %474 = vmatpush1.msra.mxu0 0.0
  %475 = vmatprep.subr.mxu0 0.0
  %476 = vmatpush1.msra.mxu0 0.0
  %477 = vmatprep.subr.mxu0 0.0
  %478 = vmatpush1.msra.mxu0 0.0
  %479 = vmatprep.subr.mxu0 0.0
  %480 = vmatpush1.msra.mxu0 0.0
  %481 = vmatprep.subr.mxu0 0.0
  %482 = vmatpush1.msra.mxu0 0.0
  %483 = vmatprep.subr.mxu0 0.0
  %484 = vmatpush1.msra.mxu0 0.0
  %485 = vmatprep.subr.mxu0 0.0
  %486 = vmatpush1.msra.mxu0 0.0
  %487 = vmatprep.subr.mxu0 0.0
  %488 = vmatpush1.msra.mxu0 0.0
  %489 = vmatprep.subr.mxu0 0.0
  %490 = vmatpush1.msra.mxu0 0.0
  %491 = vmatprep.subr.mxu0 0.0
  %492 = vmatpush1.msra.mxu0 0.0
  %493 = vmatprep.subr.mxu0 0.0
  %494 = vmatpush1.msra.mxu0 0.0
  %495 = vmatprep.subr.mxu0 0.0
  %496 = vmatpush1.msra.mxu0 0.0
  %497 = vmatprep.subr.mxu0 0.0
  %498 = vmatpush1.msra.mxu0 0.0
  %499 = vmatprep.subr.mxu0 0.0
  %500 = vmatpush1.msra.mxu0 0.0
  %501 = vmatprep.subr.mxu0 0.0
  %502 = vmatpush1.msra.mxu0 0.0
  %503 = vmatprep.subr.mxu0 0.0
  %504 = vmatpush1.msra.mxu0 0.0
  %505 = vmatprep.subr.mxu0 0.0
  %506 = vmatpush1.msra.mxu0 0.0
  %507 = vmatprep.subr.mxu0 0.0
  %508 = vmatpush1.msra.mxu0 0.0
  %509 = vmatprep.subr.mxu0 0.0
  %510 = vmatpush1.msra.mxu0 0.0
  %511 = vmatprep.mubr.f32.mxu0 0.0
  %512 = vmatmul.mubr.f32.gmra.mrb[0].mxu0 %v445
  %v513 = vpop.f32.mrb[0].mxu0
  %v514 = vadd.f32 0.0, %v513
  %v515 = vpop.f32.mrb[0].mxu0
  %516 = vdwg.mxu0
  %v517 = vadd.f32 %v441, %v514
  %v518 = vxor.u32 %v517, 2147483648
  %v519 = vmul.f32 %v518, 1.442695
  %v520 = vpow.pop %v519
  %v521 = vadd.f32 %v520, 1.0
  %v522 = vrcp.pop %v521
  %v523 = vmul.f32 1.0, %v522
  %v524 = vadd.f32 %v514, %v295
  %526 = vrot.lane.b32.xlu0 %v524, 96
  %v527 = vpop.permute.xlu0 %526
  %v529 = vmul.f32 %v523, %v527
  %531 = vrot.lane.b32.xlu0 %v529, 32
  %v532 = vpop.permute.xlu0 %531
  %v534 = vadd.f32 %v441, %v532
  %v535 = vtanh.pop %v534
  %v536 = vsub.f32 1.0, %v523
  %538 = vrot.lane.b32.xlu0 %v535, 112
  %v539 = vpop.permute.xlu0 %538
  %v541 = vmul.f32 %v536, %v539
  %v542 = vmul.f32 %v523, %v439
  %v543 = vadd.f32 %v541, %v542
  %v544 = vstv %s440
  %vm545 = vcmp.gt.s32.totalorder %v201, %v544
  %v546 = vsel %vm545, 1, 0
  %547 = vset.pattern.permute.xlu0 0
  %548 = vperm.xlu0 %547, %v546
  %v549 = vpop.permute.xlu0 %548
  %vm550 = vcmp.eq.s32.totalorder %v549, 1
  %v551 = vsel %vm550, %v543, %v439
  %s552 = sadd.s32 %s206, 3
  %v553 = vld [vmem:[#allocation3 + $0xc] sm:$0xf]
  %555 = vrot.lane.b32.xlu0 %v551, 112
  %v556 = vpop.permute.xlu0 %555
  %v557 = vsel %vm208, %v556, 0
  %559 = vmatprep.subr.mxu0 0.0
  %560 = vmatpush1.msra.mxu0 %v203
  %561 = vmatprep.subr.mxu0 0.0
  %562 = vmatpush1.msra.mxu0 %v204
  %563 = vmatprep.subr.mxu0 0.0
  %564 = vmatpush1.msra.mxu0 0.0
  %565 = vmatprep.subr.mxu0 0.0
  %566 = vmatpush1.msra.mxu0 0.0
  %567 = vmatprep.subr.mxu0 0.0
  %568 = vmatpush1.msra.mxu0 0.0
  %569 = vmatprep.subr.mxu0 0.0
  %570 = vmatpush1.msra.mxu0 0.0
  %571 = vmatprep.subr.mxu0 0.0
  %572 = vmatpush1.msra.mxu0 0.0
  %573 = vmatprep.subr.mxu0 0.0
  %574 = vmatpush1.msra.mxu0 0.0
  %575 = vmatprep.subr.mxu0 0.0
  %576 = vmatpush1.msra.mxu0 0.0
  %577 = vmatprep.subr.mxu0 0.0
  %578 = vmatpush1.msra.mxu0 0.0
  %579 = vmatprep.subr.mxu0 0.0
  %580 = vmatpush1.msra.mxu0 0.0
  %581 = vmatprep.subr.mxu0 0.0
  %582 = vmatpush1.msra.mxu0 0.0
  %583 = vmatprep.subr.mxu0 0.0
  %584 = vmatpush1.msra.mxu0 0.0
  %585 = vmatprep.subr.mxu0 0.0
  %586 = vmatpush1.msra.mxu0 0.0
  %587 = vmatprep.subr.mxu0 0.0
  %588 = vmatpush1.msra.mxu0 0.0
  %589 = vmatprep.subr.mxu0 0.0
  %590 = vmatpush1.msra.mxu0 0.0
  %591 = vmatprep.subr.mxu0 0.0
  %592 = vmatpush1.msra.mxu0 0.0
  %593 = vmatprep.subr.mxu0 0.0
  %594 = vmatpush1.msra.mxu0 0.0
  %595 = vmatprep.subr.mxu0 0.0
  %596 = vmatpush1.msra.mxu0 0.0
  %597 = vmatprep.subr.mxu0 0.0
  %598 = vmatpush1.msra.mxu0 0.0
  %599 = vmatprep.subr.mxu0 0.0
  %600 = vmatpush1.msra.mxu0 0.0
  %601 = vmatprep.subr.mxu0 0.0
  %602 = vmatpush1.msra.mxu0 0.0
  %603 = vmatprep.subr.mxu0 0.0
  %604 = vmatpush1.msra.mxu0 0.0
  %605 = vmatprep.subr.mxu0 0.0
  %606 = vmatpush1.msra.mxu0 0.0
  %607 = vmatprep.subr.mxu0 0.0
  %608 = vmatpush1.msra.mxu0 0.0
  %609 = vmatprep.subr.mxu0 0.0
  %610 = vmatpush1.msra.mxu0 0.0
  %611 = vmatprep.subr.mxu0 0.0
  %612 = vmatpush1.msra.mxu0 0.0
  %613 = vmatprep.subr.mxu0 0.0
  %614 = vmatpush1.msra.mxu0 0.0
  %615 = vmatprep.subr.mxu0 0.0
  %616 = vmatpush1.msra.mxu0 0.0
  %617 = vmatprep.subr.mxu0 0.0
  %618 = vmatpush1.msra.mxu0 0.0
  %619 = vmatprep.subr.mxu0 0.0
  %620 = vmatpush1.msra.mxu0 0.0
  %621 = vmatprep.subr.mxu0 0.0
  %622 = vmatpush1.msra.mxu0 0.0
  %623 = vmatprep.mubr.f32.mxu0 0.0
  %624 = vmatmul.mubr.f32.gmra.mrb[0].mxu0 %v557
  %v625 = vpop.f32.mrb[0].mxu0
  %v626 = vadd.f32 0.0, %v625
  %v627 = vpop.f32.mrb[0].mxu0
  %628 = vdwg.mxu0
  %v629 = vadd.f32 %v553, %v626
  %v630 = vxor.u32 %v629, 2147483648
  %v631 = vmul.f32 %v630, 1.442695
  %v632 = vpow.pop %v631
  %v633 = vadd.f32 %v632, 1.0
  %v634 = vrcp.pop %v633
  %v635 = vmul.f32 1.0, %v634
  %v636 = vadd.f32 %v626, %v295
  %638 = vrot.lane.b32.xlu0 %v636, 96
  %v639 = vpop.permute.xlu0 %638
  %v641 = vmul.f32 %v635, %v639
  %643 = vrot.lane.b32.xlu0 %v641, 32
  %v644 = vpop.permute.xlu0 %643
  %v646 = vadd.f32 %v553, %v644
  %v647 = vtanh.pop %v646
  %v648 = vsub.f32 1.0, %v635
  %650 = vrot.lane.b32.xlu0 %v647, 112
  %v651 = vpop.permute.xlu0 %650
  %v653 = vmul.f32 %v648, %v651
  %v654 = vmul.f32 %v635, %v551
  %v655 = vadd.f32 %v653, %v654
  %v656 = vstv %s552
  %vm657 = vcmp.gt.s32.totalorder %v201, %v656
  %v658 = vsel %vm657, 1, 0
  %659 = vset.pattern.permute.xlu0 0
  %660 = vperm.xlu0 %659, %v658
  %v661 = vpop.permute.xlu0 %660
  %vm662 = vcmp.eq.s32.totalorder %v661, 1
  %v663 = vsel %vm662, %v655, %v551
  %s664 = sadd.s32 %s206, 4
  %v665 = vld [vmem:[#allocation3 + $0x10] sm:$0xf]
  %667 = vrot.lane.b32.xlu0 %v663, 112
  %v668 = vpop.permute.xlu0 %667
  %v669 = vsel %vm208, %v668, 0
  %671 = vmatprep.subr.mxu0 0.0
  %672 = vmatpush1.msra.mxu0 %v203
  %673 = vmatprep.subr.mxu0 0.0
  %674 = vmatpush1.msra.mxu0 %v204
  %675 = vmatprep.subr.mxu0 0.0
  %676 = vmatpush1.msra.mxu0 0.0
  %677 = vmatprep.subr.mxu0 0.0
  %678 = vmatpush1.msra.mxu0 0.0
  %679 = vmatprep.subr.mxu0 0.0
  %680 = vmatpush1.msra.mxu0 0.0
  %681 = vmatprep.subr.mxu0 0.0
  %682 = vmatpush1.msra.mxu0 0.0
  %683 = vmatprep.subr.mxu0 0.0
  %684 = vmatpush1.msra.mxu0 0.0
  %685 = vmatprep.subr.mxu0 0.0
  %686 = vmatpush1.msra.mxu0 0.0
  %687 = vmatprep.subr.mxu0 0.0
  %688 = vmatpush1.msra.mxu0 0.0
  %689 = vmatprep.subr.mxu0 0.0
  %690 = vmatpush1.msra.mxu0 0.0
  %691 = vmatprep.subr.mxu0 0.0
  %692 = vmatpush1.msra.mxu0 0.0
  %693 = vmatprep.subr.mxu0 0.0
  %694 = vmatpush1.msra.mxu0 0.0
  %695 = vmatprep.subr.mxu0 0.0
  %696 = vmatpush1.msra.mxu0 0.0
  %697 = vmatprep.subr.mxu0 0.0
  %698 = vmatpush1.msra.mxu0 0.0
  %699 = vmatprep.subr.mxu0 0.0
  %700 = vmatpush1.msra.mxu0 0.0
  %701 = vmatprep.subr.mxu0 0.0
  %702 = vmatpush1.msra.mxu0 0.0
  %703 = vmatprep.subr.mxu0 0.0
  %704 = vmatpush1.msra.mxu0 0.0
  %705 = vmatprep.subr.mxu0 0.0
  %706 = vmatpush1.msra.mxu0 0.0
  %707 = vmatprep.subr.mxu0 0.0
  %708 = vmatpush1.msra.mxu0 0.0
  %709 = vmatprep.subr.mxu0 0.0
  %710 = vmatpush1.msra.mxu0 0.0
  %711 = vmatprep.subr.mxu0 0.0
  %712 = vmatpush1.msra.mxu0 0.0
  %713 = vmatprep.subr.mxu0 0.0
  %714 = vmatpush1.msra.mxu0 0.0
  %715 = vmatprep.subr.mxu0 0.0
  %716 = vmatpush1.msra.mxu0 0.0
  %717 = vmatprep.subr.mxu0 0.0
  %718 = vmatpush1.msra.mxu0 0.0
  %719 = vmatprep.subr.mxu0 0.0
  %720 = vmatpush1.msra.mxu0 0.0
  %721 = vmatprep.subr.mxu0 0.0
  %722 = vmatpush1.msra.mxu0 0.0
  %723 = vmatprep.subr.mxu0 0.0
  %724 = vmatpush1.msra.mxu0 0.0
  %725 = vmatprep.subr.mxu0 0.0
  %726 = vmatpush1.msra.mxu0 0.0
  %727 = vmatprep.subr.mxu0 0.0
  %728 = vmatpush1.msra.mxu0 0.0
  %729 = vmatprep.subr.mxu0 0.0
  %730 = vmatpush1.msra.mxu0 0.0
  %731 = vmatprep.subr.mxu0 0.0
  %732 = vmatpush1.msra.mxu0 0.0
  %733 = vmatprep.subr.mxu0 0.0
  %734 = vmatpush1.msra.mxu0 0.0
  %735 = vmatprep.mubr.f32.mxu0 0.0
  %736 = vmatmul.mubr.f32.gmra.mrb[0].mxu0 %v669
  %v737 = vpop.f32.mrb[0].mxu0
  %v738 = vadd.f32 0.0, %v737
  %v739 = vpop.f32.mrb[0].mxu0
  %740 = vdwg.mxu0
  %v741 = vadd.f32 %v665, %v738
  %v742 = vxor.u32 %v741, 2147483648
  %v743 = vmul.f32 %v742, 1.442695
  %v744 = vpow.pop %v743
  %v745 = vadd.f32 %v744, 1.0
  %v746 = vrcp.pop %v745
  %v747 = vmul.f32 1.0, %v746
  %v748 = vadd.f32 %v738, %v295
  %750 = vrot.lane.b32.xlu0 %v748, 96
  %v751 = vpop.permute.xlu0 %750
  %v753 = vmul.f32 %v747, %v751
  %755 = vrot.lane.b32.xlu0 %v753, 32
  %v756 = vpop.permute.xlu0 %755
  %v758 = vadd.f32 %v665, %v756
  %v759 = vtanh.pop %v758
  %v760 = vsub.f32 1.0, %v747
  %762 = vrot.lane.b32.xlu0 %v759, 112
  %v763 = vpop.permute.xlu0 %762
  %v765 = vmul.f32 %v760, %v763
  %v766 = vmul.f32 %v747, %v663
  %v767 = vadd.f32 %v765, %v766
  %v768 = vstv %s664
  %vm769 = vcmp.gt.s32.totalorder %v201, %v768
  %v770 = vsel %vm769, 1, 0
  %771 = vset.pattern.permute.xlu0 0
  %772 = vperm.xlu0 %771, %v770
  %v773 = vpop.permute.xlu0 %772
  %vm774 = vcmp.eq.s32.totalorder %v773, 1
  %v775 = vsel %vm774, %v767, %v663
  %s776 = sadd.s32 %s206, 5
  %v777 = vld [vmem:[#allocation3 + $0x14] sm:$0xf]
  %779 = vrot.lane.b32.xlu0 %v775, 112
  %v780 = vpop.permute.xlu0 %779
  %v781 = vsel %vm208, %v780, 0
  %783 = vmatprep.subr.mxu0 0.0
  %784 = vmatpush1.msra.mxu0 %v203
  %785 = vmatprep.subr.mxu0 0.0
  %786 = vmatpush1.msra.mxu0 %v204
  %787 = vmatprep.subr.mxu0 0.0
  %788 = vmatpush1.msra.mxu0 0.0
  %789 = vmatprep.subr.mxu0 0.0
  %790 = vmatpush1.msra.mxu0 0.0
  %791 = vmatprep.subr.mxu0 0.0
  %792 = vmatpush1.msra.mxu0 0.0
  %793 = vmatprep.subr.mxu0 0.0
  %794 = vmatpush1.msra.mxu0 0.0
  %795 = vmatprep.subr.mxu0 0.0
  %796 = vmatpush1.msra.mxu0 0.0
  %797 = vmatprep.subr.mxu0 0.0
  %798 = vmatpush1.msra.mxu0 0.0
  %799 = vmatprep.subr.mxu0 0.0
  %800 = vmatpush1.msra.mxu0 0.0
  %801 = vmatprep.subr.mxu0 0.0
  %802 = vmatpush1.msra.mxu0 0.0
  %803 = vmatprep.subr.mxu0 0.0
  %804 = vmatpush1.msra.mxu0 0.0
  %805 = vmatprep.subr.mxu0 0.0
  %806 = vmatpush1.msra.mxu0 0.0
  %807 = vmatprep.subr.mxu0 0.0
  %808 = vmatpush1.msra.mxu0 0.0
  %809 = vmatprep.subr.mxu0 0.0
  %810 = vmatpush1.msra.mxu0 0.0
  %811 = vmatprep.subr.mxu0 0.0
  %812 = vmatpush1.msra.mxu0 0.0
  %813 = vmatprep.subr.mxu0 0.0
  %814 = vmatpush1.msra.mxu0 0.0
  %815 = vmatprep.subr.mxu0 0.0
  %816 = vmatpush1.msra.mxu0 0.0
  %817 = vmatprep.subr.mxu0 0.0
  %818 = vmatpush1.msra.mxu0 0.0
  %819 = vmatprep.subr.mxu0 0.0
  %820 = vmatpush1.msra.mxu0 0.0
  %821 = vmatprep.subr.mxu0 0.0
  %822 = vmatpush1.msra.mxu0 0.0
  %823 = vmatprep.subr.mxu0 0.0
  %824 = vmatpush1.msra.mxu0 0.0
  %825 = vmatprep.subr.mxu0 0.0
  %826 = vmatpush1.msra.mxu0 0.0
  %827 = vmatprep.subr.mxu0 0.0
  %828 = vmatpush1.msra.mxu0 0.0
  %829 = vmatprep.subr.mxu0 0.0
  %830 = vmatpush1.msra.mxu0 0.0
  %831 = vmatprep.subr.mxu0 0.0
  %832 = vmatpush1.msra.mxu0 0.0
  %833 = vmatprep.subr.mxu0 0.0
  %834 = vmatpush1.msra.mxu0 0.0
  %835 = vmatprep.subr.mxu0 0.0
  %836 = vmatpush1.msra.mxu0 0.0
  %837 = vmatprep.subr.mxu0 0.0
  %838 = vmatpush1.msra.mxu0 0.0
  %839 = vmatprep.subr.mxu0 0.0
  %840 = vmatpush1.msra.mxu0 0.0
  %841 = vmatprep.subr.mxu0 0.0
  %842 = vmatpush1.msra.mxu0 0.0
  %843 = vmatprep.subr.mxu0 0.0
  %844 = vmatpush1.msra.mxu0 0.0
  %845 = vmatprep.subr.mxu0 0.0
  %846 = vmatpush1.msra.mxu0 0.0
  %847 = vmatprep.mubr.f32.mxu0 0.0
  %848 = vmatmul.mubr.f32.gmra.mrb[0].mxu0 %v781
  %v849 = vpop.f32.mrb[0].mxu0
  %v850 = vadd.f32 0.0, %v849
  %v851 = vpop.f32.mrb[0].mxu0
  %852 = vdwg.mxu0
  %v853 = vadd.f32 %v777, %v850
  %v854 = vxor.u32 %v853, 2147483648
  %v855 = vmul.f32 %v854, 1.442695
  %v856 = vpow.pop %v855
  %v857 = vadd.f32 %v856, 1.0
  %v858 = vrcp.pop %v857
  %v859 = vmul.f32 1.0, %v858
  %v860 = vadd.f32 %v850, %v295
  %862 = vrot.lane.b32.xlu0 %v860, 96
  %v863 = vpop.permute.xlu0 %862
  %v865 = vmul.f32 %v859, %v863
  %867 = vrot.lane.b32.xlu0 %v865, 32
  %v868 = vpop.permute.xlu0 %867
  %v870 = vadd.f32 %v777, %v868
  %v871 = vtanh.pop %v870
  %v872 = vsub.f32 1.0, %v859
  %874 = vrot.lane.b32.xlu0 %v871, 112
  %v875 = vpop.permute.xlu0 %874
  %v877 = vmul.f32 %v872, %v875
  %v878 = vmul.f32 %v859, %v775
  %v879 = vadd.f32 %v877, %v878
  %v880 = vstv %s776
  %vm881 = vcmp.gt.s32.totalorder %v201, %v880
  %v882 = vsel %vm881, 1, 0
  %883 = vset.pattern.permute.xlu0 0
  %884 = vperm.xlu0 %883, %v882
  %v885 = vpop.permute.xlu0 %884
  %vm886 = vcmp.eq.s32.totalorder %v885, 1
  %v887 = vsel %vm886, %v879, %v775
  %s888 = sadd.s32 %s206, 6
  %v889 = vld [vmem:[#allocation3 + $0x18] sm:$0xf]
  %891 = vrot.lane.b32.xlu0 %v887, 112
  %v892 = vpop.permute.xlu0 %891
  %v893 = vsel %vm208, %v892, 0
  %895 = vmatprep.subr.mxu0 0.0
  %896 = vmatpush1.msra.mxu0 %v203
  %897 = vmatprep.subr.mxu0 0.0
  %898 = vmatpush1.msra.mxu0 %v204
  %899 = vmatprep.subr.mxu0 0.0
  %900 = vmatpush1.msra.mxu0 0.0
  %901 = vmatprep.subr.mxu0 0.0
  %902 = vmatpush1.msra.mxu0 0.0
  %903 = vmatprep.subr.mxu0 0.0
  %904 = vmatpush1.msra.mxu0 0.0
  %905 = vmatprep.subr.mxu0 0.0
  %906 = vmatpush1.msra.mxu0 0.0
  %907 = vmatprep.subr.mxu0 0.0
  %908 = vmatpush1.msra.mxu0 0.0
  %909 = vmatprep.subr.mxu0 0.0
  %910 = vmatpush1.msra.mxu0 0.0
  %911 = vmatprep.subr.mxu0 0.0
  %912 = vmatpush1.msra.mxu0 0.0
  %913 = vmatprep.subr.mxu0 0.0
  %914 = vmatpush1.msra.mxu0 0.0
  %915 = vmatprep.subr.mxu0 0.0
  %916 = vmatpush1.msra.mxu0 0.0
  %917 = vmatprep.subr.mxu0 0.0
  %918 = vmatpush1.msra.mxu0 0.0
  %919 = vmatprep.subr.mxu0 0.0
  %920 = vmatpush1.msra.mxu0 0.0
  %921 = vmatprep.subr.mxu0 0.0
  %922 = vmatpush1.msra.mxu0 0.0
  %923 = vmatprep.subr.mxu0 0.0
  %924 = vmatpush1.msra.mxu0 0.0
  %925 = vmatprep.subr.mxu0 0.0
  %926 = vmatpush1.msra.mxu0 0.0
  %927 = vmatprep.subr.mxu0 0.0
  %928 = vmatpush1.msra.mxu0 0.0
  %929 = vmatprep.subr.mxu0 0.0
  %930 = vmatpush1.msra.mxu0 0.0
  %931 = vmatprep.subr.mxu0 0.0
  %932 = vmatpush1.msra.mxu0 0.0
  %933 = vmatprep.subr.mxu0 0.0
  %934 = vmatpush1.msra.mxu0 0.0
  %935 = vmatprep.subr.mxu0 0.0
  %936 = vmatpush1.msra.mxu0 0.0
  %937 = vmatprep.subr.mxu0 0.0
  %938 = vmatpush1.msra.mxu0 0.0
  %939 = vmatprep.subr.mxu0 0.0
  %940 = vmatpush1.msra.mxu0 0.0
  %941 = vmatprep.subr.mxu0 0.0
  %942 = vmatpush1.msra.mxu0 0.0
  %943 = vmatprep.subr.mxu0 0.0
  %944 = vmatpush1.msra.mxu0 0.0
  %945 = vmatprep.subr.mxu0 0.0
  %946 = vmatpush1.msra.mxu0 0.0
  %947 = vmatprep.subr.mxu0 0.0
  %948 = vmatpush1.msra.mxu0 0.0
  %949 = vmatprep.subr.mxu0 0.0
  %950 = vmatpush1.msra.mxu0 0.0
  %951 = vmatprep.subr.mxu0 0.0
  %952 = vmatpush1.msra.mxu0 0.0
  %953 = vmatprep.subr.mxu0 0.0
  %954 = vmatpush1.msra.mxu0 0.0
  %955 = vmatprep.subr.mxu0 0.0
  %956 = vmatpush1.msra.mxu0 0.0
  %957 = vmatprep.subr.mxu0 0.0
  %958 = vmatpush1.msra.mxu0 0.0
  %959 = vmatprep.mubr.f32.mxu0 0.0
  %960 = vmatmul.mubr.f32.gmra.mrb[0].mxu0 %v893
  %v961 = vpop.f32.mrb[0].mxu0
  %v962 = vadd.f32 0.0, %v961
  %v963 = vpop.f32.mrb[0].mxu0
  %964 = vdwg.mxu0
  %v965 = vadd.f32 %v889, %v962
  %v966 = vxor.u32 %v965, 2147483648
  %v967 = vmul.f32 %v966, 1.442695
  %v968 = vpow.pop %v967
  %v969 = vadd.f32 %v968, 1.0
  %v970 = vrcp.pop %v969
  %v971 = vmul.f32 1.0, %v970
  %v972 = vadd.f32 %v962, %v295
  %974 = vrot.lane.b32.xlu0 %v972, 96
  %v975 = vpop.permute.xlu0 %974
  %v977 = vmul.f32 %v971, %v975
  %979 = vrot.lane.b32.xlu0 %v977, 32
  %v980 = vpop.permute.xlu0 %979
  %v982 = vadd.f32 %v889, %v980
  %v983 = vtanh.pop %v982
  %v984 = vsub.f32 1.0, %v971
  %986 = vrot.lane.b32.xlu0 %v983, 112
  %v987 = vpop.permute.xlu0 %986
  %v989 = vmul.f32 %v984, %v987
  %v990 = vmul.f32 %v971, %v887
  %v991 = vadd.f32 %v989, %v990
  %v992 = vstv %s888
  %vm993 = vcmp.gt.s32.totalorder %v201, %v992
  %v994 = vsel %vm993, 1, 0
  %995 = vset.pattern.permute.xlu0 0
  %996 = vperm.xlu0 %995, %v994
  %v997 = vpop.permute.xlu0 %996
  %vm998 = vcmp.eq.s32.totalorder %v997, 1
  %v999 = vsel %vm998, %v991, %v887
  %s1000 = sadd.s32 %s206, 7
  %v1001 = vld [vmem:[#allocation3 + $0x1c] sm:$0xf]
  %1003 = vrot.lane.b32.xlu0 %v999, 112
  %v1004 = vpop.permute.xlu0 %1003
  %v1005 = vsel %vm208, %v1004, 0
  %1007 = vmatprep.subr.mxu0 0.0
  %1008 = vmatpush1.msra.mxu0 %v203
  %1009 = vmatprep.subr.mxu0 0.0
  %1010 = vmatpush1.msra.mxu0 %v204
  %1011 = vmatprep.subr.mxu0 0.0
  %1012 = vmatpush1.msra.mxu0 0.0
  %1013 = vmatprep.subr.mxu0 0.0
  %1014 = vmatpush1.msra.mxu0 0.0
  %1015 = vmatprep.subr.mxu0 0.0
  %1016 = vmatpush1.msra.mxu0 0.0
  %1017 = vmatprep.subr.mxu0 0.0
  %1018 = vmatpush1.msra.mxu0 0.0
  %1019 = vmatprep.subr.mxu0 0.0
  %1020 = vmatpush1.msra.mxu0 0.0
  %1021 = vmatprep.subr.mxu0 0.0
  %1022 = vmatpush1.msra.mxu0 0.0
  %1023 = vmatprep.subr.mxu0 0.0
  %1024 = vmatpush1.msra.mxu0 0.0
  %1025 = vmatprep.subr.mxu0 0.0
  %1026 = vmatpush1.msra.mxu0 0.0
  %1027 = vmatprep.subr.mxu0 0.0
  %1028 = vmatpush1.msra.mxu0 0.0
  %1029 = vmatprep.subr.mxu0 0.0
  %1030 = vmatpush1.msra.mxu0 0.0
  %1031 = vmatprep.subr.mxu0 0.0
  %1032 = vmatpush1.msra.mxu0 0.0
  %1033 = vmatprep.subr.mxu0 0.0
  %1034 = vmatpush1.msra.mxu0 0.0
  %1035 = vmatprep.subr.mxu0 0.0
  %1036 = vmatpush1.msra.mxu0 0.0
  %1037 = vmatprep.subr.mxu0 0.0
  %1038 = vmatpush1.msra.mxu0 0.0
  %1039 = vmatprep.subr.mxu0 0.0
  %1040 = vmatpush1.msra.mxu0 0.0
  %1041 = vmatprep.subr.mxu0 0.0
  %1042 = vmatpush1.msra.mxu0 0.0
  %1043 = vmatprep.subr.mxu0 0.0
  %1044 = vmatpush1.msra.mxu0 0.0
  %1045 = vmatprep.subr.mxu0 0.0
  %1046 = vmatpush1.msra.mxu0 0.0
  %1047 = vmatprep.subr.mxu0 0.0
  %1048 = vmatpush1.msra.mxu0 0.0
  %1049 = vmatprep.subr.mxu0 0.0
  %1050 = vmatpush1.msra.mxu0 0.0
  %1051 = vmatprep.subr.mxu0 0.0
  %1052 = vmatpush1.msra.mxu0 0.0
  %1053 = vmatprep.subr.mxu0 0.0
  %1054 = vmatpush1.msra.mxu0 0.0
  %1055 = vmatprep.subr.mxu0 0.0
  %1056 = vmatpush1.msra.mxu0 0.0
  %1057 = vmatprep.subr.mxu0 0.0
  %1058 = vmatpush1.msra.mxu0 0.0
  %1059 = vmatprep.subr.mxu0 0.0
  %1060 = vmatpush1.msra.mxu0 0.0
  %1061 = vmatprep.subr.mxu0 0.0
  %1062 = vmatpush1.msra.mxu0 0.0
  %1063 = vmatprep.subr.mxu0 0.0
  %1064 = vmatpush1.msra.mxu0 0.0
  %1065 = vmatprep.subr.mxu0 0.0
  %1066 = vmatpush1.msra.mxu0 0.0
  %1067 = vmatprep.subr.mxu0 0.0
  %1068 = vmatpush1.msra.mxu0 0.0
  %1069 = vmatprep.subr.mxu0 0.0
  %1070 = vmatpush1.msra.mxu0 0.0
  %1071 = vmatprep.mubr.f32.mxu0 0.0
  %1072 = vmatmul.mubr.f32.gmra.mrb[0].mxu0 %v1005
  %v1073 = vpop.f32.mrb[0].mxu0
  %v1074 = vadd.f32 0.0, %v1073
  %v1075 = vpop.f32.mrb[0].mxu0
  %1076 = vdwg.mxu0
  %v1077 = vadd.f32 %v1001, %v1074
  %v1078 = vxor.u32 %v1077, 2147483648
  %v1079 = vmul.f32 %v1078, 1.442695
  %v1080 = vpow.pop %v1079
  %v1081 = vadd.f32 %v1080, 1.0
  %v1082 = vrcp.pop %v1081
  %v1083 = vmul.f32 1.0, %v1082
  %v1084 = vadd.f32 %v1074, %v295
  %1086 = vrot.lane.b32.xlu0 %v1084, 96
  %v1087 = vpop.permute.xlu0 %1086
  %v1089 = vmul.f32 %v1083, %v1087
  %1091 = vrot.lane.b32.xlu0 %v1089, 32
  %v1092 = vpop.permute.xlu0 %1091
  %v1094 = vadd.f32 %v1001, %v1092
  %v1095 = vtanh.pop %v1094
  %v1096 = vsub.f32 1.0, %v1083
  %1098 = vrot.lane.b32.xlu0 %v1095, 112
  %v1099 = vpop.permute.xlu0 %1098
  %v1101 = vmul.f32 %v1096, %v1099
  %v1102 = vmul.f32 %v1083, %v999
  %v1103 = vadd.f32 %v1101, %v1102
  %v1104 = vstv %s1000
  %vm1105 = vcmp.gt.s32.totalorder %v201, %v1104
  %v1106 = vsel %vm1105, 1, 0
  %1107 = vset.pattern.permute.xlu0 0
  %1108 = vperm.xlu0 %1107, %v1106
  %v1109 = vpop.permute.xlu0 %1108
  %vm1110 = vcmp.eq.s32.totalorder %v1109, 1
  %v1111 = vsel %vm1110, %v1103, %v999
  %s1112 = sadd.s32 %s206, 8
  %v1113 = vld [vmem:[#allocation3 + $0x20] sm:$0xf]
  %1115 = vrot.lane.b32.xlu0 %v1111, 112
  %v1116 = vpop.permute.xlu0 %1115
  %v1117 = vsel %vm208, %v1116, 0
  %1119 = vmatprep.subr.mxu0 0.0
  %1120 = vmatpush1.msra.mxu0 %v203
  %1121 = vmatprep.subr.mxu0 0.0
  %1122 = vmatpush1.msra.mxu0 %v204
  %1123 = vmatprep.subr.mxu0 0.0
  %1124 = vmatpush1.msra.mxu0 0.0
  %1125 = vmatprep.subr.mxu0 0.0
  %1126 = vmatpush1.msra.mxu0 0.0
  %1127 = vmatprep.subr.mxu0 0.0
  %1128 = vmatpush1.msra.mxu0 0.0
  %1129 = vmatprep.subr.mxu0 0.0
  %1130 = vmatpush1.msra.mxu0 0.0
  %1131 = vmatprep.subr.mxu0 0.0
  %1132 = vmatpush1.msra.mxu0 0.0
  %1133 = vmatprep.subr.mxu0 0.0
  %1134 = vmatpush1.msra.mxu0 0.0
  %1135 = vmatprep.subr.mxu0 0.0
  %1136 = vmatpush1.msra.mxu0 0.0
  %1137 = vmatprep.subr.mxu0 0.0
  %1138 = vmatpush1.msra.mxu0 0.0
  %1139 = vmatprep.subr.mxu0 0.0
  %1140 = vmatpush1.msra.mxu0 0.0
  %1141 = vmatprep.subr.mxu0 0.0
  %1142 = vmatpush1.msra.mxu0 0.0
  %1143 = vmatprep.subr.mxu0 0.0
  %1144 = vmatpush1.msra.mxu0 0.0
  %1145 = vmatprep.subr.mxu0 0.0
  %1146 = vmatpush1.msra.mxu0 0.0
  %1147 = vmatprep.subr.mxu0 0.0
  %1148 = vmatpush1.msra.mxu0 0.0
  %1149 = vmatprep.subr.mxu0 0.0
  %1150 = vmatpush1.msra.mxu0 0.0
  %1151 = vmatprep.subr.mxu0 0.0
  %1152 = vmatpush1.msra.mxu0 0.0
  %1153 = vmatprep.subr.mxu0 0.0
  %1154 = vmatpush1.msra.mxu0 0.0
  %1155 = vmatprep.subr.mxu0 0.0
  %1156 = vmatpush1.msra.mxu0 0.0
  %1157 = vmatprep.subr.mxu0 0.0
  %1158 = vmatpush1.msra.mxu0 0.0
  %1159 = vmatprep.subr.mxu0 0.0
  %1160 = vmatpush1.msra.mxu0 0.0
  %1161 = vmatprep.subr.mxu0 0.0
  %1162 = vmatpush1.msra.mxu0 0.0
  %1163 = vmatprep.subr.mxu0 0.0
  %1164 = vmatpush1.msra.mxu0 0.0
  %1165 = vmatprep.subr.mxu0 0.0
  %1166 = vmatpush1.msra.mxu0 0.0
  %1167 = vmatprep.subr.mxu0 0.0
  %1168 = vmatpush1.msra.mxu0 0.0
  %1169 = vmatprep.subr.mxu0 0.0
  %1170 = vmatpush1.msra.mxu0 0.0
  %1171 = vmatprep.subr.mxu0 0.0
  %1172 = vmatpush1.msra.mxu0 0.0
  %1173 = vmatprep.subr.mxu0 0.0
  %1174 = vmatpush1.msra.mxu0 0.0
  %1175 = vmatprep.subr.mxu0 0.0
  %1176 = vmatpush1.msra.mxu0 0.0
  %1177 = vmatprep.subr.mxu0 0.0
  %1178 = vmatpush1.msra.mxu0 0.0
  %1179 = vmatprep.subr.mxu0 0.0
  %1180 = vmatpush1.msra.mxu0 0.0
  %1181 = vmatprep.subr.mxu0 0.0
  %1182 = vmatpush1.msra.mxu0 0.0
  %1183 = vmatprep.mubr.f32.mxu0 0.0
  %1184 = vmatmul.mubr.f32.gmra.mrb[0].mxu0 %v1117
  %v1185 = vpop.f32.mrb[0].mxu0
  %v1186 = vadd.f32 0.0, %v1185
  %v1187 = vpop.f32.mrb[0].mxu0
  %1188 = vdwg.mxu0
  %v1189 = vadd.f32 %v1113, %v1186
  %v1190 = vxor.u32 %v1189, 2147483648
  %v1191 = vmul.f32 %v1190, 1.442695
  %v1192 = vpow.pop %v1191
  %v1193 = vadd.f32 %v1192, 1.0
  %v1194 = vrcp.pop %v1193
  %v1195 = vmul.f32 1.0, %v1194
  %v1196 = vadd.f32 %v1186, %v295
  %1198 = vrot.lane.b32.xlu0 %v1196, 96
  %v1199 = vpop.permute.xlu0 %1198
  %v1201 = vmul.f32 %v1195, %v1199
  %1203 = vrot.lane.b32.xlu0 %v1201, 32
  %v1204 = vpop.permute.xlu0 %1203
  %v1206 = vadd.f32 %v1113, %v1204
  %v1207 = vtanh.pop %v1206
  %v1208 = vsub.f32 1.0, %v1195
  %1210 = vrot.lane.b32.xlu0 %v1207, 112
  %v1211 = vpop.permute.xlu0 %1210
  %v1213 = vmul.f32 %v1208, %v1211
  %v1214 = vmul.f32 %v1195, %v1111
  %v1215 = vadd.f32 %v1213, %v1214
  %v1216 = vstv %s1112
  %vm1217 = vcmp.gt.s32.totalorder %v201, %v1216
  %v1218 = vsel %vm1217, 1, 0
  %1219 = vset.pattern.permute.xlu0 0
  %1220 = vperm.xlu0 %1219, %v1218
  %v1221 = vpop.permute.xlu0 %1220
  %vm1222 = vcmp.eq.s32.totalorder %v1221, 1
  %v1223 = vsel %vm1222, %v1215, %v1111
  %s1224 = sadd.s32 %s206, 9
  %v1225 = vld [vmem:[#allocation3 + $0x24] sm:$0xf]
  %1227 = vrot.lane.b32.xlu0 %v1223, 112
  %v1228 = vpop.permute.xlu0 %1227
  %v1229 = vsel %vm208, %v1228, 0
  %1231 = vmatprep.subr.mxu0 0.0
  %1232 = vmatpush1.msra.mxu0 %v203
  %1233 = vmatprep.subr.mxu0 0.0
  %1234 = vmatpush1.msra.mxu0 %v204
  %1235 = vmatprep.subr.mxu0 0.0
  %1236 = vmatpush1.msra.mxu0 0.0
  %1237 = vmatprep.subr.mxu0 0.0
  %1238 = vmatpush1.msra.mxu0 0.0
  %1239 = vmatprep.subr.mxu0 0.0
  %1240 = vmatpush1.msra.mxu0 0.0
  %1241 = vmatprep.subr.mxu0 0.0
  %1242 = vmatpush1.msra.mxu0 0.0
  %1243 = vmatprep.subr.mxu0 0.0
  %1244 = vmatpush1.msra.mxu0 0.0
  %1245 = vmatprep.subr.mxu0 0.0
  %1246 = vmatpush1.msra.mxu0 0.0
  %1247 = vmatprep.subr.mxu0 0.0
  %1248 = vmatpush1.msra.mxu0 0.0
  %1249 = vmatprep.subr.mxu0 0.0
  %1250 = vmatpush1.msra.mxu0 0.0
  %1251 = vmatprep.subr.mxu0 0.0
  %1252 = vmatpush1.msra.mxu0 0.0
  %1253 = vmatprep.subr.mxu0 0.0
  %1254 = vmatpush1.msra.mxu0 0.0
  %1255 = vmatprep.subr.mxu0 0.0
  %1256 = vmatpush1.msra.mxu0 0.0
  %1257 = vmatprep.subr.mxu0 0.0
  %1258 = vmatpush1.msra.mxu0 0.0
  %1259 = vmatprep.subr.mxu0 0.0
  %1260 = vmatpush1.msra.mxu0 0.0
  %1261 = vmatprep.subr.mxu0 0.0
  %1262 = vmatpush1.msra.mxu0 0.0
  %1263 = vmatprep.subr.mxu0 0.0
  %1264 = vmatpush1.msra.mxu0 0.0
  %1265 = vmatprep.subr.mxu0 0.0
  %1266 = vmatpush1.msra.mxu0 0.0
  %1267 = vmatprep.subr.mxu0 0.0
  %1268 = vmatpush1.msra.mxu0 0.0
  %1269 = vmatprep.subr.mxu0 0.0
  %1270 = vmatpush1.msra.mxu0 0.0
  %1271 = vmatprep.subr.mxu0 0.0
  %1272 = vmatpush1.msra.mxu0 0.0
  %1273 = vmatprep.subr.mxu0 0.0
  %1274 = vmatpush1.msra.mxu0 0.0
  %1275 = vmatprep.subr.mxu0 0.0
  %1276 = vmatpush1.msra.mxu0 0.0
  %1277 = vmatprep.subr.mxu0 0.0
  %1278 = vmatpush1.msra.mxu0 0.0
  %1279 = vmatprep.subr.mxu0 0.0
  %1280 = vmatpush1.msra.mxu0 0.0
  %1281 = vmatprep.subr.mxu0 0.0
  %1282 = vmatpush1.msra.mxu0 0.0
  %1283 = vmatprep.subr.mxu0 0.0
  %1284 = vmatpush1.msra.mxu0 0.0
  %1285 = vmatprep.subr.mxu0 0.0
  %1286 = vmatpush1.msra.mxu0 0.0
  %1287 = vmatprep.subr.mxu0 0.0
  %1288 = vmatpush1.msra.mxu0 0.0
  %1289 = vmatprep.subr.mxu0 0.0
  %1290 = vmatpush1.msra.mxu0 0.0
  %1291 = vmatprep.subr.mxu0 0.0
  %1292 = vmatpush1.msra.mxu0 0.0
  %1293 = vmatprep.subr.mxu0 0.0
  %1294 = vmatpush1.msra.mxu0 0.0
  %1295 = vmatprep.mubr.f32.mxu0 0.0
  %1296 = vmatmul.mubr.f32.gmra.mrb[0].mxu0 %v1229
  %v1297 = vpop.f32.mrb[0].mxu0
  %v1298 = vadd.f32 0.0, %v1297
  %v1299 = vpop.f32.mrb[0].mxu0
  %1300 = vdwg.mxu0
  %v1301 = vadd.f32 %v1225, %v1298
  %v1302 = vxor.u32 %v1301, 2147483648
  %v1303 = vmul.f32 %v1302, 1.442695
  %v1304 = vpow.pop %v1303
  %v1305 = vadd.f32 %v1304, 1.0
  %v1306 = vrcp.pop %v1305
  %v1307 = vmul.f32 1.0, %v1306
  %v1308 = vadd.f32 %v1298, %v295
  %1310 = vrot.lane.b32.xlu0 %v1308, 96
  %v1311 = vpop.permute.xlu0 %1310
  %v1313 = vmul.f32 %v1307, %v1311
  %1315 = vrot.lane.b32.xlu0 %v1313, 32
  %v1316 = vpop.permute.xlu0 %1315
  %v1318 = vadd.f32 %v1225, %v1316
  %v1319 = vtanh.pop %v1318
  %v1320 = vsub.f32 1.0, %v1307
  %1322 = vrot.lane.b32.xlu0 %v1319, 112
  %v1323 = vpop.permute.xlu0 %1322
  %v1325 = vmul.f32 %v1320, %v1323
  %v1326 = vmul.f32 %v1307, %v1223
  %v1327 = vadd.f32 %v1325, %v1326
  %v1328 = vstv %s1224
  %vm1329 = vcmp.gt.s32.totalorder %v201, %v1328
  %v1330 = vsel %vm1329, 1, 0
  %1331 = vset.pattern.permute.xlu0 0
  %1332 = vperm.xlu0 %1331, %v1330
  %v1333 = vpop.permute.xlu0 %1332
  %vm1334 = vcmp.eq.s32.totalorder %v1333, 1
  %v1335 = vsel %vm1334, %v1327, %v1223
  %s1336 = sadd.s32 %s206, 10
  %v1337 = vld [vmem:[#allocation3 + $0x28] sm:$0xf]
  %1339 = vrot.lane.b32.xlu0 %v1335, 112
  %v1340 = vpop.permute.xlu0 %1339
  %v1341 = vsel %vm208, %v1340, 0
  %1343 = vmatprep.subr.mxu0 0.0
  %1344 = vmatpush1.msra.mxu0 %v203
  %1345 = vmatprep.subr.mxu0 0.0
  %1346 = vmatpush1.msra.mxu0 %v204
  %1347 = vmatprep.subr.mxu0 0.0
  %1348 = vmatpush1.msra.mxu0 0.0
  %1349 = vmatprep.subr.mxu0 0.0
  %1350 = vmatpush1.msra.mxu0 0.0
  %1351 = vmatprep.subr.mxu0 0.0
  %1352 = vmatpush1.msra.mxu0 0.0
  %1353 = vmatprep.subr.mxu0 0.0
  %1354 = vmatpush1.msra.mxu0 0.0
  %1355 = vmatprep.subr.mxu0 0.0
  %1356 = vmatpush1.msra.mxu0 0.0
  %1357 = vmatprep.subr.mxu0 0.0
  %1358 = vmatpush1.msra.mxu0 0.0
  %1359 = vmatprep.subr.mxu0 0.0
  %1360 = vmatpush1.msra.mxu0 0.0
  %1361 = vmatprep.subr.mxu0 0.0
  %1362 = vmatpush1.msra.mxu0 0.0
  %1363 = vmatprep.subr.mxu0 0.0
  %1364 = vmatpush1.msra.mxu0 0.0
  %1365 = vmatprep.subr.mxu0 0.0
  %1366 = vmatpush1.msra.mxu0 0.0
  %1367 = vmatprep.subr.mxu0 0.0
  %1368 = vmatpush1.msra.mxu0 0.0
  %1369 = vmatprep.subr.mxu0 0.0
  %1370 = vmatpush1.msra.mxu0 0.0
  %1371 = vmatprep.subr.mxu0 0.0
  %1372 = vmatpush1.msra.mxu0 0.0
  %1373 = vmatprep.subr.mxu0 0.0
  %1374 = vmatpush1.msra.mxu0 0.0
  %1375 = vmatprep.subr.mxu0 0.0
  %1376 = vmatpush1.msra.mxu0 0.0
  %1377 = vmatprep.subr.mxu0 0.0
  %1378 = vmatpush1.msra.mxu0 0.0
  %1379 = vmatprep.subr.mxu0 0.0
  %1380 = vmatpush1.msra.mxu0 0.0
  %1381 = vmatprep.subr.mxu0 0.0
  %1382 = vmatpush1.msra.mxu0 0.0
  %1383 = vmatprep.subr.mxu0 0.0
  %1384 = vmatpush1.msra.mxu0 0.0
  %1385 = vmatprep.subr.mxu0 0.0
  %1386 = vmatpush1.msra.mxu0 0.0
  %1387 = vmatprep.subr.mxu0 0.0
  %1388 = vmatpush1.msra.mxu0 0.0
  %1389 = vmatprep.subr.mxu0 0.0
  %1390 = vmatpush1.msra.mxu0 0.0
  %1391 = vmatprep.subr.mxu0 0.0
  %1392 = vmatpush1.msra.mxu0 0.0
  %1393 = vmatprep.subr.mxu0 0.0
  %1394 = vmatpush1.msra.mxu0 0.0
  %1395 = vmatprep.subr.mxu0 0.0
  %1396 = vmatpush1.msra.mxu0 0.0
  %1397 = vmatprep.subr.mxu0 0.0
  %1398 = vmatpush1.msra.mxu0 0.0
  %1399 = vmatprep.subr.mxu0 0.0
  %1400 = vmatpush1.msra.mxu0 0.0
  %1401 = vmatprep.subr.mxu0 0.0
  %1402 = vmatpush1.msra.mxu0 0.0
  %1403 = vmatprep.subr.mxu0 0.0
  %1404 = vmatpush1.msra.mxu0 0.0
  %1405 = vmatprep.subr.mxu0 0.0
  %1406 = vmatpush1.msra.mxu0 0.0
  %1407 = vmatprep.mubr.f32.mxu0 0.0
  %1408 = vmatmul.mubr.f32.gmra.mrb[0].mxu0 %v1341
  %v1409 = vpop.f32.mrb[0].mxu0
  %v1410 = vadd.f32 0.0, %v1409
  %v1411 = vpop.f32.mrb[0].mxu0
  %1412 = vdwg.mxu0
  %v1413 = vadd.f32 %v1337, %v1410
  %v1414 = vxor.u32 %v1413, 2147483648
  %v1415 = vmul.f32 %v1414, 1.442695
  %v1416 = vpow.pop %v1415
  %v1417 = vadd.f32 %v1416, 1.0
  %v1418 = vrcp.pop %v1417
  %v1419 = vmul.f32 1.0, %v1418
  %v1420 = vadd.f32 %v1410, %v295
  %1422 = vrot.lane.b32.xlu0 %v1420, 96
  %v1423 = vpop.permute.xlu0 %1422
  %v1425 = vmul.f32 %v1419, %v1423
  %1427 = vrot.lane.b32.xlu0 %v1425, 32
  %v1428 = vpop.permute.xlu0 %1427
  %v1430 = vadd.f32 %v1337, %v1428
  %v1431 = vtanh.pop %v1430
  %v1432 = vsub.f32 1.0, %v1419
  %1434 = vrot.lane.b32.xlu0 %v1431, 112
  %v1435 = vpop.permute.xlu0 %1434
  %v1437 = vmul.f32 %v1432, %v1435
  %v1438 = vmul.f32 %v1419, %v1335
  %v1439 = vadd.f32 %v1437, %v1438
  %v1440 = vstv %s1336
  %vm1441 = vcmp.gt.s32.totalorder %v201, %v1440
  %v1442 = vsel %vm1441, 1, 0
  %1443 = vset.pattern.permute.xlu0 0
  %1444 = vperm.xlu0 %1443, %v1442
  %v1445 = vpop.permute.xlu0 %1444
  %vm1446 = vcmp.eq.s32.totalorder %v1445, 1
  %v1447 = vsel %vm1446, %v1439, %v1335
  %s1448 = sadd.s32 %s206, 11
  %v1449 = vld [vmem:[#allocation3 + $0x2c] sm:$0xf]
  %1451 = vrot.lane.b32.xlu0 %v1447, 112
  %v1452 = vpop.permute.xlu0 %1451
  %v1453 = vsel %vm208, %v1452, 0
  %1455 = vmatprep.subr.mxu0 0.0
  %1456 = vmatpush1.msra.mxu0 %v203
  %1457 = vmatprep.subr.mxu0 0.0
  %1458 = vmatpush1.msra.mxu0 %v204
  %1459 = vmatprep.subr.mxu0 0.0
  %1460 = vmatpush1.msra.mxu0 0.0
  %1461 = vmatprep.subr.mxu0 0.0
  %1462 = vmatpush1.msra.mxu0 0.0
  %1463 = vmatprep.subr.mxu0 0.0
  %1464 = vmatpush1.msra.mxu0 0.0
  %1465 = vmatprep.subr.mxu0 0.0
  %1466 = vmatpush1.msra.mxu0 0.0
  %1467 = vmatprep.subr.mxu0 0.0
  %1468 = vmatpush1.msra.mxu0 0.0
  %1469 = vmatprep.subr.mxu0 0.0
  %1470 = vmatpush1.msra.mxu0 0.0
  %1471 = vmatprep.subr.mxu0 0.0
  %1472 = vmatpush1.msra.mxu0 0.0
  %1473 = vmatprep.subr.mxu0 0.0
  %1474 = vmatpush1.msra.mxu0 0.0
  %1475 = vmatprep.subr.mxu0 0.0
  %1476 = vmatpush1.msra.mxu0 0.0
  %1477 = vmatprep.subr.mxu0 0.0
  %1478 = vmatpush1.msra.mxu0 0.0
  %1479 = vmatprep.subr.mxu0 0.0
  %1480 = vmatpush1.msra.mxu0 0.0
  %1481 = vmatprep.subr.mxu0 0.0
  %1482 = vmatpush1.msra.mxu0 0.0
  %1483 = vmatprep.subr.mxu0 0.0
  %1484 = vmatpush1.msra.mxu0 0.0
  %1485 = vmatprep.subr.mxu0 0.0
  %1486 = vmatpush1.msra.mxu0 0.0
  %1487 = vmatprep.subr.mxu0 0.0
  %1488 = vmatpush1.msra.mxu0 0.0
  %1489 = vmatprep.subr.mxu0 0.0
  %1490 = vmatpush1.msra.mxu0 0.0
  %1491 = vmatprep.subr.mxu0 0.0
  %1492 = vmatpush1.msra.mxu0 0.0
  %1493 = vmatprep.subr.mxu0 0.0
  %1494 = vmatpush1.msra.mxu0 0.0
  %1495 = vmatprep.subr.mxu0 0.0
  %1496 = vmatpush1.msra.mxu0 0.0
  %1497 = vmatprep.subr.mxu0 0.0
  %1498 = vmatpush1.msra.mxu0 0.0
  %1499 = vmatprep.subr.mxu0 0.0
  %1500 = vmatpush1.msra.mxu0 0.0
  %1501 = vmatprep.subr.mxu0 0.0
  %1502 = vmatpush1.msra.mxu0 0.0
  %1503 = vmatprep.subr.mxu0 0.0
  %1504 = vmatpush1.msra.mxu0 0.0
  %1505 = vmatprep.subr.mxu0 0.0
  %1506 = vmatpush1.msra.mxu0 0.0
  %1507 = vmatprep.subr.mxu0 0.0
  %1508 = vmatpush1.msra.mxu0 0.0
  %1509 = vmatprep.subr.mxu0 0.0
  %1510 = vmatpush1.msra.mxu0 0.0
  %1511 = vmatprep.subr.mxu0 0.0
  %1512 = vmatpush1.msra.mxu0 0.0
  %1513 = vmatprep.subr.mxu0 0.0
  %1514 = vmatpush1.msra.mxu0 0.0
  %1515 = vmatprep.subr.mxu0 0.0
  %1516 = vmatpush1.msra.mxu0 0.0
  %1517 = vmatprep.subr.mxu0 0.0
  %1518 = vmatpush1.msra.mxu0 0.0
  %1519 = vmatprep.mubr.f32.mxu0 0.0
  %1520 = vmatmul.mubr.f32.gmra.mrb[0].mxu0 %v1453
  %v1521 = vpop.f32.mrb[0].mxu0
  %v1522 = vadd.f32 0.0, %v1521
  %v1523 = vpop.f32.mrb[0].mxu0
  %1524 = vdwg.mxu0
  %v1525 = vadd.f32 %v1449, %v1522
  %v1526 = vxor.u32 %v1525, 2147483648
  %v1527 = vmul.f32 %v1526, 1.442695
  %v1528 = vpow.pop %v1527
  %v1529 = vadd.f32 %v1528, 1.0
  %v1530 = vrcp.pop %v1529
  %v1531 = vmul.f32 1.0, %v1530
  %v1532 = vadd.f32 %v1522, %v295
  %1534 = vrot.lane.b32.xlu0 %v1532, 96
  %v1535 = vpop.permute.xlu0 %1534
  %v1537 = vmul.f32 %v1531, %v1535
  %1539 = vrot.lane.b32.xlu0 %v1537, 32
  %v1540 = vpop.permute.xlu0 %1539
  %v1542 = vadd.f32 %v1449, %v1540
  %v1543 = vtanh.pop %v1542
  %v1544 = vsub.f32 1.0, %v1531
  %1546 = vrot.lane.b32.xlu0 %v1543, 112
  %v1547 = vpop.permute.xlu0 %1546
  %v1549 = vmul.f32 %v1544, %v1547
  %v1550 = vmul.f32 %v1531, %v1447
  %v1551 = vadd.f32 %v1549, %v1550
  %v1552 = vstv %s1448
  %vm1553 = vcmp.gt.s32.totalorder %v201, %v1552
  %v1554 = vsel %vm1553, 1, 0
  %1555 = vset.pattern.permute.xlu0 0
  %1556 = vperm.xlu0 %1555, %v1554
  %v1557 = vpop.permute.xlu0 %1556
  %vm1558 = vcmp.eq.s32.totalorder %v1557, 1
  %v1559 = vsel %vm1558, %v1551, %v1447
  %s1560 = sadd.s32 %s206, 12
  %v1561 = vld [vmem:[#allocation3 + $0x30] sm:$0xf]
  %1563 = vrot.lane.b32.xlu0 %v1559, 112
  %v1564 = vpop.permute.xlu0 %1563
  %v1565 = vsel %vm208, %v1564, 0
  %1567 = vmatprep.subr.mxu0 0.0
  %1568 = vmatpush1.msra.mxu0 %v203
  %1569 = vmatprep.subr.mxu0 0.0
  %1570 = vmatpush1.msra.mxu0 %v204
  %1571 = vmatprep.subr.mxu0 0.0
  %1572 = vmatpush1.msra.mxu0 0.0
  %1573 = vmatprep.subr.mxu0 0.0
  %1574 = vmatpush1.msra.mxu0 0.0
  %1575 = vmatprep.subr.mxu0 0.0
  %1576 = vmatpush1.msra.mxu0 0.0
  %1577 = vmatprep.subr.mxu0 0.0
  %1578 = vmatpush1.msra.mxu0 0.0
  %1579 = vmatprep.subr.mxu0 0.0
  %1580 = vmatpush1.msra.mxu0 0.0
  %1581 = vmatprep.subr.mxu0 0.0
  %1582 = vmatpush1.msra.mxu0 0.0
  %1583 = vmatprep.subr.mxu0 0.0
  %1584 = vmatpush1.msra.mxu0 0.0
  %1585 = vmatprep.subr.mxu0 0.0
  %1586 = vmatpush1.msra.mxu0 0.0
  %1587 = vmatprep.subr.mxu0 0.0
  %1588 = vmatpush1.msra.mxu0 0.0
  %1589 = vmatprep.subr.mxu0 0.0
  %1590 = vmatpush1.msra.mxu0 0.0
  %1591 = vmatprep.subr.mxu0 0.0
  %1592 = vmatpush1.msra.mxu0 0.0
  %1593 = vmatprep.subr.mxu0 0.0
  %1594 = vmatpush1.msra.mxu0 0.0
  %1595 = vmatprep.subr.mxu0 0.0
  %1596 = vmatpush1.msra.mxu0 0.0
  %1597 = vmatprep.subr.mxu0 0.0
  %1598 = vmatpush1.msra.mxu0 0.0
  %1599 = vmatprep.subr.mxu0 0.0
  %1600 = vmatpush1.msra.mxu0 0.0
  %1601 = vmatprep.subr.mxu0 0.0
  %1602 = vmatpush1.msra.mxu0 0.0
  %1603 = vmatprep.subr.mxu0 0.0
  %1604 = vmatpush1.msra.mxu0 0.0
  %1605 = vmatprep.subr.mxu0 0.0
  %1606 = vmatpush1.msra.mxu0 0.0
  %1607 = vmatprep.subr.mxu0 0.0
  %1608 = vmatpush1.msra.mxu0 0.0
  %1609 = vmatprep.subr.mxu0 0.0
  %1610 = vmatpush1.msra.mxu0 0.0
  %1611 = vmatprep.subr.mxu0 0.0
  %1612 = vmatpush1.msra.mxu0 0.0
  %1613 = vmatprep.subr.mxu0 0.0
  %1614 = vmatpush1.msra.mxu0 0.0
  %1615 = vmatprep.subr.mxu0 0.0
  %1616 = vmatpush1.msra.mxu0 0.0
  %1617 = vmatprep.subr.mxu0 0.0
  %1618 = vmatpush1.msra.mxu0 0.0
  %1619 = vmatprep.subr.mxu0 0.0
  %1620 = vmatpush1.msra.mxu0 0.0
  %1621 = vmatprep.subr.mxu0 0.0
  %1622 = vmatpush1.msra.mxu0 0.0
  %1623 = vmatprep.subr.mxu0 0.0
  %1624 = vmatpush1.msra.mxu0 0.0
  %1625 = vmatprep.subr.mxu0 0.0
  %1626 = vmatpush1.msra.mxu0 0.0
  %1627 = vmatprep.subr.mxu0 0.0
  %1628 = vmatpush1.msra.mxu0 0.0
  %1629 = vmatprep.subr.mxu0 0.0
  %1630 = vmatpush1.msra.mxu0 0.0
  %1631 = vmatprep.mubr.f32.mxu0 0.0
  %1632 = vmatmul.mubr.f32.gmra.mrb[0].mxu0 %v1565
  %v1633 = vpop.f32.mrb[0].mxu0
  %v1634 = vadd.f32 0.0, %v1633
  %v1635 = vpop.f32.mrb[0].mxu0
  %1636 = vdwg.mxu0
  %v1637 = vadd.f32 %v1561, %v1634
  %v1638 = vxor.u32 %v1637, 2147483648
  %v1639 = vmul.f32 %v1638, 1.442695
  %v1640 = vpow.pop %v1639
  %v1641 = vadd.f32 %v1640, 1.0
  %v1642 = vrcp.pop %v1641
  %v1643 = vmul.f32 1.0, %v1642
  %v1644 = vadd.f32 %v1634, %v295
  %1646 = vrot.lane.b32.xlu0 %v1644, 96
  %v1647 = vpop.permute.xlu0 %1646
  %v1649 = vmul.f32 %v1643, %v1647
  %1651 = vrot.lane.b32.xlu0 %v1649, 32
  %v1652 = vpop.permute.xlu0 %1651
  %v1654 = vadd.f32 %v1561, %v1652
  %v1655 = vtanh.pop %v1654
  %v1656 = vsub.f32 1.0, %v1643
  %1658 = vrot.lane.b32.xlu0 %v1655, 112
  %v1659 = vpop.permute.xlu0 %1658
  %v1661 = vmul.f32 %v1656, %v1659
  %v1662 = vmul.f32 %v1643, %v1559
  %v1663 = vadd.f32 %v1661, %v1662
  %v1664 = vstv %s1560
  %vm1665 = vcmp.gt.s32.totalorder %v201, %v1664
  %v1666 = vsel %vm1665, 1, 0
  %1667 = vset.pattern.permute.xlu0 0
  %1668 = vperm.xlu0 %1667, %v1666
  %v1669 = vpop.permute.xlu0 %1668
  %vm1670 = vcmp.eq.s32.totalorder %v1669, 1
  %v1671 = vsel %vm1670, %v1663, %v1559
  %s1672 = sadd.s32 %s206, 13
  %v1673 = vld [vmem:[#allocation3 + $0x34] sm:$0xf]
  %1675 = vrot.lane.b32.xlu0 %v1671, 112
  %v1676 = vpop.permute.xlu0 %1675
  %v1677 = vsel %vm208, %v1676, 0
  %1679 = vmatprep.subr.mxu0 0.0
  %1680 = vmatpush1.msra.mxu0 %v203
  %1681 = vmatprep.subr.mxu0 0.0
  %1682 = vmatpush1.msra.mxu0 %v204
  %1683 = vmatprep.subr.mxu0 0.0
  %1684 = vmatpush1.msra.mxu0 0.0
  %1685 = vmatprep.subr.mxu0 0.0
  %1686 = vmatpush1.msra.mxu0 0.0
  %1687 = vmatprep.subr.mxu0 0.0
  %1688 = vmatpush1.msra.mxu0 0.0
  %1689 = vmatprep.subr.mxu0 0.0
  %1690 = vmatpush1.msra.mxu0 0.0
  %1691 = vmatprep.subr.mxu0 0.0
  %1692 = vmatpush1.msra.mxu0 0.0
  %1693 = vmatprep.subr.mxu0 0.0
  %1694 = vmatpush1.msra.mxu0 0.0
  %1695 = vmatprep.subr.mxu0 0.0
  %1696 = vmatpush1.msra.mxu0 0.0
  %1697 = vmatprep.subr.mxu0 0.0
  %1698 = vmatpush1.msra.mxu0 0.0
  %1699 = vmatprep.subr.mxu0 0.0
  %1700 = vmatpush1.msra.mxu0 0.0
  %1701 = vmatprep.subr.mxu0 0.0
  %1702 = vmatpush1.msra.mxu0 0.0
  %1703 = vmatprep.subr.mxu0 0.0
  %1704 = vmatpush1.msra.mxu0 0.0
  %1705 = vmatprep.subr.mxu0 0.0
  %1706 = vmatpush1.msra.mxu0 0.0
  %1707 = vmatprep.subr.mxu0 0.0
  %1708 = vmatpush1.msra.mxu0 0.0
  %1709 = vmatprep.subr.mxu0 0.0
  %1710 = vmatpush1.msra.mxu0 0.0
  %1711 = vmatprep.subr.mxu0 0.0
  %1712 = vmatpush1.msra.mxu0 0.0
  %1713 = vmatprep.subr.mxu0 0.0
  %1714 = vmatpush1.msra.mxu0 0.0
  %1715 = vmatprep.subr.mxu0 0.0
  %1716 = vmatpush1.msra.mxu0 0.0
  %1717 = vmatprep.subr.mxu0 0.0
  %1718 = vmatpush1.msra.mxu0 0.0
  %1719 = vmatprep.subr.mxu0 0.0
  %1720 = vmatpush1.msra.mxu0 0.0
  %1721 = vmatprep.subr.mxu0 0.0
  %1722 = vmatpush1.msra.mxu0 0.0
  %1723 = vmatprep.subr.mxu0 0.0
  %1724 = vmatpush1.msra.mxu0 0.0
  %1725 = vmatprep.subr.mxu0 0.0
  %1726 = vmatpush1.msra.mxu0 0.0
  %1727 = vmatprep.subr.mxu0 0.0
  %1728 = vmatpush1.msra.mxu0 0.0
  %1729 = vmatprep.subr.mxu0 0.0
  %1730 = vmatpush1.msra.mxu0 0.0
  %1731 = vmatprep.subr.mxu0 0.0
  %1732 = vmatpush1.msra.mxu0 0.0
  %1733 = vmatprep.subr.mxu0 0.0
  %1734 = vmatpush1.msra.mxu0 0.0
  %1735 = vmatprep.subr.mxu0 0.0
  %1736 = vmatpush1.msra.mxu0 0.0
  %1737 = vmatprep.subr.mxu0 0.0
  %1738 = vmatpush1.msra.mxu0 0.0
  %1739 = vmatprep.subr.mxu0 0.0
  %1740 = vmatpush1.msra.mxu0 0.0
  %1741 = vmatprep.subr.mxu0 0.0
  %1742 = vmatpush1.msra.mxu0 0.0
  %1743 = vmatprep.mubr.f32.mxu0 0.0
  %1744 = vmatmul.mubr.f32.gmra.mrb[0].mxu0 %v1677
  %v1745 = vpop.f32.mrb[0].mxu0
  %v1746 = vadd.f32 0.0, %v1745
  %v1747 = vpop.f32.mrb[0].mxu0
  %1748 = vdwg.mxu0
  %v1749 = vadd.f32 %v1673, %v1746
  %v1750 = vxor.u32 %v1749, 2147483648
  %v1751 = vmul.f32 %v1750, 1.442695
  %v1752 = vpow.pop %v1751
  %v1753 = vadd.f32 %v1752, 1.0
  %v1754 = vrcp.pop %v1753
  %v1755 = vmul.f32 1.0, %v1754
  %v1756 = vadd.f32 %v1746, %v295
  %1758 = vrot.lane.b32.xlu0 %v1756, 96
  %v1759 = vpop.permute.xlu0 %1758
  %v1761 = vmul.f32 %v1755, %v1759
  %1763 = vrot.lane.b32.xlu0 %v1761, 32
  %v1764 = vpop.permute.xlu0 %1763
  %v1766 = vadd.f32 %v1673, %v1764
  %v1767 = vtanh.pop %v1766
  %v1768 = vsub.f32 1.0, %v1755
  %1770 = vrot.lane.b32.xlu0 %v1767, 112
  %v1771 = vpop.permute.xlu0 %1770
  %v1773 = vmul.f32 %v1768, %v1771
  %v1774 = vmul.f32 %v1755, %v1671
  %v1775 = vadd.f32 %v1773, %v1774
  %v1776 = vstv %s1672
  %vm1777 = vcmp.gt.s32.totalorder %v201, %v1776
  %v1778 = vsel %vm1777, 1, 0
  %1779 = vset.pattern.permute.xlu0 0
  %1780 = vperm.xlu0 %1779, %v1778
  %v1781 = vpop.permute.xlu0 %1780
  %vm1782 = vcmp.eq.s32.totalorder %v1781, 1
  %v1783 = vsel %vm1782, %v1775, %v1671
  %s1784 = sadd.s32 %s206, 14
  %v1785 = vld [vmem:[#allocation3 + $0x38] sm:$0xf]
  %1787 = vrot.lane.b32.xlu0 %v1783, 112
  %v1788 = vpop.permute.xlu0 %1787
  %v1789 = vsel %vm208, %v1788, 0
  %1791 = vmatprep.subr.mxu0 0.0
  %1792 = vmatpush1.msra.mxu0 %v203
  %1793 = vmatprep.subr.mxu0 0.0
  %1794 = vmatpush1.msra.mxu0 %v204
  %1795 = vmatprep.subr.mxu0 0.0
  %1796 = vmatpush1.msra.mxu0 0.0
  %1797 = vmatprep.subr.mxu0 0.0
  %1798 = vmatpush1.msra.mxu0 0.0
  %1799 = vmatprep.subr.mxu0 0.0
  %1800 = vmatpush1.msra.mxu0 0.0
  %1801 = vmatprep.subr.mxu0 0.0
  %1802 = vmatpush1.msra.mxu0 0.0
  %1803 = vmatprep.subr.mxu0 0.0
  %1804 = vmatpush1.msra.mxu0 0.0
  %1805 = vmatprep.subr.mxu0 0.0
  %1806 = vmatpush1.msra.mxu0 0.0
  %1807 = vmatprep.subr.mxu0 0.0
  %1808 = vmatpush1.msra.mxu0 0.0
  %1809 = vmatprep.subr.mxu0 0.0
  %1810 = vmatpush1.msra.mxu0 0.0
  %1811 = vmatprep.subr.mxu0 0.0
  %1812 = vmatpush1.msra.mxu0 0.0
  %1813 = vmatprep.subr.mxu0 0.0
  %1814 = vmatpush1.msra.mxu0 0.0
  %1815 = vmatprep.subr.mxu0 0.0
  %1816 = vmatpush1.msra.mxu0 0.0
  %1817 = vmatprep.subr.mxu0 0.0
  %1818 = vmatpush1.msra.mxu0 0.0
  %1819 = vmatprep.subr.mxu0 0.0
  %1820 = vmatpush1.msra.mxu0 0.0
  %1821 = vmatprep.subr.mxu0 0.0
  %1822 = vmatpush1.msra.mxu0 0.0
  %1823 = vmatprep.subr.mxu0 0.0
  %1824 = vmatpush1.msra.mxu0 0.0
  %1825 = vmatprep.subr.mxu0 0.0
  %1826 = vmatpush1.msra.mxu0 0.0
  %1827 = vmatprep.subr.mxu0 0.0
  %1828 = vmatpush1.msra.mxu0 0.0
  %1829 = vmatprep.subr.mxu0 0.0
  %1830 = vmatpush1.msra.mxu0 0.0
  %1831 = vmatprep.subr.mxu0 0.0
  %1832 = vmatpush1.msra.mxu0 0.0
  %1833 = vmatprep.subr.mxu0 0.0
  %1834 = vmatpush1.msra.mxu0 0.0
  %1835 = vmatprep.subr.mxu0 0.0
  %1836 = vmatpush1.msra.mxu0 0.0
  %1837 = vmatprep.subr.mxu0 0.0
  %1838 = vmatpush1.msra.mxu0 0.0
  %1839 = vmatprep.subr.mxu0 0.0
  %1840 = vmatpush1.msra.mxu0 0.0
  %1841 = vmatprep.subr.mxu0 0.0
  %1842 = vmatpush1.msra.mxu0 0.0
  %1843 = vmatprep.subr.mxu0 0.0
  %1844 = vmatpush1.msra.mxu0 0.0
  %1845 = vmatprep.subr.mxu0 0.0
  %1846 = vmatpush1.msra.mxu0 0.0
  %1847 = vmatprep.subr.mxu0 0.0
  %1848 = vmatpush1.msra.mxu0 0.0
  %1849 = vmatprep.subr.mxu0 0.0
  %1850 = vmatpush1.msra.mxu0 0.0
  %1851 = vmatprep.subr.mxu0 0.0
  %1852 = vmatpush1.msra.mxu0 0.0
  %1853 = vmatprep.subr.mxu0 0.0
  %1854 = vmatpush1.msra.mxu0 0.0
  %1855 = vmatprep.mubr.f32.mxu0 0.0
  %1856 = vmatmul.mubr.f32.gmra.mrb[0].mxu0 %v1789
  %v1857 = vpop.f32.mrb[0].mxu0
  %v1858 = vadd.f32 0.0, %v1857
  %v1859 = vpop.f32.mrb[0].mxu0
  %1860 = vdwg.mxu0
  %v1861 = vadd.f32 %v1785, %v1858
  %v1862 = vxor.u32 %v1861, 2147483648
  %v1863 = vmul.f32 %v1862, 1.442695
  %v1864 = vpow.pop %v1863
  %v1865 = vadd.f32 %v1864, 1.0
  %v1866 = vrcp.pop %v1865
  %v1867 = vmul.f32 1.0, %v1866
  %v1868 = vadd.f32 %v1858, %v295
  %1870 = vrot.lane.b32.xlu0 %v1868, 96
  %v1871 = vpop.permute.xlu0 %1870
  %v1873 = vmul.f32 %v1867, %v1871
  %1875 = vrot.lane.b32.xlu0 %v1873, 32
  %v1876 = vpop.permute.xlu0 %1875
  %v1878 = vadd.f32 %v1785, %v1876
  %v1879 = vtanh.pop %v1878
  %v1880 = vsub.f32 1.0, %v1867
  %1882 = vrot.lane.b32.xlu0 %v1879, 112
  %v1883 = vpop.permute.xlu0 %1882
  %v1885 = vmul.f32 %v1880, %v1883
  %v1886 = vmul.f32 %v1867, %v1783
  %v1887 = vadd.f32 %v1885, %v1886
  %v1888 = vstv %s1784
  %vm1889 = vcmp.gt.s32.totalorder %v201, %v1888
  %v1890 = vsel %vm1889, 1, 0
  %1891 = vset.pattern.permute.xlu0 0
  %1892 = vperm.xlu0 %1891, %v1890
  %v1893 = vpop.permute.xlu0 %1892
  %vm1894 = vcmp.eq.s32.totalorder %v1893, 1
  %v1895 = vsel %vm1894, %v1887, %v1783
  %s1896 = sadd.s32 %s206, 15
  %v1897 = vld [vmem:[#allocation3 + $0x3c] sm:$0xf]
  %1899 = vrot.lane.b32.xlu0 %v1895, 112
  %v1900 = vpop.permute.xlu0 %1899
  %v1901 = vsel %vm208, %v1900, 0
  %1903 = vmatprep.subr.mxu0 0.0
  %1904 = vmatpush1.msra.mxu0 %v203
  %1905 = vmatprep.subr.mxu0 0.0
  %1906 = vmatpush1.msra.mxu0 %v204
  %1907 = vmatprep.subr.mxu0 0.0
  %1908 = vmatpush1.msra.mxu0 0.0
  %1909 = vmatprep.subr.mxu0 0.0
  %1910 = vmatpush1.msra.mxu0 0.0
  %1911 = vmatprep.subr.mxu0 0.0
  %1912 = vmatpush1.msra.mxu0 0.0
  %1913 = vmatprep.subr.mxu0 0.0
  %1914 = vmatpush1.msra.mxu0 0.0
  %1915 = vmatprep.subr.mxu0 0.0
  %1916 = vmatpush1.msra.mxu0 0.0
  %1917 = vmatprep.subr.mxu0 0.0
  %1918 = vmatpush1.msra.mxu0 0.0
  %1919 = vmatprep.subr.mxu0 0.0
  %1920 = vmatpush1.msra.mxu0 0.0
  %1921 = vmatprep.subr.mxu0 0.0
  %1922 = vmatpush1.msra.mxu0 0.0
  %1923 = vmatprep.subr.mxu0 0.0
  %1924 = vmatpush1.msra.mxu0 0.0
  %1925 = vmatprep.subr.mxu0 0.0
  %1926 = vmatpush1.msra.mxu0 0.0
  %1927 = vmatprep.subr.mxu0 0.0
  %1928 = vmatpush1.msra.mxu0 0.0
  %1929 = vmatprep.subr.mxu0 0.0
  %1930 = vmatpush1.msra.mxu0 0.0
  %1931 = vmatprep.subr.mxu0 0.0
  %1932 = vmatpush1.msra.mxu0 0.0
  %1933 = vmatprep.subr.mxu0 0.0
  %1934 = vmatpush1.msra.mxu0 0.0
  %1935 = vmatprep.subr.mxu0 0.0
  %1936 = vmatpush1.msra.mxu0 0.0
  %1937 = vmatprep.subr.mxu0 0.0
  %1938 = vmatpush1.msra.mxu0 0.0
  %1939 = vmatprep.subr.mxu0 0.0
  %1940 = vmatpush1.msra.mxu0 0.0
  %1941 = vmatprep.subr.mxu0 0.0
  %1942 = vmatpush1.msra.mxu0 0.0
  %1943 = vmatprep.subr.mxu0 0.0
  %1944 = vmatpush1.msra.mxu0 0.0
  %1945 = vmatprep.subr.mxu0 0.0
  %1946 = vmatpush1.msra.mxu0 0.0
  %1947 = vmatprep.subr.mxu0 0.0
  %1948 = vmatpush1.msra.mxu0 0.0
  %1949 = vmatprep.subr.mxu0 0.0
  %1950 = vmatpush1.msra.mxu0 0.0
  %1951 = vmatprep.subr.mxu0 0.0
  %1952 = vmatpush1.msra.mxu0 0.0
  %1953 = vmatprep.subr.mxu0 0.0
  %1954 = vmatpush1.msra.mxu0 0.0
  %1955 = vmatprep.subr.mxu0 0.0
  %1956 = vmatpush1.msra.mxu0 0.0
  %1957 = vmatprep.subr.mxu0 0.0
  %1958 = vmatpush1.msra.mxu0 0.0
  %1959 = vmatprep.subr.mxu0 0.0
  %1960 = vmatpush1.msra.mxu0 0.0
  %1961 = vmatprep.subr.mxu0 0.0
  %1962 = vmatpush1.msra.mxu0 0.0
  %1963 = vmatprep.subr.mxu0 0.0
  %1964 = vmatpush1.msra.mxu0 0.0
  %1965 = vmatprep.subr.mxu0 0.0
  %1966 = vmatpush1.msra.mxu0 0.0
  %1967 = vmatprep.mubr.f32.mxu0 0.0
  %1968 = vmatmul.mubr.f32.gmra.mrb[0].mxu0 %v1901
  %v1969 = vpop.f32.mrb[0].mxu0
  %v1970 = vadd.f32 0.0, %v1969
  %v1971 = vpop.f32.mrb[0].mxu0
  %1972 = vdwg.mxu0
  %v1973 = vadd.f32 %v1897, %v1970
  %v1974 = vxor.u32 %v1973, 2147483648
  %v1975 = vmul.f32 %v1974, 1.442695
  %v1976 = vpow.pop %v1975
  %v1977 = vadd.f32 %v1976, 1.0
  %v1978 = vrcp.pop %v1977
  %v1979 = vmul.f32 1.0, %v1978
  %v1980 = vadd.f32 %v1970, %v295
  %1982 = vrot.lane.b32.xlu0 %v1980, 96
  %v1983 = vpop.permute.xlu0 %1982
  %v1985 = vmul.f32 %v1979, %v1983
  %1987 = vrot.lane.b32.xlu0 %v1985, 32
  %v1988 = vpop.permute.xlu0 %1987
  %v1990 = vadd.f32 %v1897, %v1988
  %v1991 = vtanh.pop %v1990
  %v1992 = vsub.f32 1.0, %v1979
  %1994 = vrot.lane.b32.xlu0 %v1991, 112
  %v1995 = vpop.permute.xlu0 %1994
  %v1997 = vmul.f32 %v1992, %v1995
  %v1998 = vmul.f32 %v1979, %v1895
  %v1999 = vadd.f32 %v1997, %v1998
  %v2000 = vstv %s1896
  %vm2001 = vcmp.gt.s32.totalorder %v201, %v2000
  %v2002 = vsel %vm2001, 1, 0
  %2003 = vset.pattern.permute.xlu0 0
  %2004 = vperm.xlu0 %2003, %v2002
  %v2005 = vpop.permute.xlu0 %2004
  %vm2006 = vcmp.eq.s32.totalorder %v2005, 1
  %v2007 = vsel %vm2006, %v1999, %v1895
  %2009 = vrot.lane.b32.xlu0 %v2007, 112
  %v2010 = vpop.permute.xlu0 %2009
  %vm2012 = vcmask 125952
  %2013 = vst.msk [vmem:[#allocation2] sm:$0xf] %vm2012, %v2010
  // Predicated region
  $region46: #{encoder_z0_rnn_forward.1} parent=0 // pred_check
    %p2014 = pneg %p35
  $region47: #{encoder_z0_rnn_forward.1} parent=0 // pred_check_branch
    %2016 = sbr.rel (%p2014) target = $region49
  $region48: #{encoder_z0_rnn_forward.1} parent=0 // pred_region
    %v2017 = vld [vmem:[#allocation2] sm:$0xf]
    %v2018 = vld [vmem:[%s6] sm:$0xff]
    %v2019 = vld [vmem:[%s6 + $0x8] sm:$0xff]
    %v2020 = vld [vmem:[%s7] sm:$0x1]
    %v2022 = vlaneseq
    %v2023 = vshrl.u32 %v2022, 7
    %v2024 = vsub.s32 0, %v2023
    %v2025 = vrot.slane %v2020, %v2024
    %v2028 = vsel %vm208, %v2017, 0
    %2030 = vmatprep.subr.mxu0 0.0
    %2031 = vmatpush1.msra.mxu0 %v2018
    %2032 = vmatprep.subr.mxu0 0.0
    %2033 = vmatpush1.msra.mxu0 %v2019
    %2034 = vmatprep.subr.mxu0 0.0
    %2035 = vmatpush1.msra.mxu0 0.0
    %2036 = vmatprep.subr.mxu0 0.0
    %2037 = vmatpush1.msra.mxu0 0.0
    %2038 = vmatprep.subr.mxu0 0.0
    %2039 = vmatpush1.msra.mxu0 0.0
    %2040 = vmatprep.subr.mxu0 0.0
    %2041 = vmatpush1.msra.mxu0 0.0
    %2042 = vmatprep.subr.mxu0 0.0
    %2043 = vmatpush1.msra.mxu0 0.0
    %2044 = vmatprep.subr.mxu0 0.0
    %2045 = vmatpush1.msra.mxu0 0.0
    %2046 = vmatprep.subr.mxu0 0.0
    %2047 = vmatpush1.msra.mxu0 0.0
    %2048 = vmatprep.subr.mxu0 0.0
    %2049 = vmatpush1.msra.mxu0 0.0
    %2050 = vmatprep.subr.mxu0 0.0
    %2051 = vmatpush1.msra.mxu0 0.0
    %2052 = vmatprep.subr.mxu0 0.0
    %2053 = vmatpush1.msra.mxu0 0.0
    %2054 = vmatprep.subr.mxu0 0.0
    %2055 = vmatpush1.msra.mxu0 0.0
    %2056 = vmatprep.subr.mxu0 0.0
    %2057 = vmatpush1.msra.mxu0 0.0
    %2058 = vmatprep.subr.mxu0 0.0
    %2059 = vmatpush1.msra.mxu0 0.0
    %2060 = vmatprep.subr.mxu0 0.0
    %2061 = vmatpush1.msra.mxu0 0.0
    %2062 = vmatprep.subr.mxu0 0.0
    %2063 = vmatpush1.msra.mxu0 0.0
    %2064 = vmatprep.subr.mxu0 0.0
    %2065 = vmatpush1.msra.mxu0 0.0
    %2066 = vmatprep.subr.mxu0 0.0
    %2067 = vmatpush1.msra.mxu0 0.0
    %2068 = vmatprep.subr.mxu0 0.0
    %2069 = vmatpush1.msra.mxu0 0.0
    %2070 = vmatprep.subr.mxu0 0.0
    %2071 = vmatpush1.msra.mxu0 0.0
    %2072 = vmatprep.subr.mxu0 0.0
    %2073 = vmatpush1.msra.mxu0 0.0
    %2074 = vmatprep.subr.mxu0 0.0
    %2075 = vmatpush1.msra.mxu0 0.0
    %2076 = vmatprep.subr.mxu0 0.0
    %2077 = vmatpush1.msra.mxu0 0.0
    %2078 = vmatprep.subr.mxu0 0.0
    %2079 = vmatpush1.msra.mxu0 0.0
    %2080 = vmatprep.subr.mxu0 0.0
    %2081 = vmatpush1.msra.mxu0 0.0
    %2082 = vmatprep.subr.mxu0 0.0
    %2083 = vmatpush1.msra.mxu0 0.0
    %2084 = vmatprep.subr.mxu0 0.0
    %2085 = vmatpush1.msra.mxu0 0.0
    %2086 = vmatprep.subr.mxu0 0.0
    %2087 = vmatpush1.msra.mxu0 0.0
    %2088 = vmatprep.subr.mxu0 0.0
    %2089 = vmatpush1.msra.mxu0 0.0
    %2090 = vmatprep.subr.mxu0 0.0
    %2091 = vmatpush1.msra.mxu0 0.0
    %2092 = vmatprep.subr.mxu0 0.0
    %2093 = vmatpush1.msra.mxu0 0.0
    %2094 = vmatprep.mubr.f32.mxu0 0.0
    %2095 = vmatmul.mubr.f32.gmra.mrb[0].mxu0 %v2028
    %v2096 = vpop.f32.mrb[0].mxu0
    %v2097 = vadd.f32 %v2025, %v2096
    %v2098 = vpop.f32.mrb[0].mxu0
    %2099 = vdwg.mxu0
    %v2100 = vtanh.pop %v2097
    %v2101 = vld [vmem:[%s8] sm:$0xff]
    %v2102 = vld [vmem:[%s8 + $0x8] sm:$0xff]
    %v2103 = vld [vmem:[%s8 + $0x10] sm:$0xf]
    %v2104 = vld [vmem:[%s9] sm:$0x1]
    %v2106 = vlaneseq
    %v2107 = vshrl.u32 %v2106, 7
    %v2108 = vsub.s32 0, %v2107
    %v2109 = vrot.slane %v2104, %v2108
    %vm2111 = vcmask 162816
    %v2113 = vsel %vm2111, %v2100, 0
    %v2116 = vsel %vm83, %v2103, 0
    %2118 = vmatprep.subr.mxu0 0.0
    %2119 = vmatpush1.msra.mxu0 %v2101
    %2120 = vmatprep.subr.mxu0 0.0
    %2121 = vmatpush1.msra.mxu0 %v2102
    %2122 = vmatprep.subr.mxu0 0.0
    %2123 = vmatpush1.msra.mxu0 %v2116
    %2124 = vmatprep.subr.mxu0 0.0
    %2125 = vmatpush1.msra.mxu0 0.0
    %2126 = vmatprep.subr.mxu0 0.0
    %2127 = vmatpush1.msra.mxu0 0.0
    %2128 = vmatprep.subr.mxu0 0.0
    %2129 = vmatpush1.msra.mxu0 0.0
    %2130 = vmatprep.subr.mxu0 0.0
    %2131 = vmatpush1.msra.mxu0 0.0
    %2132 = vmatprep.subr.mxu0 0.0
    %2133 = vmatpush1.msra.mxu0 0.0
    %2134 = vmatprep.subr.mxu0 0.0
    %2135 = vmatpush1.msra.mxu0 0.0
    %2136 = vmatprep.subr.mxu0 0.0
    %2137 = vmatpush1.msra.mxu0 0.0
    %2138 = vmatprep.subr.mxu0 0.0
    %2139 = vmatpush1.msra.mxu0 0.0
    %2140 = vmatprep.subr.mxu0 0.0
    %2141 = vmatpush1.msra.mxu0 0.0
    %2142 = vmatprep.subr.mxu0 0.0
    %2143 = vmatpush1.msra.mxu0 0.0
    %2144 = vmatprep.subr.mxu0 0.0
    %2145 = vmatpush1.msra.mxu0 0.0
    %2146 = vmatprep.subr.mxu0 0.0
    %2147 = vmatpush1.msra.mxu0 0.0
    %2148 = vmatprep.subr.mxu0 0.0
    %2149 = vmatpush1.msra.mxu0 0.0
    %2150 = vmatprep.subr.mxu0 0.0
    %2151 = vmatpush1.msra.mxu0 0.0
    %2152 = vmatprep.subr.mxu0 0.0
    %2153 = vmatpush1.msra.mxu0 0.0
    %2154 = vmatprep.subr.mxu0 0.0
    %2155 = vmatpush1.msra.mxu0 0.0
    %2156 = vmatprep.subr.mxu0 0.0
    %2157 = vmatpush1.msra.mxu0 0.0
    %2158 = vmatprep.subr.mxu0 0.0
    %2159 = vmatpush1.msra.mxu0 0.0
    %2160 = vmatprep.subr.mxu0 0.0
    %2161 = vmatpush1.msra.mxu0 0.0
    %2162 = vmatprep.subr.mxu0 0.0
    %2163 = vmatpush1.msra.mxu0 0.0
    %2164 = vmatprep.subr.mxu0 0.0
    %2165 = vmatpush1.msra.mxu0 0.0
    %2166 = vmatprep.subr.mxu0 0.0
    %2167 = vmatpush1.msra.mxu0 0.0
    %2168 = vmatprep.subr.mxu0 0.0
    %2169 = vmatpush1.msra.mxu0 0.0
    %2170 = vmatprep.subr.mxu0 0.0
    %2171 = vmatpush1.msra.mxu0 0.0
    %2172 = vmatprep.subr.mxu0 0.0
    %2173 = vmatpush1.msra.mxu0 0.0
    %2174 = vmatprep.subr.mxu0 0.0
    %2175 = vmatpush1.msra.mxu0 0.0
    %2176 = vmatprep.subr.mxu0 0.0
    %2177 = vmatpush1.msra.mxu0 0.0
    %2178 = vmatprep.subr.mxu0 0.0
    %2179 = vmatpush1.msra.mxu0 0.0
    %2180 = vmatprep.subr.mxu0 0.0
    %2181 = vmatpush1.msra.mxu0 0.0
    %2182 = vmatprep.mubr.f32.mxu0 0.0
    %2183 = vmatmul.mubr.f32.gmra.mrb[0].mxu0 %v2113
    %v2184 = vpop.f32.mrb[0].mxu0
    %v2185 = vadd.f32 %v2109, %v2184
    %v2186 = vpop.f32.mrb[0].mxu0
    %2187 = vdwg.mxu0
    %vm2188 = vcmask 257024
    %2189 = vst.msk [vmem:[%s10] sm:$0xf] %vm2188, %v2185
  $region49: #{encoder_z0_rnn_forward.1} parent=0 // pred_fallthru
    _
  // Predicated region
  $region50: #{encoder_z0_rnn_forward.1} parent=0 // pred_check
    _
  $region51: #{encoder_z0_rnn_forward.1} parent=0 // pred_check_branch
    %2191 = sbr.rel (0) target = $region53
  $region52: #{encoder_z0_rnn_forward.1} parent=0 // pred_region
    _
  $region53: #{encoder_z0_rnn_forward.1} parent=0 // pred_fallthru
    _
  // Predicated region
  $region54: #{encoder_z0_rnn_forward.1} parent=0 // pred_check
    _
  $region55: #{encoder_z0_rnn_forward.1} parent=0 // pred_check_branch
    %2193 = sbr.rel (0) target = $region57
  $region56: #{encoder_z0_rnn_forward.1} parent=0 // pred_region
    _
  $region57: #{encoder_z0_rnn_forward.1} parent=0 // pred_fallthru
    _

</llo_original>
